<compile_context>
chip_gen: v7x
topology: tpu7x:2x2x1
jax: 0.10.0
libtpu: 0.0.40
codegen_flags: <defaults>
</compile_context>

<pallas_src>
import functools
import math

import jax
import jax.numpy as jnp
from jax.experimental import pallas as pl
from jax.experimental.pallas import tpu as pltpu

# ---------------- model config (small, consistent with the module) -------------
D_MODEL = 32
NHEAD = 4
DIM_FF = 64
NUM_LAYERS = 2
SEQ = 8
BATCH = 2
LN_EPS = 1e-5

# bf16 matmul operands (f32 accumulate). Set to jnp.float32 for exact-f32 parity.
MATMUL_DTYPE = jnp.bfloat16

_Q, _K, _V = 0, 1, 2   # indices into the packed qkv slabs


# ------------------------------ Pallas kernel ----------------------------------
def _fused_encoder_kernel(
    src_ref, pos_ref,
    wqkv_ref, bqkv_ref, wo_ref, w1_ref, w2_ref, vecs_ref, b1_ref,
    out_ref, attn_ref,
    *, nhead: int, num_layers: int, batch: int, seq: int,
):
  """Whole encoder (all layers, whole batch) in a single kernel invocation.

  Shapes:
    src_ref/pos_ref : (N, D)  with N = batch * seq, flattened batch-major
    wqkv_ref        : (L, 3, H, D, dh)   per-head Q (scale folded in) / K / V weights
    bqkv_ref        : (L, 3, H, 1, dh)   matching biases (Q bias scaled)
    wo_ref          : (L, H, dh, D)      per-head rows of the output projection
    w1_ref / w2_ref : (L, D, FF) / (L, FF, D)
    vecs_ref        : (L, 6, D)          rows: bo, b2, gamma1, beta1, gamma2, beta2
    b1_ref          : (L, 1, FF)
    out_ref         : (N, D)
    attn_ref        : (B, S, S)          head-averaged attention of the LAST layer
  """
  N, D = src_ref.shape
  dh = D // nhead
  w_dtype = wqkv_ref.dtype

  def layer_norm(y, g, b):
    mu = jnp.mean(y, axis=-1, keepdims=True)
    c = y - mu
    var = jnp.mean(c * c, axis=-1, keepdims=True)   # two-pass variance (stable)
    return c * jax.lax.rsqrt(var + LN_EPS) * g + b

  x = src_ref[...]                      # (N, D) f32 activation, carried as a value
  pos = pos_ref[...]                    # (N, D) f32
  attn_mean = jnp.zeros((batch, seq, seq), jnp.float32)

  for l in range(num_layers):           # static unroll over layers
    vecs = vecs_ref[l]                  # (6, D) f32
    bo, b2 = vecs[0:1], vecs[1:2]
    g1, be1, g2, be2 = vecs[2:3], vecs[3:4], vecs[4:5], vecs[5:6]
    b1 = b1_ref[l]                      # (1, FF) f32

    qk_in = (x + pos).astype(w_dtype)   # q = k = src + pos
    v_in = x.astype(w_dtype)            # value = src (no pos)

    attn_sum = jnp.zeros((batch, seq, seq), jnp.float32)
    attn_out = jnp.zeros((N, D), jnp.float32)

    for h in range(nhead):              # static per-head loop; weights pre-split per
      #                                   head, so no lane slicing / concat here.
      qh = jnp.dot(qk_in, wqkv_ref[l, _Q, h],
                   preferred_element_type=jnp.float32) + bqkv_ref[l, _Q, h]
      kh = jnp.dot(qk_in, wqkv_ref[l, _K, h],
                   preferred_element_type=jnp.float32) + bqkv_ref[l, _K, h]
      vh = jnp.dot(v_in, wqkv_ref[l, _V, h],
                   preferred_element_type=jnp.float32) + bqkv_ref[l, _V, h]

      # Leading-dim split only (minor dims untouched) — free.
      qh3 = qh.reshape(batch, seq, dh)
      kh3 = kh.reshape(batch, seq, dh)
      vh3 = vh.reshape(batch, seq, dh)

      s = jnp.einsum("bqd,bkd->bqk", qh3, kh3,
                     preferred_element_type=jnp.float32)        # (B, S, S)
      s = s - jnp.max(s, axis=-1, keepdims=True)
      e = jnp.exp(s)
      prob = e / jnp.sum(e, axis=-1, keepdims=True)             # exact softmax
      attn_sum = attn_sum + prob

      ctx = jnp.einsum("bqk,bkd->bqd", prob, vh3,
                       preferred_element_type=jnp.float32).reshape(N, dh)
      # Per-head slice of the output projection accumulated in f32.
      attn_out = attn_out + jnp.dot(ctx.astype(w_dtype), wo_ref[l, h],
                                    preferred_element_type=jnp.float32)

    attn_out = attn_out + bo

    # residual + norm1
    x1 = layer_norm(x + attn_out, g1, be1)

    # feed-forward: Linear1 -> ReLU -> Linear2
    ff = jnp.dot(x1.astype(w_dtype), w1_ref[l],
                 preferred_element_type=jnp.float32) + b1
    ff = jnp.maximum(ff, 0.0)
    ff = jnp.dot(ff.astype(w_dtype), w2_ref[l],
                 preferred_element_type=jnp.float32) + b2

    # residual + norm2
    x = layer_norm(x1 + ff, g2, be2)
    attn_mean = attn_sum * (1.0 / nhead)   # the last layer's weights are returned

  out_ref[...] = x.astype(out_ref.dtype)
  attn_ref[...] = attn_mean.astype(attn_ref.dtype)


# ------------------------------- wrappers ---------------------------------------
def _pack_params(layer_params, matmul_dtype=MATMUL_DTYPE):
  """Pack per-layer params into a few stacked slabs.

  Q/K/V/O projection weights are pre-split per head (the 1/sqrt(dh) scale is folded
  into the Q weights AND bias) so the kernel never slices the lane dimension.
  """
  dh = D_MODEL // NHEAD
  scale = 1.0 / math.sqrt(dh)

  def split_cols(w):   # (D, D) -> (H, D, dh)
    return jnp.stack([w[:, h * dh:(h + 1) * dh] for h in range(NHEAD)], axis=0)

  def split_bias(b):   # (1, D) -> (H, 1, dh)
    return jnp.stack([b[:, h * dh:(h + 1) * dh] for h in range(NHEAD)], axis=0)

  wqkv = jnp.stack([
      jnp.stack([split_cols(p["wq"] * scale),
                 split_cols(p["wk"]),
                 split_cols(p["wv"])], axis=0)
      for p in layer_params], axis=0).astype(matmul_dtype)       # (L, 3, H, D, dh)

  bqkv = jnp.stack([
      jnp.stack([split_bias(p["bq"] * scale),
                 split_bias(p["bk"]),
                 split_bias(p["bv"])], axis=0)
      for p in layer_params], axis=0).astype(jnp.float32)        # (L, 3, H, 1, dh)

  wo = jnp.stack([
      jnp.stack([p["wo"][h * dh:(h + 1) * dh, :] for h in range(NHEAD)], axis=0)
      for p in layer_params], axis=0).astype(matmul_dtype)       # (L, H, dh, D)

  w1 = jnp.stack([p["w1"] for p in layer_params], axis=0).astype(matmul_dtype)
  w2 = jnp.stack([p["w2"] for p in layer_params], axis=0).astype(matmul_dtype)

  vecs = jnp.stack([
      jnp.concatenate([p["bo"], p["b2"], p["g1"], p["be1"], p["g2"], p["be2"]],
                      axis=0)
      for p in layer_params], axis=0).astype(jnp.float32)        # (L, 6, D)

  b1 = jnp.stack([p["b1"] for p in layer_params], axis=0).astype(jnp.float32)

  return {"wqkv": wqkv, "bqkv": bqkv, "wo": wo, "w1": w1, "w2": w2,
          "vecs": vecs, "b1": b1}


def encoder_forward_fused(src_flat, pos_flat, packed, *, batch, seq):
  """src_flat/pos_flat: (B*S, D) float32.  Returns ((B*S, D), (B, S, S))."""
  N, D = src_flat.shape
  num_layers = packed["wqkv"].shape[0]

  kernel = functools.partial(_fused_encoder_kernel, nhead=NHEAD,
                             num_layers=num_layers, batch=batch, seq=seq)

  def vmem():
    return pl.BlockSpec(memory_space=pltpu.MemorySpace.VMEM)

  out, attn = pl.pallas_call(
      kernel,
      out_shape=(
          jax.ShapeDtypeStruct((N, D), jnp.float32),
          jax.ShapeDtypeStruct((batch, seq, seq), jnp.float32),
      ),
      # No grid: everything (activations + all layers' weights, ~100 KB) fits VMEM,
      # so each operand is DMA'd exactly once and the layer loop runs in-body.
      in_specs=[vmem() for _ in range(9)],
      out_specs=(vmem(), vmem()),
  )(src_flat, pos_flat, packed["wqkv"], packed["bqkv"], packed["wo"],
    packed["w1"], packed["w2"], packed["vecs"], packed["b1"])
  return out, attn


def transformer_encoder_forward(src_sbd, pos_sbd, layer_params,
                                matmul_dtype=MATMUL_DTYPE):
  """PyTorch-layout entry point: src/pos are (S, B, D) like nn.MultiheadAttention.

  Returns (output (S, B, D), attn_weights of last layer (B, S, S)).
  """
  # TODO(synk): attn_mask / src_key_padding_mask not supported (None in this config).
  S, B, D = src_sbd.shape
  # Layout prep done in the wrapper (free XLA work): (S,B,D) -> (B*S, D).
  x = jnp.transpose(src_sbd, (1, 0, 2)).reshape(B * S, D)
  pos = jnp.transpose(pos_sbd, (1, 0, 2)).reshape(B * S, D)
  packed = _pack_params(layer_params, matmul_dtype)
  out_flat, weights = encoder_forward_fused(x, pos, packed, batch=B, seq=S)
  # self.norm is None -> no final norm
  out = jnp.transpose(out_flat.reshape(B, S, D), (1, 0, 2))
  return out, weights


# --------------------------- pure-JAX reference ----------------------------------
def _reference_forward(src_sbd, pos_sbd, layer_params):
  x = jnp.transpose(src_sbd, (1, 0, 2)).astype(jnp.float32)
  pos = jnp.transpose(pos_sbd, (1, 0, 2)).astype(jnp.float32)
  B, S, D = x.shape
  dh = D // NHEAD
  scale = 1.0 / math.sqrt(dh)

  def ln(y, g, b):
    mu = jnp.mean(y, axis=-1, keepdims=True)
    var = jnp.mean((y - mu) ** 2, axis=-1, keepdims=True)
    return (y - mu) * jax.lax.rsqrt(var + LN_EPS) * g + b

  weights = None
  for p in layer_params:
    qk_in = x + pos
    q = (qk_in @ p["wq"] + p["bq"]) * scale
    k = qk_in @ p["wk"] + p["bk"]
    v = x @ p["wv"] + p["bv"]
    q = q.reshape(B, S, NHEAD, dh).transpose(0, 2, 1, 3)
    k = k.reshape(B, S, NHEAD, dh).transpose(0, 2, 1, 3)
    v = v.reshape(B, S, NHEAD, dh).transpose(0, 2, 1, 3)
    s = jnp.einsum("bhqd,bhkd->bhqk", q, k)
    prob = jax.nn.softmax(s, axis=-1)
    weights = jnp.mean(prob, axis=1)
    ctx = jnp.einsum("bhqk,bhkd->bhqd", prob, v).transpose(0, 2, 1, 3).reshape(B, S, D)
    attn_out = ctx @ p["wo"] + p["bo"]
    x = ln(x + attn_out, p["g1"], p["be1"])
    ff = jax.nn.relu(x @ p["w1"] + p["b1"]) @ p["w2"] + p["b2"]
    x = ln(x + ff, p["g2"], p["be2"])
  return jnp.transpose(x, (1, 0, 2)), weights


# --------------------------- deterministic parameters ----------------------------
def init_layer_params(key):
  ks = jax.random.split(key, 8)
  s = 0.05
  # Linear weights stored already transposed to (in, out): y = x @ W + b.
  return {
      "wq": jax.random.normal(ks[0], (D_MODEL, D_MODEL), jnp.float32) * s,
      "bq": jnp.zeros((1, D_MODEL), jnp.float32),
      "wk": jax.random.normal(ks[1], (D_MODEL, D_MODEL), jnp.float32) * s,
      "bk": jnp.zeros((1, D_MODEL), jnp.float32),
      "wv": jax.random.normal(ks[2], (D_MODEL, D_MODEL), jnp.float32) * s,
      "bv": jnp.zeros((1, D_MODEL), jnp.float32),
      "wo": jax.random.normal(ks[3], (D_MODEL, D_MODEL), jnp.float32) * s,
      "bo": jnp.zeros((1, D_MODEL), jnp.float32),
      "w1": jax.random.normal(ks[4], (D_MODEL, DIM_FF), jnp.float32) * s,
      "b1": jnp.zeros((1, DIM_FF), jnp.float32),
      "w2": jax.random.normal(ks[5], (DIM_FF, D_MODEL), jnp.float32) * s,
      "b2": jnp.zeros((1, D_MODEL), jnp.float32),
      "g1": jnp.ones((1, D_MODEL), jnp.float32),
      "be1": jnp.zeros((1, D_MODEL), jnp.float32),
      "g2": jnp.ones((1, D_MODEL), jnp.float32),
      "be2": jnp.zeros((1, D_MODEL), jnp.float32),
  }


if __name__ == "__main__":
  root = jax.random.PRNGKey(0)
  k_src, k_pos, k_par = jax.random.split(root, 3)

  src = jax.random.normal(k_src, (SEQ, BATCH, D_MODEL), jnp.float32)   # (S, B, D)
  pos = jax.random.normal(k_pos, (SEQ, BATCH, D_MODEL), jnp.float32)   # (S, B, D)

  layer_keys = jax.random.split(k_par, NUM_LAYERS)
  layer_params = [init_layer_params(k) for k in layer_keys]

  out, attn_w = transformer_encoder_forward(src, pos, layer_params)
  out = jax.block_until_ready(out)
  attn_w = jax.block_until_ready(attn_w)

  assert out.shape == (SEQ, BATCH, D_MODEL)
  assert attn_w.shape == (BATCH, SEQ, SEQ)
  assert bool(jnp.all(jnp.isfinite(out))) and bool(jnp.all(jnp.isfinite(attn_w)))
  # exact softmax normalization -> attention rows sum to 1
  assert bool(jnp.allclose(jnp.sum(attn_w, axis=-1), 1.0, atol=1e-3))

  # Cross-check against a pure-f32 JAX reference of the PyTorch forward.
  # Tolerance 2e-2: matmul operands are bf16 (f32 accumulate); softmax/LN are f32.
  ref_out, ref_attn = _reference_forward(src, pos, layer_params)
  assert bool(jnp.allclose(out, ref_out, atol=2e-2)), \
      float(jnp.max(jnp.abs(out - ref_out)))
  assert bool(jnp.allclose(attn_w, ref_attn, atol=2e-2)), \
      float(jnp.max(jnp.abs(attn_w - ref_attn)))

  print("KERNEL_OK")
</pallas_src>

<mosaic_0001>
module attributes {stable_mosaic.version = 11 : i64} {
  func.func @_fused_encoder_kernel(%arg0: memref<16x32xf32, #tpu.memory_space<vmem>>, %arg1: memref<16x32xf32, #tpu.memory_space<vmem>>, %arg2: memref<2x3x4x32x8xbf16, #tpu.memory_space<vmem>>, %arg3: memref<2x3x4x1x8xf32, #tpu.memory_space<vmem>>, %arg4: memref<2x4x8x32xbf16, #tpu.memory_space<vmem>>, %arg5: memref<2x32x64xbf16, #tpu.memory_space<vmem>>, %arg6: memref<2x64x32xbf16, #tpu.memory_space<vmem>>, %arg7: memref<2x6x32xf32, #tpu.memory_space<vmem>>, %arg8: memref<2x1x64xf32, #tpu.memory_space<vmem>>, %arg9: memref<16x32xf32, #tpu.memory_space<vmem>>, %arg10: memref<2x8x8xf32, #tpu.memory_space<vmem>>) attributes {dimension_semantics = [], scalar_prefetch = 0 : i64, scratch_operands = 0 : i64, tpu.core_type = #tpu.core_type<tc>} {
    %c0 = arith.constant 0 : index
    %c0_0 = arith.constant 0 : index
    %0 = vector.load %arg0[%c0, %c0_0] : memref<16x32xf32, #tpu.memory_space<vmem>>, vector<16x32xf32>
    %c0_1 = arith.constant 0 : index
    %c0_2 = arith.constant 0 : index
    %1 = vector.load %arg1[%c0_1, %c0_2] : memref<16x32xf32, #tpu.memory_space<vmem>>, vector<16x32xf32>
    %c0_3 = arith.constant 0 : index
    %c0_4 = arith.constant 0 : index
    %c0_5 = arith.constant 0 : index
    %2 = vector.load %arg7[%c0_3, %c0_4, %c0_5] : memref<2x6x32xf32, #tpu.memory_space<vmem>>, vector<1x6x32xf32>
    %3 = vector.shape_cast %2 : vector<1x6x32xf32> to vector<6x32xf32>
    %4 = vector.extract_strided_slice %3 {offsets = [0, 0], sizes = [1, 32], strides = [1, 1]} : vector<6x32xf32> to vector<1x32xf32>
    %5 = vector.extract_strided_slice %3 {offsets = [1, 0], sizes = [1, 32], strides = [1, 1]} : vector<6x32xf32> to vector<1x32xf32>
    %6 = vector.extract_strided_slice %3 {offsets = [2, 0], sizes = [1, 32], strides = [1, 1]} : vector<6x32xf32> to vector<1x32xf32>
    %7 = vector.extract_strided_slice %3 {offsets = [3, 0], sizes = [1, 32], strides = [1, 1]} : vector<6x32xf32> to vector<1x32xf32>
    %8 = vector.extract_strided_slice %3 {offsets = [4, 0], sizes = [1, 32], strides = [1, 1]} : vector<6x32xf32> to vector<1x32xf32>
    %9 = vector.extract_strided_slice %3 {offsets = [5, 0], sizes = [1, 32], strides = [1, 1]} : vector<6x32xf32> to vector<1x32xf32>
    %c0_6 = arith.constant 0 : index
    %c0_7 = arith.constant 0 : index
    %c0_8 = arith.constant 0 : index
    %10 = vector.load %arg8[%c0_6, %c0_7, %c0_8] : memref<2x1x64xf32, #tpu.memory_space<vmem>>, vector<1x1x64xf32>
    %11 = vector.shape_cast %10 : vector<1x1x64xf32> to vector<1x64xf32>
    %12 = arith.addf %0, %1 : vector<16x32xf32>
    %13 = arith.truncf %12 : vector<16x32xf32> to vector<16x32xbf16>
    %14 = arith.truncf %0 : vector<16x32xf32> to vector<16x32xbf16>
    %cst = arith.constant 0.000000e+00 : f32
    %15 = vector.broadcast %cst : f32 to vector<16x32xf32>
    %c0_9 = arith.constant 0 : index
    %c0_10 = arith.constant 0 : index
    %c0_11 = arith.constant 0 : index
    %c0_12 = arith.constant 0 : index
    %c0_13 = arith.constant 0 : index
    %16 = vector.load %arg2[%c0_9, %c0_10, %c0_11, %c0_12, %c0_13] : memref<2x3x4x32x8xbf16, #tpu.memory_space<vmem>>, vector<1x1x1x32x8xbf16>
    %17 = vector.shape_cast %16 : vector<1x1x1x32x8xbf16> to vector<32x8xbf16>
    %cst_14 = arith.constant dense<0.000000e+00> : vector<16x8xf32>
    %18 = tpu.matmul %13, %17, %cst_14 {dimension_numbers = #tpu.dot_dimension_numbers<[1], [0], [0], [1], [0, 0, 1, 1], [], []>} : vector<16x32xbf16>, vector<32x8xbf16>, vector<16x8xf32> -> vector<16x8xf32>
    %c0_15 = arith.constant 0 : index
    %c0_16 = arith.constant 0 : index
    %c0_17 = arith.constant 0 : index
    %c0_18 = arith.constant 0 : index
    %c0_19 = arith.constant 0 : index
    %19 = vector.load %arg3[%c0_15, %c0_16, %c0_17, %c0_18, %c0_19] : memref<2x3x4x1x8xf32, #tpu.memory_space<vmem>>, vector<1x1x1x1x8xf32>
    %20 = vector.shape_cast %19 : vector<1x1x1x1x8xf32> to vector<1x8xf32>
    %21 = vector.broadcast %20 : vector<1x8xf32> to vector<16x8xf32>
    %22 = arith.addf %18, %21 : vector<16x8xf32>
    %c0_20 = arith.constant 0 : index
    %c1 = arith.constant 1 : index
    %c0_21 = arith.constant 0 : index
    %c0_22 = arith.constant 0 : index
    %c0_23 = arith.constant 0 : index
    %23 = vector.load %arg2[%c0_20, %c1, %c0_21, %c0_22, %c0_23] : memref<2x3x4x32x8xbf16, #tpu.memory_space<vmem>>, vector<1x1x1x32x8xbf16>
    %24 = vector.shape_cast %23 : vector<1x1x1x32x8xbf16> to vector<32x8xbf16>
    %cst_24 = arith.constant dense<0.000000e+00> : vector<16x8xf32>
    %25 = tpu.matmul %13, %24, %cst_24 {dimension_numbers = #tpu.dot_dimension_numbers<[1], [0], [0], [1], [0, 0, 1, 1], [], []>} : vector<16x32xbf16>, vector<32x8xbf16>, vector<16x8xf32> -> vector<16x8xf32>
    %c0_25 = arith.constant 0 : index
    %c1_26 = arith.constant 1 : index
    %c0_27 = arith.constant 0 : index
    %c0_28 = arith.constant 0 : index
    %c0_29 = arith.constant 0 : index
    %26 = vector.load %arg3[%c0_25, %c1_26, %c0_27, %c0_28, %c0_29] : memref<2x3x4x1x8xf32, #tpu.memory_space<vmem>>, vector<1x1x1x1x8xf32>
    %27 = vector.shape_cast %26 : vector<1x1x1x1x8xf32> to vector<1x8xf32>
    %28 = vector.broadcast %27 : vector<1x8xf32> to vector<16x8xf32>
    %29 = arith.addf %25, %28 : vector<16x8xf32>
    %c0_30 = arith.constant 0 : index
    %c2 = arith.constant 2 : index
    %c0_31 = arith.constant 0 : index
    %c0_32 = arith.constant 0 : index
    %c0_33 = arith.constant 0 : index
    %30 = vector.load %arg2[%c0_30, %c2, %c0_31, %c0_32, %c0_33] : memref<2x3x4x32x8xbf16, #tpu.memory_space<vmem>>, vector<1x1x1x32x8xbf16>
    %31 = vector.shape_cast %30 : vector<1x1x1x32x8xbf16> to vector<32x8xbf16>
    %cst_34 = arith.constant dense<0.000000e+00> : vector<16x8xf32>
    %32 = tpu.matmul %14, %31, %cst_34 {dimension_numbers = #tpu.dot_dimension_numbers<[1], [0], [0], [1], [0, 0, 1, 1], [], []>} : vector<16x32xbf16>, vector<32x8xbf16>, vector<16x8xf32> -> vector<16x8xf32>
    %c0_35 = arith.constant 0 : index
    %c2_36 = arith.constant 2 : index
    %c0_37 = arith.constant 0 : index
    %c0_38 = arith.constant 0 : index
    %c0_39 = arith.constant 0 : index
    %33 = vector.load %arg3[%c0_35, %c2_36, %c0_37, %c0_38, %c0_39] : memref<2x3x4x1x8xf32, #tpu.memory_space<vmem>>, vector<1x1x1x1x8xf32>
    %34 = vector.shape_cast %33 : vector<1x1x1x1x8xf32> to vector<1x8xf32>
    %35 = vector.broadcast %34 : vector<1x8xf32> to vector<16x8xf32>
    %36 = arith.addf %32, %35 : vector<16x8xf32>
    %37 = vector.shape_cast %22 : vector<16x8xf32> to vector<2x8x8xf32>
    %38 = vector.shape_cast %29 : vector<16x8xf32> to vector<2x8x8xf32>
    %39 = vector.shape_cast %36 : vector<16x8xf32> to vector<2x8x8xf32>
    "tpu.trace_start"() <{level = 10 : i32, message = "bqd,bkd->bqk"}> : () -> ()
    %cst_40 = arith.constant dense<0.000000e+00> : vector<2x8x8xf32>
    %40 = tpu.matmul %37, %38, %cst_40 {dimension_numbers = #tpu.dot_dimension_numbers<[2], [2], [1], [1], [0, 0, 0, 1, 1, 1], [0], [0]>} : vector<2x8x8xf32>, vector<2x8x8xf32>, vector<2x8x8xf32> -> vector<2x8x8xf32>
    "tpu.trace_stop"() : () -> ()
    %cst_41 = arith.constant dense<0xFF800000> : vector<2x8xf32>
    %41 = vector.multi_reduction <maximumf>, %40, %cst_41 [2] : vector<2x8x8xf32> to vector<2x8xf32>
    %42 = vector.shape_cast %41 : vector<2x8xf32> to vector<2x8x1xf32>
    %43 = vector.broadcast %42 : vector<2x8x1xf32> to vector<2x8x8xf32>
    %44 = arith.subf %40, %43 : vector<2x8x8xf32>
    %45 = math.exp %44 : vector<2x8x8xf32>
    %cst_42 = arith.constant dense<0.000000e+00> : vector<2x8xf32>
    %46 = vector.multi_reduction <add>, %45, %cst_42 [2] : vector<2x8x8xf32> to vector<2x8xf32>
    %47 = vector.shape_cast %46 : vector<2x8xf32> to vector<2x8x1xf32>
    %48 = vector.broadcast %47 : vector<2x8x1xf32> to vector<2x8x8xf32>
    %49 = arith.divf %45, %48 : vector<2x8x8xf32>
    "tpu.trace_start"() <{level = 10 : i32, message = "bqk,bkd->bqd"}> : () -> ()
    %cst_43 = arith.constant dense<0.000000e+00> : vector<2x8x8xf32>
    %50 = tpu.matmul %49, %39, %cst_43 {dimension_numbers = #tpu.dot_dimension_numbers<[2], [1], [1], [2], [0, 0, 0, 1, 1, 2], [0], [0]>} : vector<2x8x8xf32>, vector<2x8x8xf32>, vector<2x8x8xf32> -> vector<2x8x8xf32>
    "tpu.trace_stop"() : () -> ()
    %51 = vector.shape_cast %50 : vector<2x8x8xf32> to vector<16x8xf32>
    %52 = arith.truncf %51 : vector<16x8xf32> to vector<16x8xbf16>
    %c0_44 = arith.constant 0 : index
    %c0_45 = arith.constant 0 : index
    %c0_46 = arith.constant 0 : index
    %c0_47 = arith.constant 0 : index
    %53 = vector.load %arg4[%c0_44, %c0_45, %c0_46, %c0_47] : memref<2x4x8x32xbf16, #tpu.memory_space<vmem>>, vector<1x1x8x32xbf16>
    %54 = vector.shape_cast %53 : vector<1x1x8x32xbf16> to vector<8x32xbf16>
    %cst_48 = arith.constant dense<0.000000e+00> : vector<16x32xf32>
    %55 = tpu.matmul %52, %54, %cst_48 {dimension_numbers = #tpu.dot_dimension_numbers<[1], [0], [0], [1], [0, 0, 1, 1], [], []>} : vector<16x8xbf16>, vector<8x32xbf16>, vector<16x32xf32> -> vector<16x32xf32>
    %56 = arith.addf %15, %55 : vector<16x32xf32>
    %c0_49 = arith.constant 0 : index
    %c0_50 = arith.constant 0 : index
    %c1_51 = arith.constant 1 : index
    %c0_52 = arith.constant 0 : index
    %c0_53 = arith.constant 0 : index
    %57 = vector.load %arg2[%c0_49, %c0_50, %c1_51, %c0_52, %c0_53] : memref<2x3x4x32x8xbf16, #tpu.memory_space<vmem>>, vector<1x1x1x32x8xbf16>
    %58 = vector.shape_cast %57 : vector<1x1x1x32x8xbf16> to vector<32x8xbf16>
    %cst_54 = arith.constant dense<0.000000e+00> : vector<16x8xf32>
    %59 = tpu.matmul %13, %58, %cst_54 {dimension_numbers = #tpu.dot_dimension_numbers<[1], [0], [0], [1], [0, 0, 1, 1], [], []>} : vector<16x32xbf16>, vector<32x8xbf16>, vector<16x8xf32> -> vector<16x8xf32>
    %c0_55 = arith.constant 0 : index
    %c0_56 = arith.constant 0 : index
    %c1_57 = arith.constant 1 : index
    %c0_58 = arith.constant 0 : index
    %c0_59 = arith.constant 0 : index
    %60 = vector.load %arg3[%c0_55, %c0_56, %c1_57, %c0_58, %c0_59] : memref<2x3x4x1x8xf32, #tpu.memory_space<vmem>>, vector<1x1x1x1x8xf32>
    %61 = vector.shape_cast %60 : vector<1x1x1x1x8xf32> to vector<1x8xf32>
    %62 = vector.broadcast %61 : vector<1x8xf32> to vector<16x8xf32>
    %63 = arith.addf %59, %62 : vector<16x8xf32>
    %c0_60 = arith.constant 0 : index
    %c1_61 = arith.constant 1 : index
    %c1_62 = arith.constant 1 : index
    %c0_63 = arith.constant 0 : index
    %c0_64 = arith.constant 0 : index
    %64 = vector.load %arg2[%c0_60, %c1_61, %c1_62, %c0_63, %c0_64] : memref<2x3x4x32x8xbf16, #tpu.memory_space<vmem>>, vector<1x1x1x32x8xbf16>
    %65 = vector.shape_cast %64 : vector<1x1x1x32x8xbf16> to vector<32x8xbf16>
    %cst_65 = arith.constant dense<0.000000e+00> : vector<16x8xf32>
    %66 = tpu.matmul %13, %65, %cst_65 {dimension_numbers = #tpu.dot_dimension_numbers<[1], [0], [0], [1], [0, 0, 1, 1], [], []>} : vector<16x32xbf16>, vector<32x8xbf16>, vector<16x8xf32> -> vector<16x8xf32>
    %c0_66 = arith.constant 0 : index
    %c1_67 = arith.constant 1 : index
    %c1_68 = arith.constant 1 : index
    %c0_69 = arith.constant 0 : index
    %c0_70 = arith.constant 0 : index
    %67 = vector.load %arg3[%c0_66, %c1_67, %c1_68, %c0_69, %c0_70] : memref<2x3x4x1x8xf32, #tpu.memory_space<vmem>>, vector<1x1x1x1x8xf32>
    %68 = vector.shape_cast %67 : vector<1x1x1x1x8xf32> to vector<1x8xf32>
    %69 = vector.broadcast %68 : vector<1x8xf32> to vector<16x8xf32>
    %70 = arith.addf %66, %69 : vector<16x8xf32>
    %c0_71 = arith.constant 0 : index
    %c2_72 = arith.constant 2 : index
    %c1_73 = arith.constant 1 : index
    %c0_74 = arith.constant 0 : index
    %c0_75 = arith.constant 0 : index
    %71 = vector.load %arg2[%c0_71, %c2_72, %c1_73, %c0_74, %c0_75] : memref<2x3x4x32x8xbf16, #tpu.memory_space<vmem>>, vector<1x1x1x32x8xbf16>
    %72 = vector.shape_cast %71 : vector<1x1x1x32x8xbf16> to vector<32x8xbf16>
    %cst_76 = arith.constant dense<0.000000e+00> : vector<16x8xf32>
    %73 = tpu.matmul %14, %72, %cst_76 {dimension_numbers = #tpu.dot_dimension_numbers<[1], [0], [0], [1], [0, 0, 1, 1], [], []>} : vector<16x32xbf16>, vector<32x8xbf16>, vector<16x8xf32> -> vector<16x8xf32>
    %c0_77 = arith.constant 0 : index
    %c2_78 = arith.constant 2 : index
    %c1_79 = arith.constant 1 : index
    %c0_80 = arith.constant 0 : index
    %c0_81 = arith.constant 0 : index
    %74 = vector.load %arg3[%c0_77, %c2_78, %c1_79, %c0_80, %c0_81] : memref<2x3x4x1x8xf32, #tpu.memory_space<vmem>>, vector<1x1x1x1x8xf32>
    %75 = vector.shape_cast %74 : vector<1x1x1x1x8xf32> to vector<1x8xf32>
    %76 = vector.broadcast %75 : vector<1x8xf32> to vector<16x8xf32>
    %77 = arith.addf %73, %76 : vector<16x8xf32>
    %78 = vector.shape_cast %63 : vector<16x8xf32> to vector<2x8x8xf32>
    %79 = vector.shape_cast %70 : vector<16x8xf32> to vector<2x8x8xf32>
    %80 = vector.shape_cast %77 : vector<16x8xf32> to vector<2x8x8xf32>
    "tpu.trace_start"() <{level = 10 : i32, message = "bqd,bkd->bqk"}> : () -> ()
    %cst_82 = arith.constant dense<0.000000e+00> : vector<2x8x8xf32>
    %81 = tpu.matmul %78, %79, %cst_82 {dimension_numbers = #tpu.dot_dimension_numbers<[2], [2], [1], [1], [0, 0, 0, 1, 1, 1], [0], [0]>} : vector<2x8x8xf32>, vector<2x8x8xf32>, vector<2x8x8xf32> -> vector<2x8x8xf32>
    "tpu.trace_stop"() : () -> ()
    %cst_83 = arith.constant dense<0xFF800000> : vector<2x8xf32>
    %82 = vector.multi_reduction <maximumf>, %81, %cst_83 [2] : vector<2x8x8xf32> to vector<2x8xf32>
    %83 = vector.shape_cast %82 : vector<2x8xf32> to vector<2x8x1xf32>
    %84 = vector.broadcast %83 : vector<2x8x1xf32> to vector<2x8x8xf32>
    %85 = arith.subf %81, %84 : vector<2x8x8xf32>
    %86 = math.exp %85 : vector<2x8x8xf32>
    %cst_84 = arith.constant dense<0.000000e+00> : vector<2x8xf32>
    %87 = vector.multi_reduction <add>, %86, %cst_84 [2] : vector<2x8x8xf32> to vector<2x8xf32>
    %88 = vector.shape_cast %87 : vector<2x8xf32> to vector<2x8x1xf32>
    %89 = vector.broadcast %88 : vector<2x8x1xf32> to vector<2x8x8xf32>
    %90 = arith.divf %86, %89 : vector<2x8x8xf32>
    "tpu.trace_start"() <{level = 10 : i32, message = "bqk,bkd->bqd"}> : () -> ()
    %cst_85 = arith.constant dense<0.000000e+00> : vector<2x8x8xf32>
    %91 = tpu.matmul %90, %80, %cst_85 {dimension_numbers = #tpu.dot_dimension_numbers<[2], [1], [1], [2], [0, 0, 0, 1, 1, 2], [0], [0]>} : vector<2x8x8xf32>, vector<2x8x8xf32>, vector<2x8x8xf32> -> vector<2x8x8xf32>
    "tpu.trace_stop"() : () -> ()
    %92 = vector.shape_cast %91 : vector<2x8x8xf32> to vector<16x8xf32>
    %93 = arith.truncf %92 : vector<16x8xf32> to vector<16x8xbf16>
    %c0_86 = arith.constant 0 : index
    %c1_87 = arith.constant 1 : index
    %c0_88 = arith.constant 0 : index
    %c0_89 = arith.constant 0 : index
    %94 = vector.load %arg4[%c0_86, %c1_87, %c0_88, %c0_89] : memref<2x4x8x32xbf16, #tpu.memory_space<vmem>>, vector<1x1x8x32xbf16>
    %95 = vector.shape_cast %94 : vector<1x1x8x32xbf16> to vector<8x32xbf16>
    %cst_90 = arith.constant dense<0.000000e+00> : vector<16x32xf32>
    %96 = tpu.matmul %93, %95, %cst_90 {dimension_numbers = #tpu.dot_dimension_numbers<[1], [0], [0], [1], [0, 0, 1, 1], [], []>} : vector<16x8xbf16>, vector<8x32xbf16>, vector<16x32xf32> -> vector<16x32xf32>
    %97 = arith.addf %56, %96 : vector<16x32xf32>
    %c0_91 = arith.constant 0 : index
    %c0_92 = arith.constant 0 : index
    %c2_93 = arith.constant 2 : index
    %c0_94 = arith.constant 0 : index
    %c0_95 = arith.constant 0 : index
    %98 = vector.load %arg2[%c0_91, %c0_92, %c2_93, %c0_94, %c0_95] : memref<2x3x4x32x8xbf16, #tpu.memory_space<vmem>>, vector<1x1x1x32x8xbf16>
    %99 = vector.shape_cast %98 : vector<1x1x1x32x8xbf16> to vector<32x8xbf16>
    %cst_96 = arith.constant dense<0.000000e+00> : vector<16x8xf32>
    %100 = tpu.matmul %13, %99, %cst_96 {dimension_numbers = #tpu.dot_dimension_numbers<[1], [0], [0], [1], [0, 0, 1, 1], [], []>} : vector<16x32xbf16>, vector<32x8xbf16>, vector<16x8xf32> -> vector<16x8xf32>
    %c0_97 = arith.constant 0 : index
    %c0_98 = arith.constant 0 : index
    %c2_99 = arith.constant 2 : index
    %c0_100 = arith.constant 0 : index
    %c0_101 = arith.constant 0 : index
    %101 = vector.load %arg3[%c0_97, %c0_98, %c2_99, %c0_100, %c0_101] : memref<2x3x4x1x8xf32, #tpu.memory_space<vmem>>, vector<1x1x1x1x8xf32>
    %102 = vector.shape_cast %101 : vector<1x1x1x1x8xf32> to vector<1x8xf32>
    %103 = vector.broadcast %102 : vector<1x8xf32> to vector<16x8xf32>
    %104 = arith.addf %100, %103 : vector<16x8xf32>
    %c0_102 = arith.constant 0 : index
    %c1_103 = arith.constant 1 : index
    %c2_104 = arith.constant 2 : index
    %c0_105 = arith.constant 0 : index
    %c0_106 = arith.constant 0 : index
    %105 = vector.load %arg2[%c0_102, %c1_103, %c2_104, %c0_105, %c0_106] : memref<2x3x4x32x8xbf16, #tpu.memory_space<vmem>>, vector<1x1x1x32x8xbf16>
    %106 = vector.shape_cast %105 : vector<1x1x1x32x8xbf16> to vector<32x8xbf16>
    %cst_107 = arith.constant dense<0.000000e+00> : vector<16x8xf32>
    %107 = tpu.matmul %13, %106, %cst_107 {dimension_numbers = #tpu.dot_dimension_numbers<[1], [0], [0], [1], [0, 0, 1, 1], [], []>} : vector<16x32xbf16>, vector<32x8xbf16>, vector<16x8xf32> -> vector<16x8xf32>
    %c0_108 = arith.constant 0 : index
    %c1_109 = arith.constant 1 : index
    %c2_110 = arith.constant 2 : index
    %c0_111 = arith.constant 0 : index
    %c0_112 = arith.constant 0 : index
    %108 = vector.load %arg3[%c0_108, %c1_109, %c2_110, %c0_111, %c0_112] : memref<2x3x4x1x8xf32, #tpu.memory_space<vmem>>, vector<1x1x1x1x8xf32>
    %109 = vector.shape_cast %108 : vector<1x1x1x1x8xf32> to vector<1x8xf32>
    %110 = vector.broadcast %109 : vector<1x8xf32> to vector<16x8xf32>
    %111 = arith.addf %107, %110 : vector<16x8xf32>
    %c0_113 = arith.constant 0 : index
    %c2_114 = arith.constant 2 : index
    %c2_115 = arith.constant 2 : index
    %c0_116 = arith.constant 0 : index
    %c0_117 = arith.constant 0 : index
    %112 = vector.load %arg2[%c0_113, %c2_114, %c2_115, %c0_116, %c0_117] : memref<2x3x4x32x8xbf16, #tpu.memory_space<vmem>>, vector<1x1x1x32x8xbf16>
    %113 = vector.shape_cast %112 : vector<1x1x1x32x8xbf16> to vector<32x8xbf16>
    %cst_118 = arith.constant dense<0.000000e+00> : vector<16x8xf32>
    %114 = tpu.matmul %14, %113, %cst_118 {dimension_numbers = #tpu.dot_dimension_numbers<[1], [0], [0], [1], [0, 0, 1, 1], [], []>} : vector<16x32xbf16>, vector<32x8xbf16>, vector<16x8xf32> -> vector<16x8xf32>
    %c0_119 = arith.constant 0 : index
    %c2_120 = arith.constant 2 : index
    %c2_121 = arith.constant 2 : index
    %c0_122 = arith.constant 0 : index
    %c0_123 = arith.constant 0 : index
    %115 = vector.load %arg3[%c0_119, %c2_120, %c2_121, %c0_122, %c0_123] : memref<2x3x4x1x8xf32, #tpu.memory_space<vmem>>, vector<1x1x1x1x8xf32>
    %116 = vector.shape_cast %115 : vector<1x1x1x1x8xf32> to vector<1x8xf32>
    %117 = vector.broadcast %116 : vector<1x8xf32> to vector<16x8xf32>
    %118 = arith.addf %114, %117 : vector<16x8xf32>
    %119 = vector.shape_cast %104 : vector<16x8xf32> to vector<2x8x8xf32>
    %120 = vector.shape_cast %111 : vector<16x8xf32> to vector<2x8x8xf32>
    %121 = vector.shape_cast %118 : vector<16x8xf32> to vector<2x8x8xf32>
    "tpu.trace_start"() <{level = 10 : i32, message = "bqd,bkd->bqk"}> : () -> ()
    %cst_124 = arith.constant dense<0.000000e+00> : vector<2x8x8xf32>
    %122 = tpu.matmul %119, %120, %cst_124 {dimension_numbers = #tpu.dot_dimension_numbers<[2], [2], [1], [1], [0, 0, 0, 1, 1, 1], [0], [0]>} : vector<2x8x8xf32>, vector<2x8x8xf32>, vector<2x8x8xf32> -> vector<2x8x8xf32>
    "tpu.trace_stop"() : () -> ()
    %cst_125 = arith.constant dense<0xFF800000> : vector<2x8xf32>
    %123 = vector.multi_reduction <maximumf>, %122, %cst_125 [2] : vector<2x8x8xf32> to vector<2x8xf32>
    %124 = vector.shape_cast %123 : vector<2x8xf32> to vector<2x8x1xf32>
    %125 = vector.broadcast %124 : vector<2x8x1xf32> to vector<2x8x8xf32>
    %126 = arith.subf %122, %125 : vector<2x8x8xf32>
    %127 = math.exp %126 : vector<2x8x8xf32>
    %cst_126 = arith.constant dense<0.000000e+00> : vector<2x8xf32>
    %128 = vector.multi_reduction <add>, %127, %cst_126 [2] : vector<2x8x8xf32> to vector<2x8xf32>
    %129 = vector.shape_cast %128 : vector<2x8xf32> to vector<2x8x1xf32>
    %130 = vector.broadcast %129 : vector<2x8x1xf32> to vector<2x8x8xf32>
    %131 = arith.divf %127, %130 : vector<2x8x8xf32>
    "tpu.trace_start"() <{level = 10 : i32, message = "bqk,bkd->bqd"}> : () -> ()
    %cst_127 = arith.constant dense<0.000000e+00> : vector<2x8x8xf32>
    %132 = tpu.matmul %131, %121, %cst_127 {dimension_numbers = #tpu.dot_dimension_numbers<[2], [1], [1], [2], [0, 0, 0, 1, 1, 2], [0], [0]>} : vector<2x8x8xf32>, vector<2x8x8xf32>, vector<2x8x8xf32> -> vector<2x8x8xf32>
    "tpu.trace_stop"() : () -> ()
    %133 = vector.shape_cast %132 : vector<2x8x8xf32> to vector<16x8xf32>
    %134 = arith.truncf %133 : vector<16x8xf32> to vector<16x8xbf16>
    %c0_128 = arith.constant 0 : index
    %c2_129 = arith.constant 2 : index
    %c0_130 = arith.constant 0 : index
    %c0_131 = arith.constant 0 : index
    %135 = vector.load %arg4[%c0_128, %c2_129, %c0_130, %c0_131] : memref<2x4x8x32xbf16, #tpu.memory_space<vmem>>, vector<1x1x8x32xbf16>
    %136 = vector.shape_cast %135 : vector<1x1x8x32xbf16> to vector<8x32xbf16>
    %cst_132 = arith.constant dense<0.000000e+00> : vector<16x32xf32>
    %137 = tpu.matmul %134, %136, %cst_132 {dimension_numbers = #tpu.dot_dimension_numbers<[1], [0], [0], [1], [0, 0, 1, 1], [], []>} : vector<16x8xbf16>, vector<8x32xbf16>, vector<16x32xf32> -> vector<16x32xf32>
    %138 = arith.addf %97, %137 : vector<16x32xf32>
    %c0_133 = arith.constant 0 : index
    %c0_134 = arith.constant 0 : index
    %c3 = arith.constant 3 : index
    %c0_135 = arith.constant 0 : index
    %c0_136 = arith.constant 0 : index
    %139 = vector.load %arg2[%c0_133, %c0_134, %c3, %c0_135, %c0_136] : memref<2x3x4x32x8xbf16, #tpu.memory_space<vmem>>, vector<1x1x1x32x8xbf16>
    %140 = vector.shape_cast %139 : vector<1x1x1x32x8xbf16> to vector<32x8xbf16>
    %cst_137 = arith.constant dense<0.000000e+00> : vector<16x8xf32>
    %141 = tpu.matmul %13, %140, %cst_137 {dimension_numbers = #tpu.dot_dimension_numbers<[1], [0], [0], [1], [0, 0, 1, 1], [], []>} : vector<16x32xbf16>, vector<32x8xbf16>, vector<16x8xf32> -> vector<16x8xf32>
    %c0_138 = arith.constant 0 : index
    %c0_139 = arith.constant 0 : index
    %c3_140 = arith.constant 3 : index
    %c0_141 = arith.constant 0 : index
    %c0_142 = arith.constant 0 : index
    %142 = vector.load %arg3[%c0_138, %c0_139, %c3_140, %c0_141, %c0_142] : memref<2x3x4x1x8xf32, #tpu.memory_space<vmem>>, vector<1x1x1x1x8xf32>
    %143 = vector.shape_cast %142 : vector<1x1x1x1x8xf32> to vector<1x8xf32>
    %144 = vector.broadcast %143 : vector<1x8xf32> to vector<16x8xf32>
    %145 = arith.addf %141, %144 : vector<16x8xf32>
    %c0_143 = arith.constant 0 : index
    %c1_144 = arith.constant 1 : index
    %c3_145 = arith.constant 3 : index
    %c0_146 = arith.constant 0 : index
    %c0_147 = arith.constant 0 : index
    %146 = vector.load %arg2[%c0_143, %c1_144, %c3_145, %c0_146, %c0_147] : memref<2x3x4x32x8xbf16, #tpu.memory_space<vmem>>, vector<1x1x1x32x8xbf16>
    %147 = vector.shape_cast %146 : vector<1x1x1x32x8xbf16> to vector<32x8xbf16>
    %cst_148 = arith.constant dense<0.000000e+00> : vector<16x8xf32>
    %148 = tpu.matmul %13, %147, %cst_148 {dimension_numbers = #tpu.dot_dimension_numbers<[1], [0], [0], [1], [0, 0, 1, 1], [], []>} : vector<16x32xbf16>, vector<32x8xbf16>, vector<16x8xf32> -> vector<16x8xf32>
    %c0_149 = arith.constant 0 : index
    %c1_150 = arith.constant 1 : index
    %c3_151 = arith.constant 3 : index
    %c0_152 = arith.constant 0 : index
    %c0_153 = arith.constant 0 : index
    %149 = vector.load %arg3[%c0_149, %c1_150, %c3_151, %c0_152, %c0_153] : memref<2x3x4x1x8xf32, #tpu.memory_space<vmem>>, vector<1x1x1x1x8xf32>
    %150 = vector.shape_cast %149 : vector<1x1x1x1x8xf32> to vector<1x8xf32>
    %151 = vector.broadcast %150 : vector<1x8xf32> to vector<16x8xf32>
    %152 = arith.addf %148, %151 : vector<16x8xf32>
    %c0_154 = arith.constant 0 : index
    %c2_155 = arith.constant 2 : index
    %c3_156 = arith.constant 3 : index
    %c0_157 = arith.constant 0 : index
    %c0_158 = arith.constant 0 : index
    %153 = vector.load %arg2[%c0_154, %c2_155, %c3_156, %c0_157, %c0_158] : memref<2x3x4x32x8xbf16, #tpu.memory_space<vmem>>, vector<1x1x1x32x8xbf16>
    %154 = vector.shape_cast %153 : vector<1x1x1x32x8xbf16> to vector<32x8xbf16>
    %cst_159 = arith.constant dense<0.000000e+00> : vector<16x8xf32>
    %155 = tpu.matmul %14, %154, %cst_159 {dimension_numbers = #tpu.dot_dimension_numbers<[1], [0], [0], [1], [0, 0, 1, 1], [], []>} : vector<16x32xbf16>, vector<32x8xbf16>, vector<16x8xf32> -> vector<16x8xf32>
    %c0_160 = arith.constant 0 : index
    %c2_161 = arith.constant 2 : index
    %c3_162 = arith.constant 3 : index
    %c0_163 = arith.constant 0 : index
    %c0_164 = arith.constant 0 : index
    %156 = vector.load %arg3[%c0_160, %c2_161, %c3_162, %c0_163, %c0_164] : memref<2x3x4x1x8xf32, #tpu.memory_space<vmem>>, vector<1x1x1x1x8xf32>
    %157 = vector.shape_cast %156 : vector<1x1x1x1x8xf32> to vector<1x8xf32>
    %158 = vector.broadcast %157 : vector<1x8xf32> to vector<16x8xf32>
    %159 = arith.addf %155, %158 : vector<16x8xf32>
    %160 = vector.shape_cast %145 : vector<16x8xf32> to vector<2x8x8xf32>
    %161 = vector.shape_cast %152 : vector<16x8xf32> to vector<2x8x8xf32>
    %162 = vector.shape_cast %159 : vector<16x8xf32> to vector<2x8x8xf32>
    "tpu.trace_start"() <{level = 10 : i32, message = "bqd,bkd->bqk"}> : () -> ()
    %cst_165 = arith.constant dense<0.000000e+00> : vector<2x8x8xf32>
    %163 = tpu.matmul %160, %161, %cst_165 {dimension_numbers = #tpu.dot_dimension_numbers<[2], [2], [1], [1], [0, 0, 0, 1, 1, 1], [0], [0]>} : vector<2x8x8xf32>, vector<2x8x8xf32>, vector<2x8x8xf32> -> vector<2x8x8xf32>
    "tpu.trace_stop"() : () -> ()
    %cst_166 = arith.constant dense<0xFF800000> : vector<2x8xf32>
    %164 = vector.multi_reduction <maximumf>, %163, %cst_166 [2] : vector<2x8x8xf32> to vector<2x8xf32>
    %165 = vector.shape_cast %164 : vector<2x8xf32> to vector<2x8x1xf32>
    %166 = vector.broadcast %165 : vector<2x8x1xf32> to vector<2x8x8xf32>
    %167 = arith.subf %163, %166 : vector<2x8x8xf32>
    %168 = math.exp %167 : vector<2x8x8xf32>
    %cst_167 = arith.constant dense<0.000000e+00> : vector<2x8xf32>
    %169 = vector.multi_reduction <add>, %168, %cst_167 [2] : vector<2x8x8xf32> to vector<2x8xf32>
    %170 = vector.shape_cast %169 : vector<2x8xf32> to vector<2x8x1xf32>
    %171 = vector.broadcast %170 : vector<2x8x1xf32> to vector<2x8x8xf32>
    %172 = arith.divf %168, %171 : vector<2x8x8xf32>
    "tpu.trace_start"() <{level = 10 : i32, message = "bqk,bkd->bqd"}> : () -> ()
    %cst_168 = arith.constant dense<0.000000e+00> : vector<2x8x8xf32>
    %173 = tpu.matmul %172, %162, %cst_168 {dimension_numbers = #tpu.dot_dimension_numbers<[2], [1], [1], [2], [0, 0, 0, 1, 1, 2], [0], [0]>} : vector<2x8x8xf32>, vector<2x8x8xf32>, vector<2x8x8xf32> -> vector<2x8x8xf32>
    "tpu.trace_stop"() : () -> ()
    %174 = vector.shape_cast %173 : vector<2x8x8xf32> to vector<16x8xf32>
    %175 = arith.truncf %174 : vector<16x8xf32> to vector<16x8xbf16>
    %c0_169 = arith.constant 0 : index
    %c3_170 = arith.constant 3 : index
    %c0_171 = arith.constant 0 : index
    %c0_172 = arith.constant 0 : index
    %176 = vector.load %arg4[%c0_169, %c3_170, %c0_171, %c0_172] : memref<2x4x8x32xbf16, #tpu.memory_space<vmem>>, vector<1x1x8x32xbf16>
    %177 = vector.shape_cast %176 : vector<1x1x8x32xbf16> to vector<8x32xbf16>
    %cst_173 = arith.constant dense<0.000000e+00> : vector<16x32xf32>
    %178 = tpu.matmul %175, %177, %cst_173 {dimension_numbers = #tpu.dot_dimension_numbers<[1], [0], [0], [1], [0, 0, 1, 1], [], []>} : vector<16x8xbf16>, vector<8x32xbf16>, vector<16x32xf32> -> vector<16x32xf32>
    %179 = arith.addf %138, %178 : vector<16x32xf32>
    %180 = vector.broadcast %4 : vector<1x32xf32> to vector<16x32xf32>
    %181 = arith.addf %179, %180 : vector<16x32xf32>
    %182 = arith.addf %0, %181 : vector<16x32xf32>
    %cst_174 = arith.constant dense<0.000000e+00> : vector<16xf32>
    %183 = vector.multi_reduction <add>, %182, %cst_174 [1] : vector<16x32xf32> to vector<16xf32>
    %184 = vector.shape_cast %183 : vector<16xf32> to vector<16x1xf32>
    %cst_175 = arith.constant 3.200000e+01 : f32
    %185 = vector.broadcast %cst_175 : f32 to vector<16x1xf32>
    %186 = arith.divf %184, %185 : vector<16x1xf32>
    %187 = vector.broadcast %186 : vector<16x1xf32> to vector<16x32xf32>
    %188 = arith.subf %182, %187 : vector<16x32xf32>
    %189 = arith.mulf %188, %188 : vector<16x32xf32>
    %cst_176 = arith.constant dense<0.000000e+00> : vector<16xf32>
    %190 = vector.multi_reduction <add>, %189, %cst_176 [1] : vector<16x32xf32> to vector<16xf32>
    %191 = vector.shape_cast %190 : vector<16xf32> to vector<16x1xf32>
    %cst_177 = arith.constant 3.200000e+01 : f32
    %192 = vector.broadcast %cst_177 : f32 to vector<16x1xf32>
    %193 = arith.divf %191, %192 : vector<16x1xf32>
    %cst_178 = arith.constant 9.99999974E-6 : f32
    %194 = vector.broadcast %cst_178 : f32 to vector<16x1xf32>
    %195 = arith.addf %193, %194 : vector<16x1xf32>
    %196 = math.rsqrt %195 : vector<16x1xf32>
    %197 = vector.broadcast %196 : vector<16x1xf32> to vector<16x32xf32>
    %198 = arith.mulf %188, %197 : vector<16x32xf32>
    %199 = vector.broadcast %6 : vector<1x32xf32> to vector<16x32xf32>
    %200 = arith.mulf %198, %199 : vector<16x32xf32>
    %201 = vector.broadcast %7 : vector<1x32xf32> to vector<16x32xf32>
    %202 = arith.addf %200, %201 : vector<16x32xf32>
    %203 = arith.truncf %202 : vector<16x32xf32> to vector<16x32xbf16>
    %c0_179 = arith.constant 0 : index
    %c0_180 = arith.constant 0 : index
    %c0_181 = arith.constant 0 : index
    %204 = vector.load %arg5[%c0_179, %c0_180, %c0_181] : memref<2x32x64xbf16, #tpu.memory_space<vmem>>, vector<1x32x64xbf16>
    %205 = vector.shape_cast %204 : vector<1x32x64xbf16> to vector<32x64xbf16>
    %cst_182 = arith.constant dense<0.000000e+00> : vector<16x64xf32>
    %206 = tpu.matmul %203, %205, %cst_182 {dimension_numbers = #tpu.dot_dimension_numbers<[1], [0], [0], [1], [0, 0, 1, 1], [], []>} : vector<16x32xbf16>, vector<32x64xbf16>, vector<16x64xf32> -> vector<16x64xf32>
    %207 = vector.broadcast %11 : vector<1x64xf32> to vector<16x64xf32>
    %208 = arith.addf %206, %207 : vector<16x64xf32>
    %cst_183 = arith.constant 0.000000e+00 : f32
    %209 = vector.broadcast %cst_183 : f32 to vector<16x64xf32>
    %210 = arith.maximumf %208, %209 : vector<16x64xf32>
    %211 = arith.truncf %210 : vector<16x64xf32> to vector<16x64xbf16>
    %c0_184 = arith.constant 0 : index
    %c0_185 = arith.constant 0 : index
    %c0_186 = arith.constant 0 : index
    %212 = vector.load %arg6[%c0_184, %c0_185, %c0_186] : memref<2x64x32xbf16, #tpu.memory_space<vmem>>, vector<1x64x32xbf16>
    %213 = vector.shape_cast %212 : vector<1x64x32xbf16> to vector<64x32xbf16>
    %cst_187 = arith.constant dense<0.000000e+00> : vector<16x32xf32>
    %214 = tpu.matmul %211, %213, %cst_187 {dimension_numbers = #tpu.dot_dimension_numbers<[1], [0], [0], [1], [0, 0, 1, 1], [], []>} : vector<16x64xbf16>, vector<64x32xbf16>, vector<16x32xf32> -> vector<16x32xf32>
    %215 = vector.broadcast %5 : vector<1x32xf32> to vector<16x32xf32>
    %216 = arith.addf %214, %215 : vector<16x32xf32>
    %217 = arith.addf %202, %216 : vector<16x32xf32>
    %cst_188 = arith.constant dense<0.000000e+00> : vector<16xf32>
    %218 = vector.multi_reduction <add>, %217, %cst_188 [1] : vector<16x32xf32> to vector<16xf32>
    %219 = vector.shape_cast %218 : vector<16xf32> to vector<16x1xf32>
    %cst_189 = arith.constant 3.200000e+01 : f32
    %220 = vector.broadcast %cst_189 : f32 to vector<16x1xf32>
    %221 = arith.divf %219, %220 : vector<16x1xf32>
    %222 = vector.broadcast %221 : vector<16x1xf32> to vector<16x32xf32>
    %223 = arith.subf %217, %222 : vector<16x32xf32>
    %224 = arith.mulf %223, %223 : vector<16x32xf32>
    %cst_190 = arith.constant dense<0.000000e+00> : vector<16xf32>
    %225 = vector.multi_reduction <add>, %224, %cst_190 [1] : vector<16x32xf32> to vector<16xf32>
    %226 = vector.shape_cast %225 : vector<16xf32> to vector<16x1xf32>
    %cst_191 = arith.constant 3.200000e+01 : f32
    %227 = vector.broadcast %cst_191 : f32 to vector<16x1xf32>
    %228 = arith.divf %226, %227 : vector<16x1xf32>
    %cst_192 = arith.constant 9.99999974E-6 : f32
    %229 = vector.broadcast %cst_192 : f32 to vector<16x1xf32>
    %230 = arith.addf %228, %229 : vector<16x1xf32>
    %231 = math.rsqrt %230 : vector<16x1xf32>
    %232 = vector.broadcast %231 : vector<16x1xf32> to vector<16x32xf32>
    %233 = arith.mulf %223, %232 : vector<16x32xf32>
    %234 = vector.broadcast %8 : vector<1x32xf32> to vector<16x32xf32>
    %235 = arith.mulf %233, %234 : vector<16x32xf32>
    %236 = vector.broadcast %9 : vector<1x32xf32> to vector<16x32xf32>
    %237 = arith.addf %235, %236 : vector<16x32xf32>
    %c1_193 = arith.constant 1 : index
    %c0_194 = arith.constant 0 : index
    %c0_195 = arith.constant 0 : index
    %238 = vector.load %arg7[%c1_193, %c0_194, %c0_195] : memref<2x6x32xf32, #tpu.memory_space<vmem>>, vector<1x6x32xf32>
    %239 = vector.shape_cast %238 : vector<1x6x32xf32> to vector<6x32xf32>
    %240 = vector.extract_strided_slice %239 {offsets = [0, 0], sizes = [1, 32], strides = [1, 1]} : vector<6x32xf32> to vector<1x32xf32>
    %241 = vector.extract_strided_slice %239 {offsets = [1, 0], sizes = [1, 32], strides = [1, 1]} : vector<6x32xf32> to vector<1x32xf32>
    %242 = vector.extract_strided_slice %239 {offsets = [2, 0], sizes = [1, 32], strides = [1, 1]} : vector<6x32xf32> to vector<1x32xf32>
    %243 = vector.extract_strided_slice %239 {offsets = [3, 0], sizes = [1, 32], strides = [1, 1]} : vector<6x32xf32> to vector<1x32xf32>
    %244 = vector.extract_strided_slice %239 {offsets = [4, 0], sizes = [1, 32], strides = [1, 1]} : vector<6x32xf32> to vector<1x32xf32>
    %245 = vector.extract_strided_slice %239 {offsets = [5, 0], sizes = [1, 32], strides = [1, 1]} : vector<6x32xf32> to vector<1x32xf32>
    %c1_196 = arith.constant 1 : index
    %c0_197 = arith.constant 0 : index
    %c0_198 = arith.constant 0 : index
    %246 = vector.load %arg8[%c1_196, %c0_197, %c0_198] : memref<2x1x64xf32, #tpu.memory_space<vmem>>, vector<1x1x64xf32>
    %247 = vector.shape_cast %246 : vector<1x1x64xf32> to vector<1x64xf32>
    %248 = arith.addf %237, %1 : vector<16x32xf32>
    %249 = arith.truncf %248 : vector<16x32xf32> to vector<16x32xbf16>
    %250 = arith.truncf %237 : vector<16x32xf32> to vector<16x32xbf16>
    %cst_199 = arith.constant 0.000000e+00 : f32
    %251 = vector.broadcast %cst_199 : f32 to vector<2x8x8xf32>
    %cst_200 = arith.constant 0.000000e+00 : f32
    %252 = vector.broadcast %cst_200 : f32 to vector<16x32xf32>
    %c1_201 = arith.constant 1 : index
    %c0_202 = arith.constant 0 : index
    %c0_203 = arith.constant 0 : index
    %c0_204 = arith.constant 0 : index
    %c0_205 = arith.constant 0 : index
    %253 = vector.load %arg2[%c1_201, %c0_202, %c0_203, %c0_204, %c0_205] : memref<2x3x4x32x8xbf16, #tpu.memory_space<vmem>>, vector<1x1x1x32x8xbf16>
    %254 = vector.shape_cast %253 : vector<1x1x1x32x8xbf16> to vector<32x8xbf16>
    %cst_206 = arith.constant dense<0.000000e+00> : vector<16x8xf32>
    %255 = tpu.matmul %249, %254, %cst_206 {dimension_numbers = #tpu.dot_dimension_numbers<[1], [0], [0], [1], [0, 0, 1, 1], [], []>} : vector<16x32xbf16>, vector<32x8xbf16>, vector<16x8xf32> -> vector<16x8xf32>
    %c1_207 = arith.constant 1 : index
    %c0_208 = arith.constant 0 : index
    %c0_209 = arith.constant 0 : index
    %c0_210 = arith.constant 0 : index
    %c0_211 = arith.constant 0 : index
    %256 = vector.load %arg3[%c1_207, %c0_208, %c0_209, %c0_210, %c0_211] : memref<2x3x4x1x8xf32, #tpu.memory_space<vmem>>, vector<1x1x1x1x8xf32>
    %257 = vector.shape_cast %256 : vector<1x1x1x1x8xf32> to vector<1x8xf32>
    %258 = vector.broadcast %257 : vector<1x8xf32> to vector<16x8xf32>
    %259 = arith.addf %255, %258 : vector<16x8xf32>
    %c1_212 = arith.constant 1 : index
    %c1_213 = arith.constant 1 : index
    %c0_214 = arith.constant 0 : index
    %c0_215 = arith.constant 0 : index
    %c0_216 = arith.constant 0 : index
    %260 = vector.load %arg2[%c1_212, %c1_213, %c0_214, %c0_215, %c0_216] : memref<2x3x4x32x8xbf16, #tpu.memory_space<vmem>>, vector<1x1x1x32x8xbf16>
    %261 = vector.shape_cast %260 : vector<1x1x1x32x8xbf16> to vector<32x8xbf16>
    %cst_217 = arith.constant dense<0.000000e+00> : vector<16x8xf32>
    %262 = tpu.matmul %249, %261, %cst_217 {dimension_numbers = #tpu.dot_dimension_numbers<[1], [0], [0], [1], [0, 0, 1, 1], [], []>} : vector<16x32xbf16>, vector<32x8xbf16>, vector<16x8xf32> -> vector<16x8xf32>
    %c1_218 = arith.constant 1 : index
    %c1_219 = arith.constant 1 : index
    %c0_220 = arith.constant 0 : index
    %c0_221 = arith.constant 0 : index
    %c0_222 = arith.constant 0 : index
    %263 = vector.load %arg3[%c1_218, %c1_219, %c0_220, %c0_221, %c0_222] : memref<2x3x4x1x8xf32, #tpu.memory_space<vmem>>, vector<1x1x1x1x8xf32>
    %264 = vector.shape_cast %263 : vector<1x1x1x1x8xf32> to vector<1x8xf32>
    %265 = vector.broadcast %264 : vector<1x8xf32> to vector<16x8xf32>
    %266 = arith.addf %262, %265 : vector<16x8xf32>
    %c1_223 = arith.constant 1 : index
    %c2_224 = arith.constant 2 : index
    %c0_225 = arith.constant 0 : index
    %c0_226 = arith.constant 0 : index
    %c0_227 = arith.constant 0 : index
    %267 = vector.load %arg2[%c1_223, %c2_224, %c0_225, %c0_226, %c0_227] : memref<2x3x4x32x8xbf16, #tpu.memory_space<vmem>>, vector<1x1x1x32x8xbf16>
    %268 = vector.shape_cast %267 : vector<1x1x1x32x8xbf16> to vector<32x8xbf16>
    %cst_228 = arith.constant dense<0.000000e+00> : vector<16x8xf32>
    %269 = tpu.matmul %250, %268, %cst_228 {dimension_numbers = #tpu.dot_dimension_numbers<[1], [0], [0], [1], [0, 0, 1, 1], [], []>} : vector<16x32xbf16>, vector<32x8xbf16>, vector<16x8xf32> -> vector<16x8xf32>
    %c1_229 = arith.constant 1 : index
    %c2_230 = arith.constant 2 : index
    %c0_231 = arith.constant 0 : index
    %c0_232 = arith.constant 0 : index
    %c0_233 = arith.constant 0 : index
    %270 = vector.load %arg3[%c1_229, %c2_230, %c0_231, %c0_232, %c0_233] : memref<2x3x4x1x8xf32, #tpu.memory_space<vmem>>, vector<1x1x1x1x8xf32>
    %271 = vector.shape_cast %270 : vector<1x1x1x1x8xf32> to vector<1x8xf32>
    %272 = vector.broadcast %271 : vector<1x8xf32> to vector<16x8xf32>
    %273 = arith.addf %269, %272 : vector<16x8xf32>
    %274 = vector.shape_cast %259 : vector<16x8xf32> to vector<2x8x8xf32>
    %275 = vector.shape_cast %266 : vector<16x8xf32> to vector<2x8x8xf32>
    %276 = vector.shape_cast %273 : vector<16x8xf32> to vector<2x8x8xf32>
    "tpu.trace_start"() <{level = 10 : i32, message = "bqd,bkd->bqk"}> : () -> ()
    %cst_234 = arith.constant dense<0.000000e+00> : vector<2x8x8xf32>
    %277 = tpu.matmul %274, %275, %cst_234 {dimension_numbers = #tpu.dot_dimension_numbers<[2], [2], [1], [1], [0, 0, 0, 1, 1, 1], [0], [0]>} : vector<2x8x8xf32>, vector<2x8x8xf32>, vector<2x8x8xf32> -> vector<2x8x8xf32>
    "tpu.trace_stop"() : () -> ()
    %cst_235 = arith.constant dense<0xFF800000> : vector<2x8xf32>
    %278 = vector.multi_reduction <maximumf>, %277, %cst_235 [2] : vector<2x8x8xf32> to vector<2x8xf32>
    %279 = vector.shape_cast %278 : vector<2x8xf32> to vector<2x8x1xf32>
    %280 = vector.broadcast %279 : vector<2x8x1xf32> to vector<2x8x8xf32>
    %281 = arith.subf %277, %280 : vector<2x8x8xf32>
    %282 = math.exp %281 : vector<2x8x8xf32>
    %cst_236 = arith.constant dense<0.000000e+00> : vector<2x8xf32>
    %283 = vector.multi_reduction <add>, %282, %cst_236 [2] : vector<2x8x8xf32> to vector<2x8xf32>
    %284 = vector.shape_cast %283 : vector<2x8xf32> to vector<2x8x1xf32>
    %285 = vector.broadcast %284 : vector<2x8x1xf32> to vector<2x8x8xf32>
    %286 = arith.divf %282, %285 : vector<2x8x8xf32>
    %287 = arith.addf %251, %286 : vector<2x8x8xf32>
    "tpu.trace_start"() <{level = 10 : i32, message = "bqk,bkd->bqd"}> : () -> ()
    %cst_237 = arith.constant dense<0.000000e+00> : vector<2x8x8xf32>
    %288 = tpu.matmul %286, %276, %cst_237 {dimension_numbers = #tpu.dot_dimension_numbers<[2], [1], [1], [2], [0, 0, 0, 1, 1, 2], [0], [0]>} : vector<2x8x8xf32>, vector<2x8x8xf32>, vector<2x8x8xf32> -> vector<2x8x8xf32>
    "tpu.trace_stop"() : () -> ()
    %289 = vector.shape_cast %288 : vector<2x8x8xf32> to vector<16x8xf32>
    %290 = arith.truncf %289 : vector<16x8xf32> to vector<16x8xbf16>
    %c1_238 = arith.constant 1 : index
    %c0_239 = arith.constant 0 : index
    %c0_240 = arith.constant 0 : index
    %c0_241 = arith.constant 0 : index
    %291 = vector.load %arg4[%c1_238, %c0_239, %c0_240, %c0_241] : memref<2x4x8x32xbf16, #tpu.memory_space<vmem>>, vector<1x1x8x32xbf16>
    %292 = vector.shape_cast %291 : vector<1x1x8x32xbf16> to vector<8x32xbf16>
    %cst_242 = arith.constant dense<0.000000e+00> : vector<16x32xf32>
    %293 = tpu.matmul %290, %292, %cst_242 {dimension_numbers = #tpu.dot_dimension_numbers<[1], [0], [0], [1], [0, 0, 1, 1], [], []>} : vector<16x8xbf16>, vector<8x32xbf16>, vector<16x32xf32> -> vector<16x32xf32>
    %294 = arith.addf %252, %293 : vector<16x32xf32>
    %c1_243 = arith.constant 1 : index
    %c0_244 = arith.constant 0 : index
    %c1_245 = arith.constant 1 : index
    %c0_246 = arith.constant 0 : index
    %c0_247 = arith.constant 0 : index
    %295 = vector.load %arg2[%c1_243, %c0_244, %c1_245, %c0_246, %c0_247] : memref<2x3x4x32x8xbf16, #tpu.memory_space<vmem>>, vector<1x1x1x32x8xbf16>
    %296 = vector.shape_cast %295 : vector<1x1x1x32x8xbf16> to vector<32x8xbf16>
    %cst_248 = arith.constant dense<0.000000e+00> : vector<16x8xf32>
    %297 = tpu.matmul %249, %296, %cst_248 {dimension_numbers = #tpu.dot_dimension_numbers<[1], [0], [0], [1], [0, 0, 1, 1], [], []>} : vector<16x32xbf16>, vector<32x8xbf16>, vector<16x8xf32> -> vector<16x8xf32>
    %c1_249 = arith.constant 1 : index
    %c0_250 = arith.constant 0 : index
    %c1_251 = arith.constant 1 : index
    %c0_252 = arith.constant 0 : index
    %c0_253 = arith.constant 0 : index
    %298 = vector.load %arg3[%c1_249, %c0_250, %c1_251, %c0_252, %c0_253] : memref<2x3x4x1x8xf32, #tpu.memory_space<vmem>>, vector<1x1x1x1x8xf32>
    %299 = vector.shape_cast %298 : vector<1x1x1x1x8xf32> to vector<1x8xf32>
    %300 = vector.broadcast %299 : vector<1x8xf32> to vector<16x8xf32>
    %301 = arith.addf %297, %300 : vector<16x8xf32>
    %c1_254 = arith.constant 1 : index
    %c1_255 = arith.constant 1 : index
    %c1_256 = arith.constant 1 : index
    %c0_257 = arith.constant 0 : index
    %c0_258 = arith.constant 0 : index
    %302 = vector.load %arg2[%c1_254, %c1_255, %c1_256, %c0_257, %c0_258] : memref<2x3x4x32x8xbf16, #tpu.memory_space<vmem>>, vector<1x1x1x32x8xbf16>
    %303 = vector.shape_cast %302 : vector<1x1x1x32x8xbf16> to vector<32x8xbf16>
    %cst_259 = arith.constant dense<0.000000e+00> : vector<16x8xf32>
    %304 = tpu.matmul %249, %303, %cst_259 {dimension_numbers = #tpu.dot_dimension_numbers<[1], [0], [0], [1], [0, 0, 1, 1], [], []>} : vector<16x32xbf16>, vector<32x8xbf16>, vector<16x8xf32> -> vector<16x8xf32>
    %c1_260 = arith.constant 1 : index
    %c1_261 = arith.constant 1 : index
    %c1_262 = arith.constant 1 : index
    %c0_263 = arith.constant 0 : index
    %c0_264 = arith.constant 0 : index
    %305 = vector.load %arg3[%c1_260, %c1_261, %c1_262, %c0_263, %c0_264] : memref<2x3x4x1x8xf32, #tpu.memory_space<vmem>>, vector<1x1x1x1x8xf32>
    %306 = vector.shape_cast %305 : vector<1x1x1x1x8xf32> to vector<1x8xf32>
    %307 = vector.broadcast %306 : vector<1x8xf32> to vector<16x8xf32>
    %308 = arith.addf %304, %307 : vector<16x8xf32>
    %c1_265 = arith.constant 1 : index
    %c2_266 = arith.constant 2 : index
    %c1_267 = arith.constant 1 : index
    %c0_268 = arith.constant 0 : index
    %c0_269 = arith.constant 0 : index
    %309 = vector.load %arg2[%c1_265, %c2_266, %c1_267, %c0_268, %c0_269] : memref<2x3x4x32x8xbf16, #tpu.memory_space<vmem>>, vector<1x1x1x32x8xbf16>
    %310 = vector.shape_cast %309 : vector<1x1x1x32x8xbf16> to vector<32x8xbf16>
    %cst_270 = arith.constant dense<0.000000e+00> : vector<16x8xf32>
    %311 = tpu.matmul %250, %310, %cst_270 {dimension_numbers = #tpu.dot_dimension_numbers<[1], [0], [0], [1], [0, 0, 1, 1], [], []>} : vector<16x32xbf16>, vector<32x8xbf16>, vector<16x8xf32> -> vector<16x8xf32>
    %c1_271 = arith.constant 1 : index
    %c2_272 = arith.constant 2 : index
    %c1_273 = arith.constant 1 : index
    %c0_274 = arith.constant 0 : index
    %c0_275 = arith.constant 0 : index
    %312 = vector.load %arg3[%c1_271, %c2_272, %c1_273, %c0_274, %c0_275] : memref<2x3x4x1x8xf32, #tpu.memory_space<vmem>>, vector<1x1x1x1x8xf32>
    %313 = vector.shape_cast %312 : vector<1x1x1x1x8xf32> to vector<1x8xf32>
    %314 = vector.broadcast %313 : vector<1x8xf32> to vector<16x8xf32>
    %315 = arith.addf %311, %314 : vector<16x8xf32>
    %316 = vector.shape_cast %301 : vector<16x8xf32> to vector<2x8x8xf32>
    %317 = vector.shape_cast %308 : vector<16x8xf32> to vector<2x8x8xf32>
    %318 = vector.shape_cast %315 : vector<16x8xf32> to vector<2x8x8xf32>
    "tpu.trace_start"() <{level = 10 : i32, message = "bqd,bkd->bqk"}> : () -> ()
    %cst_276 = arith.constant dense<0.000000e+00> : vector<2x8x8xf32>
    %319 = tpu.matmul %316, %317, %cst_276 {dimension_numbers = #tpu.dot_dimension_numbers<[2], [2], [1], [1], [0, 0, 0, 1, 1, 1], [0], [0]>} : vector<2x8x8xf32>, vector<2x8x8xf32>, vector<2x8x8xf32> -> vector<2x8x8xf32>
    "tpu.trace_stop"() : () -> ()
    %cst_277 = arith.constant dense<0xFF800000> : vector<2x8xf32>
    %320 = vector.multi_reduction <maximumf>, %319, %cst_277 [2] : vector<2x8x8xf32> to vector<2x8xf32>
    %321 = vector.shape_cast %320 : vector<2x8xf32> to vector<2x8x1xf32>
    %322 = vector.broadcast %321 : vector<2x8x1xf32> to vector<2x8x8xf32>
    %323 = arith.subf %319, %322 : vector<2x8x8xf32>
    %324 = math.exp %323 : vector<2x8x8xf32>
    %cst_278 = arith.constant dense<0.000000e+00> : vector<2x8xf32>
    %325 = vector.multi_reduction <add>, %324, %cst_278 [2] : vector<2x8x8xf32> to vector<2x8xf32>
    %326 = vector.shape_cast %325 : vector<2x8xf32> to vector<2x8x1xf32>
    %327 = vector.broadcast %326 : vector<2x8x1xf32> to vector<2x8x8xf32>
    %328 = arith.divf %324, %327 : vector<2x8x8xf32>
    %329 = arith.addf %287, %328 : vector<2x8x8xf32>
    "tpu.trace_start"() <{level = 10 : i32, message = "bqk,bkd->bqd"}> : () -> ()
    %cst_279 = arith.constant dense<0.000000e+00> : vector<2x8x8xf32>
    %330 = tpu.matmul %328, %318, %cst_279 {dimension_numbers = #tpu.dot_dimension_numbers<[2], [1], [1], [2], [0, 0, 0, 1, 1, 2], [0], [0]>} : vector<2x8x8xf32>, vector<2x8x8xf32>, vector<2x8x8xf32> -> vector<2x8x8xf32>
    "tpu.trace_stop"() : () -> ()
    %331 = vector.shape_cast %330 : vector<2x8x8xf32> to vector<16x8xf32>
    %332 = arith.truncf %331 : vector<16x8xf32> to vector<16x8xbf16>
    %c1_280 = arith.constant 1 : index
    %c1_281 = arith.constant 1 : index
    %c0_282 = arith.constant 0 : index
    %c0_283 = arith.constant 0 : index
    %333 = vector.load %arg4[%c1_280, %c1_281, %c0_282, %c0_283] : memref<2x4x8x32xbf16, #tpu.memory_space<vmem>>, vector<1x1x8x32xbf16>
    %334 = vector.shape_cast %333 : vector<1x1x8x32xbf16> to vector<8x32xbf16>
    %cst_284 = arith.constant dense<0.000000e+00> : vector<16x32xf32>
    %335 = tpu.matmul %332, %334, %cst_284 {dimension_numbers = #tpu.dot_dimension_numbers<[1], [0], [0], [1], [0, 0, 1, 1], [], []>} : vector<16x8xbf16>, vector<8x32xbf16>, vector<16x32xf32> -> vector<16x32xf32>
    %336 = arith.addf %294, %335 : vector<16x32xf32>
    %c1_285 = arith.constant 1 : index
    %c0_286 = arith.constant 0 : index
    %c2_287 = arith.constant 2 : index
    %c0_288 = arith.constant 0 : index
    %c0_289 = arith.constant 0 : index
    %337 = vector.load %arg2[%c1_285, %c0_286, %c2_287, %c0_288, %c0_289] : memref<2x3x4x32x8xbf16, #tpu.memory_space<vmem>>, vector<1x1x1x32x8xbf16>
    %338 = vector.shape_cast %337 : vector<1x1x1x32x8xbf16> to vector<32x8xbf16>
    %cst_290 = arith.constant dense<0.000000e+00> : vector<16x8xf32>
    %339 = tpu.matmul %249, %338, %cst_290 {dimension_numbers = #tpu.dot_dimension_numbers<[1], [0], [0], [1], [0, 0, 1, 1], [], []>} : vector<16x32xbf16>, vector<32x8xbf16>, vector<16x8xf32> -> vector<16x8xf32>
    %c1_291 = arith.constant 1 : index
    %c0_292 = arith.constant 0 : index
    %c2_293 = arith.constant 2 : index
    %c0_294 = arith.constant 0 : index
    %c0_295 = arith.constant 0 : index
    %340 = vector.load %arg3[%c1_291, %c0_292, %c2_293, %c0_294, %c0_295] : memref<2x3x4x1x8xf32, #tpu.memory_space<vmem>>, vector<1x1x1x1x8xf32>
    %341 = vector.shape_cast %340 : vector<1x1x1x1x8xf32> to vector<1x8xf32>
    %342 = vector.broadcast %341 : vector<1x8xf32> to vector<16x8xf32>
    %343 = arith.addf %339, %342 : vector<16x8xf32>
    %c1_296 = arith.constant 1 : index
    %c1_297 = arith.constant 1 : index
    %c2_298 = arith.constant 2 : index
    %c0_299 = arith.constant 0 : index
    %c0_300 = arith.constant 0 : index
    %344 = vector.load %arg2[%c1_296, %c1_297, %c2_298, %c0_299, %c0_300] : memref<2x3x4x32x8xbf16, #tpu.memory_space<vmem>>, vector<1x1x1x32x8xbf16>
    %345 = vector.shape_cast %344 : vector<1x1x1x32x8xbf16> to vector<32x8xbf16>
    %cst_301 = arith.constant dense<0.000000e+00> : vector<16x8xf32>
    %346 = tpu.matmul %249, %345, %cst_301 {dimension_numbers = #tpu.dot_dimension_numbers<[1], [0], [0], [1], [0, 0, 1, 1], [], []>} : vector<16x32xbf16>, vector<32x8xbf16>, vector<16x8xf32> -> vector<16x8xf32>
    %c1_302 = arith.constant 1 : index
    %c1_303 = arith.constant 1 : index
    %c2_304 = arith.constant 2 : index
    %c0_305 = arith.constant 0 : index
    %c0_306 = arith.constant 0 : index
    %347 = vector.load %arg3[%c1_302, %c1_303, %c2_304, %c0_305, %c0_306] : memref<2x3x4x1x8xf32, #tpu.memory_space<vmem>>, vector<1x1x1x1x8xf32>
    %348 = vector.shape_cast %347 : vector<1x1x1x1x8xf32> to vector<1x8xf32>
    %349 = vector.broadcast %348 : vector<1x8xf32> to vector<16x8xf32>
    %350 = arith.addf %346, %349 : vector<16x8xf32>
    %c1_307 = arith.constant 1 : index
    %c2_308 = arith.constant 2 : index
    %c2_309 = arith.constant 2 : index
    %c0_310 = arith.constant 0 : index
    %c0_311 = arith.constant 0 : index
    %351 = vector.load %arg2[%c1_307, %c2_308, %c2_309, %c0_310, %c0_311] : memref<2x3x4x32x8xbf16, #tpu.memory_space<vmem>>, vector<1x1x1x32x8xbf16>
    %352 = vector.shape_cast %351 : vector<1x1x1x32x8xbf16> to vector<32x8xbf16>
    %cst_312 = arith.constant dense<0.000000e+00> : vector<16x8xf32>
    %353 = tpu.matmul %250, %352, %cst_312 {dimension_numbers = #tpu.dot_dimension_numbers<[1], [0], [0], [1], [0, 0, 1, 1], [], []>} : vector<16x32xbf16>, vector<32x8xbf16>, vector<16x8xf32> -> vector<16x8xf32>
    %c1_313 = arith.constant 1 : index
    %c2_314 = arith.constant 2 : index
    %c2_315 = arith.constant 2 : index
    %c0_316 = arith.constant 0 : index
    %c0_317 = arith.constant 0 : index
    %354 = vector.load %arg3[%c1_313, %c2_314, %c2_315, %c0_316, %c0_317] : memref<2x3x4x1x8xf32, #tpu.memory_space<vmem>>, vector<1x1x1x1x8xf32>
    %355 = vector.shape_cast %354 : vector<1x1x1x1x8xf32> to vector<1x8xf32>
    %356 = vector.broadcast %355 : vector<1x8xf32> to vector<16x8xf32>
    %357 = arith.addf %353, %356 : vector<16x8xf32>
    %358 = vector.shape_cast %343 : vector<16x8xf32> to vector<2x8x8xf32>
    %359 = vector.shape_cast %350 : vector<16x8xf32> to vector<2x8x8xf32>
    %360 = vector.shape_cast %357 : vector<16x8xf32> to vector<2x8x8xf32>
    "tpu.trace_start"() <{level = 10 : i32, message = "bqd,bkd->bqk"}> : () -> ()
    %cst_318 = arith.constant dense<0.000000e+00> : vector<2x8x8xf32>
    %361 = tpu.matmul %358, %359, %cst_318 {dimension_numbers = #tpu.dot_dimension_numbers<[2], [2], [1], [1], [0, 0, 0, 1, 1, 1], [0], [0]>} : vector<2x8x8xf32>, vector<2x8x8xf32>, vector<2x8x8xf32> -> vector<2x8x8xf32>
    "tpu.trace_stop"() : () -> ()
    %cst_319 = arith.constant dense<0xFF800000> : vector<2x8xf32>
    %362 = vector.multi_reduction <maximumf>, %361, %cst_319 [2] : vector<2x8x8xf32> to vector<2x8xf32>
    %363 = vector.shape_cast %362 : vector<2x8xf32> to vector<2x8x1xf32>
    %364 = vector.broadcast %363 : vector<2x8x1xf32> to vector<2x8x8xf32>
    %365 = arith.subf %361, %364 : vector<2x8x8xf32>
    %366 = math.exp %365 : vector<2x8x8xf32>
    %cst_320 = arith.constant dense<0.000000e+00> : vector<2x8xf32>
    %367 = vector.multi_reduction <add>, %366, %cst_320 [2] : vector<2x8x8xf32> to vector<2x8xf32>
    %368 = vector.shape_cast %367 : vector<2x8xf32> to vector<2x8x1xf32>
    %369 = vector.broadcast %368 : vector<2x8x1xf32> to vector<2x8x8xf32>
    %370 = arith.divf %366, %369 : vector<2x8x8xf32>
    %371 = arith.addf %329, %370 : vector<2x8x8xf32>
    "tpu.trace_start"() <{level = 10 : i32, message = "bqk,bkd->bqd"}> : () -> ()
    %cst_321 = arith.constant dense<0.000000e+00> : vector<2x8x8xf32>
    %372 = tpu.matmul %370, %360, %cst_321 {dimension_numbers = #tpu.dot_dimension_numbers<[2], [1], [1], [2], [0, 0, 0, 1, 1, 2], [0], [0]>} : vector<2x8x8xf32>, vector<2x8x8xf32>, vector<2x8x8xf32> -> vector<2x8x8xf32>
    "tpu.trace_stop"() : () -> ()
    %373 = vector.shape_cast %372 : vector<2x8x8xf32> to vector<16x8xf32>
    %374 = arith.truncf %373 : vector<16x8xf32> to vector<16x8xbf16>
    %c1_322 = arith.constant 1 : index
    %c2_323 = arith.constant 2 : index
    %c0_324 = arith.constant 0 : index
    %c0_325 = arith.constant 0 : index
    %375 = vector.load %arg4[%c1_322, %c2_323, %c0_324, %c0_325] : memref<2x4x8x32xbf16, #tpu.memory_space<vmem>>, vector<1x1x8x32xbf16>
    %376 = vector.shape_cast %375 : vector<1x1x8x32xbf16> to vector<8x32xbf16>
    %cst_326 = arith.constant dense<0.000000e+00> : vector<16x32xf32>
    %377 = tpu.matmul %374, %376, %cst_326 {dimension_numbers = #tpu.dot_dimension_numbers<[1], [0], [0], [1], [0, 0, 1, 1], [], []>} : vector<16x8xbf16>, vector<8x32xbf16>, vector<16x32xf32> -> vector<16x32xf32>
    %378 = arith.addf %336, %377 : vector<16x32xf32>
    %c1_327 = arith.constant 1 : index
    %c0_328 = arith.constant 0 : index
    %c3_329 = arith.constant 3 : index
    %c0_330 = arith.constant 0 : index
    %c0_331 = arith.constant 0 : index
    %379 = vector.load %arg2[%c1_327, %c0_328, %c3_329, %c0_330, %c0_331] : memref<2x3x4x32x8xbf16, #tpu.memory_space<vmem>>, vector<1x1x1x32x8xbf16>
    %380 = vector.shape_cast %379 : vector<1x1x1x32x8xbf16> to vector<32x8xbf16>
    %cst_332 = arith.constant dense<0.000000e+00> : vector<16x8xf32>
    %381 = tpu.matmul %249, %380, %cst_332 {dimension_numbers = #tpu.dot_dimension_numbers<[1], [0], [0], [1], [0, 0, 1, 1], [], []>} : vector<16x32xbf16>, vector<32x8xbf16>, vector<16x8xf32> -> vector<16x8xf32>
    %c1_333 = arith.constant 1 : index
    %c0_334 = arith.constant 0 : index
    %c3_335 = arith.constant 3 : index
    %c0_336 = arith.constant 0 : index
    %c0_337 = arith.constant 0 : index
    %382 = vector.load %arg3[%c1_333, %c0_334, %c3_335, %c0_336, %c0_337] : memref<2x3x4x1x8xf32, #tpu.memory_space<vmem>>, vector<1x1x1x1x8xf32>
    %383 = vector.shape_cast %382 : vector<1x1x1x1x8xf32> to vector<1x8xf32>
    %384 = vector.broadcast %383 : vector<1x8xf32> to vector<16x8xf32>
    %385 = arith.addf %381, %384 : vector<16x8xf32>
    %c1_338 = arith.constant 1 : index
    %c1_339 = arith.constant 1 : index
    %c3_340 = arith.constant 3 : index
    %c0_341 = arith.constant 0 : index
    %c0_342 = arith.constant 0 : index
    %386 = vector.load %arg2[%c1_338, %c1_339, %c3_340, %c0_341, %c0_342] : memref<2x3x4x32x8xbf16, #tpu.memory_space<vmem>>, vector<1x1x1x32x8xbf16>
    %387 = vector.shape_cast %386 : vector<1x1x1x32x8xbf16> to vector<32x8xbf16>
    %cst_343 = arith.constant dense<0.000000e+00> : vector<16x8xf32>
    %388 = tpu.matmul %249, %387, %cst_343 {dimension_numbers = #tpu.dot_dimension_numbers<[1], [0], [0], [1], [0, 0, 1, 1], [], []>} : vector<16x32xbf16>, vector<32x8xbf16>, vector<16x8xf32> -> vector<16x8xf32>
    %c1_344 = arith.constant 1 : index
    %c1_345 = arith.constant 1 : index
    %c3_346 = arith.constant 3 : index
    %c0_347 = arith.constant 0 : index
    %c0_348 = arith.constant 0 : index
    %389 = vector.load %arg3[%c1_344, %c1_345, %c3_346, %c0_347, %c0_348] : memref<2x3x4x1x8xf32, #tpu.memory_space<vmem>>, vector<1x1x1x1x8xf32>
    %390 = vector.shape_cast %389 : vector<1x1x1x1x8xf32> to vector<1x8xf32>
    %391 = vector.broadcast %390 : vector<1x8xf32> to vector<16x8xf32>
    %392 = arith.addf %388, %391 : vector<16x8xf32>
    %c1_349 = arith.constant 1 : index
    %c2_350 = arith.constant 2 : index
    %c3_351 = arith.constant 3 : index
    %c0_352 = arith.constant 0 : index
    %c0_353 = arith.constant 0 : index
    %393 = vector.load %arg2[%c1_349, %c2_350, %c3_351, %c0_352, %c0_353] : memref<2x3x4x32x8xbf16, #tpu.memory_space<vmem>>, vector<1x1x1x32x8xbf16>
    %394 = vector.shape_cast %393 : vector<1x1x1x32x8xbf16> to vector<32x8xbf16>
    %cst_354 = arith.constant dense<0.000000e+00> : vector<16x8xf32>
    %395 = tpu.matmul %250, %394, %cst_354 {dimension_numbers = #tpu.dot_dimension_numbers<[1], [0], [0], [1], [0, 0, 1, 1], [], []>} : vector<16x32xbf16>, vector<32x8xbf16>, vector<16x8xf32> -> vector<16x8xf32>
    %c1_355 = arith.constant 1 : index
    %c2_356 = arith.constant 2 : index
    %c3_357 = arith.constant 3 : index
    %c0_358 = arith.constant 0 : index
    %c0_359 = arith.constant 0 : index
    %396 = vector.load %arg3[%c1_355, %c2_356, %c3_357, %c0_358, %c0_359] : memref<2x3x4x1x8xf32, #tpu.memory_space<vmem>>, vector<1x1x1x1x8xf32>
    %397 = vector.shape_cast %396 : vector<1x1x1x1x8xf32> to vector<1x8xf32>
    %398 = vector.broadcast %397 : vector<1x8xf32> to vector<16x8xf32>
    %399 = arith.addf %395, %398 : vector<16x8xf32>
    %400 = vector.shape_cast %385 : vector<16x8xf32> to vector<2x8x8xf32>
    %401 = vector.shape_cast %392 : vector<16x8xf32> to vector<2x8x8xf32>
    %402 = vector.shape_cast %399 : vector<16x8xf32> to vector<2x8x8xf32>
    "tpu.trace_start"() <{level = 10 : i32, message = "bqd,bkd->bqk"}> : () -> ()
    %cst_360 = arith.constant dense<0.000000e+00> : vector<2x8x8xf32>
    %403 = tpu.matmul %400, %401, %cst_360 {dimension_numbers = #tpu.dot_dimension_numbers<[2], [2], [1], [1], [0, 0, 0, 1, 1, 1], [0], [0]>} : vector<2x8x8xf32>, vector<2x8x8xf32>, vector<2x8x8xf32> -> vector<2x8x8xf32>
    "tpu.trace_stop"() : () -> ()
    %cst_361 = arith.constant dense<0xFF800000> : vector<2x8xf32>
    %404 = vector.multi_reduction <maximumf>, %403, %cst_361 [2] : vector<2x8x8xf32> to vector<2x8xf32>
    %405 = vector.shape_cast %404 : vector<2x8xf32> to vector<2x8x1xf32>
    %406 = vector.broadcast %405 : vector<2x8x1xf32> to vector<2x8x8xf32>
    %407 = arith.subf %403, %406 : vector<2x8x8xf32>
    %408 = math.exp %407 : vector<2x8x8xf32>
    %cst_362 = arith.constant dense<0.000000e+00> : vector<2x8xf32>
    %409 = vector.multi_reduction <add>, %408, %cst_362 [2] : vector<2x8x8xf32> to vector<2x8xf32>
    %410 = vector.shape_cast %409 : vector<2x8xf32> to vector<2x8x1xf32>
    %411 = vector.broadcast %410 : vector<2x8x1xf32> to vector<2x8x8xf32>
    %412 = arith.divf %408, %411 : vector<2x8x8xf32>
    %413 = arith.addf %371, %412 : vector<2x8x8xf32>
    "tpu.trace_start"() <{level = 10 : i32, message = "bqk,bkd->bqd"}> : () -> ()
    %cst_363 = arith.constant dense<0.000000e+00> : vector<2x8x8xf32>
    %414 = tpu.matmul %412, %402, %cst_363 {dimension_numbers = #tpu.dot_dimension_numbers<[2], [1], [1], [2], [0, 0, 0, 1, 1, 2], [0], [0]>} : vector<2x8x8xf32>, vector<2x8x8xf32>, vector<2x8x8xf32> -> vector<2x8x8xf32>
    "tpu.trace_stop"() : () -> ()
    %415 = vector.shape_cast %414 : vector<2x8x8xf32> to vector<16x8xf32>
    %416 = arith.truncf %415 : vector<16x8xf32> to vector<16x8xbf16>
    %c1_364 = arith.constant 1 : index
    %c3_365 = arith.constant 3 : index
    %c0_366 = arith.constant 0 : index
    %c0_367 = arith.constant 0 : index
    %417 = vector.load %arg4[%c1_364, %c3_365, %c0_366, %c0_367] : memref<2x4x8x32xbf16, #tpu.memory_space<vmem>>, vector<1x1x8x32xbf16>
    %418 = vector.shape_cast %417 : vector<1x1x8x32xbf16> to vector<8x32xbf16>
    %cst_368 = arith.constant dense<0.000000e+00> : vector<16x32xf32>
    %419 = tpu.matmul %416, %418, %cst_368 {dimension_numbers = #tpu.dot_dimension_numbers<[1], [0], [0], [1], [0, 0, 1, 1], [], []>} : vector<16x8xbf16>, vector<8x32xbf16>, vector<16x32xf32> -> vector<16x32xf32>
    %420 = arith.addf %378, %419 : vector<16x32xf32>
    %421 = vector.broadcast %240 : vector<1x32xf32> to vector<16x32xf32>
    %422 = arith.addf %420, %421 : vector<16x32xf32>
    %423 = arith.addf %237, %422 : vector<16x32xf32>
    %cst_369 = arith.constant dense<0.000000e+00> : vector<16xf32>
    %424 = vector.multi_reduction <add>, %423, %cst_369 [1] : vector<16x32xf32> to vector<16xf32>
    %425 = vector.shape_cast %424 : vector<16xf32> to vector<16x1xf32>
    %cst_370 = arith.constant 3.200000e+01 : f32
    %426 = vector.broadcast %cst_370 : f32 to vector<16x1xf32>
    %427 = arith.divf %425, %426 : vector<16x1xf32>
    %428 = vector.broadcast %427 : vector<16x1xf32> to vector<16x32xf32>
    %429 = arith.subf %423, %428 : vector<16x32xf32>
    %430 = arith.mulf %429, %429 : vector<16x32xf32>
    %cst_371 = arith.constant dense<0.000000e+00> : vector<16xf32>
    %431 = vector.multi_reduction <add>, %430, %cst_371 [1] : vector<16x32xf32> to vector<16xf32>
    %432 = vector.shape_cast %431 : vector<16xf32> to vector<16x1xf32>
    %cst_372 = arith.constant 3.200000e+01 : f32
    %433 = vector.broadcast %cst_372 : f32 to vector<16x1xf32>
    %434 = arith.divf %432, %433 : vector<16x1xf32>
    %cst_373 = arith.constant 9.99999974E-6 : f32
    %435 = vector.broadcast %cst_373 : f32 to vector<16x1xf32>
    %436 = arith.addf %434, %435 : vector<16x1xf32>
    %437 = math.rsqrt %436 : vector<16x1xf32>
    %438 = vector.broadcast %437 : vector<16x1xf32> to vector<16x32xf32>
    %439 = arith.mulf %429, %438 : vector<16x32xf32>
    %440 = vector.broadcast %242 : vector<1x32xf32> to vector<16x32xf32>
    %441 = arith.mulf %439, %440 : vector<16x32xf32>
    %442 = vector.broadcast %243 : vector<1x32xf32> to vector<16x32xf32>
    %443 = arith.addf %441, %442 : vector<16x32xf32>
    %444 = arith.truncf %443 : vector<16x32xf32> to vector<16x32xbf16>
    %c1_374 = arith.constant 1 : index
    %c0_375 = arith.constant 0 : index
    %c0_376 = arith.constant 0 : index
    %445 = vector.load %arg5[%c1_374, %c0_375, %c0_376] : memref<2x32x64xbf16, #tpu.memory_space<vmem>>, vector<1x32x64xbf16>
    %446 = vector.shape_cast %445 : vector<1x32x64xbf16> to vector<32x64xbf16>
    %cst_377 = arith.constant dense<0.000000e+00> : vector<16x64xf32>
    %447 = tpu.matmul %444, %446, %cst_377 {dimension_numbers = #tpu.dot_dimension_numbers<[1], [0], [0], [1], [0, 0, 1, 1], [], []>} : vector<16x32xbf16>, vector<32x64xbf16>, vector<16x64xf32> -> vector<16x64xf32>
    %448 = vector.broadcast %247 : vector<1x64xf32> to vector<16x64xf32>
    %449 = arith.addf %447, %448 : vector<16x64xf32>
    %cst_378 = arith.constant 0.000000e+00 : f32
    %450 = vector.broadcast %cst_378 : f32 to vector<16x64xf32>
    %451 = arith.maximumf %449, %450 : vector<16x64xf32>
    %452 = arith.truncf %451 : vector<16x64xf32> to vector<16x64xbf16>
    %c1_379 = arith.constant 1 : index
    %c0_380 = arith.constant 0 : index
    %c0_381 = arith.constant 0 : index
    %453 = vector.load %arg6[%c1_379, %c0_380, %c0_381] : memref<2x64x32xbf16, #tpu.memory_space<vmem>>, vector<1x64x32xbf16>
    %454 = vector.shape_cast %453 : vector<1x64x32xbf16> to vector<64x32xbf16>
    %cst_382 = arith.constant dense<0.000000e+00> : vector<16x32xf32>
    %455 = tpu.matmul %452, %454, %cst_382 {dimension_numbers = #tpu.dot_dimension_numbers<[1], [0], [0], [1], [0, 0, 1, 1], [], []>} : vector<16x64xbf16>, vector<64x32xbf16>, vector<16x32xf32> -> vector<16x32xf32>
    %456 = vector.broadcast %241 : vector<1x32xf32> to vector<16x32xf32>
    %457 = arith.addf %455, %456 : vector<16x32xf32>
    %458 = arith.addf %443, %457 : vector<16x32xf32>
    %cst_383 = arith.constant dense<0.000000e+00> : vector<16xf32>
    %459 = vector.multi_reduction <add>, %458, %cst_383 [1] : vector<16x32xf32> to vector<16xf32>
    %460 = vector.shape_cast %459 : vector<16xf32> to vector<16x1xf32>
    %cst_384 = arith.constant 3.200000e+01 : f32
    %461 = vector.broadcast %cst_384 : f32 to vector<16x1xf32>
    %462 = arith.divf %460, %461 : vector<16x1xf32>
    %463 = vector.broadcast %462 : vector<16x1xf32> to vector<16x32xf32>
    %464 = arith.subf %458, %463 : vector<16x32xf32>
    %465 = arith.mulf %464, %464 : vector<16x32xf32>
    %cst_385 = arith.constant dense<0.000000e+00> : vector<16xf32>
    %466 = vector.multi_reduction <add>, %465, %cst_385 [1] : vector<16x32xf32> to vector<16xf32>
    %467 = vector.shape_cast %466 : vector<16xf32> to vector<16x1xf32>
    %cst_386 = arith.constant 3.200000e+01 : f32
    %468 = vector.broadcast %cst_386 : f32 to vector<16x1xf32>
    %469 = arith.divf %467, %468 : vector<16x1xf32>
    %cst_387 = arith.constant 9.99999974E-6 : f32
    %470 = vector.broadcast %cst_387 : f32 to vector<16x1xf32>
    %471 = arith.addf %469, %470 : vector<16x1xf32>
    %472 = math.rsqrt %471 : vector<16x1xf32>
    %473 = vector.broadcast %472 : vector<16x1xf32> to vector<16x32xf32>
    %474 = arith.mulf %464, %473 : vector<16x32xf32>
    %475 = vector.broadcast %244 : vector<1x32xf32> to vector<16x32xf32>
    %476 = arith.mulf %474, %475 : vector<16x32xf32>
    %477 = vector.broadcast %245 : vector<1x32xf32> to vector<16x32xf32>
    %478 = arith.addf %476, %477 : vector<16x32xf32>
    %cst_388 = arith.constant 2.500000e-01 : f32
    %479 = vector.broadcast %cst_388 : f32 to vector<2x8x8xf32>
    %480 = arith.mulf %413, %479 : vector<2x8x8xf32>
    %c0_389 = arith.constant 0 : index
    %c0_390 = arith.constant 0 : index
    %481 = vector.load %arg9[%c0_389, %c0_390] : memref<16x32xf32, #tpu.memory_space<vmem>>, vector<16x32xf32>
    tpu.vector_store %arg9[%c0_389, %c0_390], %478 {strides = array<i32>} : memref<16x32xf32, #tpu.memory_space<vmem>>, vector<16x32xf32>,
    %c0_391 = arith.constant 0 : index
    %c0_392 = arith.constant 0 : index
    %c0_393 = arith.constant 0 : index
    %482 = vector.load %arg10[%c0_391, %c0_392, %c0_393] : memref<2x8x8xf32, #tpu.memory_space<vmem>>, vector<2x8x8xf32>
    tpu.vector_store %arg10[%c0_391, %c0_392, %c0_393], %480 {strides = array<i32>} : memref<2x8x8xf32, #tpu.memory_space<vmem>>, vector<2x8x8xf32>,
    return
  }
}

</mosaic_0001>

<llo_original>
// kernel: tpu_custom_call.1
$region0: #{tpu_custom_call.1}
  #allocation0 [shape = 'u32[]', space=smem, size = 0x4, offset = 0x4, fixed_abs, tag = 'smem constant byte address 0x4 - core index']
  #allocation1 [shape = 'u32[144,128]{1,0:T(1,128)}', space=vmem, size = 0x12000, scoped, tag = 'internal scratch']
  %s0 = inlined_call_operand.vmem [shape: f32[16,32], index: 0, kind: input, shape index: {}]
  %s1 = inlined_call_operand.vmem [shape: f32[16,32], index: 1, kind: input, shape index: {}]
  %s2 = inlined_call_operand.vmem [shape: bf16[2,3,4,32,8], index: 2, kind: input, shape index: {}]
  %s3 = inlined_call_operand.vmem [shape: f32[2,3,4,1,8], index: 3, kind: input, shape index: {}]
  %s4 = inlined_call_operand.vmem [shape: bf16[2,4,8,32], index: 4, kind: input, shape index: {}]
  %s5 = inlined_call_operand.vmem [shape: bf16[2,32,64], index: 5, kind: input, shape index: {}]
  %s6 = inlined_call_operand.vmem [shape: bf16[2,64,32], index: 6, kind: input, shape index: {}]
  %s7 = inlined_call_operand.vmem [shape: f32[2,6,32], index: 7, kind: input, shape index: {}]
  %s8 = inlined_call_operand.vmem [shape: f32[2,1,64], index: 8, kind: input, shape index: {}]
  %s9 = inlined_call_operand.hbm [shape: f32[16,32], index: 9, kind: output, shape index: {0}]
  %s10 = inlined_call_operand.hbm [shape: f32[2,8,8], index: 10, kind: output, shape index: {1}]
  %11 = xla_tuple %s9, %s10
  %s12 = sld [smem:[#allocation0]]
  $region54: #{tpu_custom_call.1} parent=0
    _
  %s14 = ssub.s32 1, %s12
  %s15 = scalar_select 0, %s14, %s12
  $region1: #{tpu_custom_call.1} parent=0
    #allocation2 [shape = 'u8[8192]{0}', space=vmem, size = 0x2000, scoped, tag = 'output window, operand 0, single buffered']
    #allocation3 [shape = 's32[1]{0}', space=sflag, size = 0x4, scoped, tag = 'scoped memory for tpu_custom_call.1']
    #allocation4 [shape = 'u8[8192]{0}', space=vmem, size = 0x2000, scoped, tag = 'output window, operand 1, single buffered']
    #allocation5 [shape = 's32[1]{0}', space=sflag, size = 0x4, scoped, tag = 'scoped memory for tpu_custom_call.1']
    %16 = vsyncpa [#allocation3], 0
    %17 = vsyncpa [#allocation5], 0
    // Predicated region
    $region2: #{tpu_custom_call.1} parent=1 // pred_check
      _
    $region3: #{tpu_custom_call.1} parent=1 // pred_check_branch
      %19 = sbr.rel (0) target = $region5
    $region4: #{tpu_custom_call.1} parent=1 // pred_region
      _
    $region5: #{tpu_custom_call.1} parent=1 // pred_fallthru
      _
    // Predicated region
    $region6: #{tpu_custom_call.1} parent=1 // pred_check
      _
    $region7: #{tpu_custom_call.1} parent=1 // pred_check_branch
      %21 = sbr.rel (0) target = $region9
    $region8: #{tpu_custom_call.1} parent=1 // pred_region
      _
    $region9: #{tpu_custom_call.1} parent=1 // pred_fallthru
      _
    // Predicated region
    $region10: #{tpu_custom_call.1} parent=1 // pred_check
      _
    $region11: #{tpu_custom_call.1} parent=1 // pred_check_branch
      %23 = sbr.rel (0) target = $region13
    $region12: #{tpu_custom_call.1} parent=1 // pred_region
      _
    $region13: #{tpu_custom_call.1} parent=1 // pred_fallthru
      _
    // Predicated region
    $region14: #{tpu_custom_call.1} parent=1 // pred_check
      _
    $region15: #{tpu_custom_call.1} parent=1 // pred_check_branch
      %25 = sbr.rel (0) target = $region17
    $region16: #{tpu_custom_call.1} parent=1 // pred_region
      _
    $region17: #{tpu_custom_call.1} parent=1 // pred_fallthru
      _
    // Predicated region
    $region18: #{tpu_custom_call.1} parent=1 // pred_check
      _
    $region19: #{tpu_custom_call.1} parent=1 // pred_check_branch
      %27 = sbr.rel (0) target = $region21
    $region20: #{tpu_custom_call.1} parent=1 // pred_region
      _
    $region21: #{tpu_custom_call.1} parent=1 // pred_fallthru
      _
    // Predicated region
    $region22: #{tpu_custom_call.1} parent=1 // pred_check
      _
    $region23: #{tpu_custom_call.1} parent=1 // pred_check_branch
      %29 = sbr.rel (0) target = $region25
    $region24: #{tpu_custom_call.1} parent=1 // pred_region
      _
    $region25: #{tpu_custom_call.1} parent=1 // pred_fallthru
      _
    // Predicated region
    $region26: #{tpu_custom_call.1} parent=1 // pred_check
      _
    $region27: #{tpu_custom_call.1} parent=1 // pred_check_branch
      %31 = sbr.rel (0) target = $region29
    $region28: #{tpu_custom_call.1} parent=1 // pred_region
      _
    $region29: #{tpu_custom_call.1} parent=1 // pred_fallthru
      _
    // Predicated region
    $region30: #{tpu_custom_call.1} parent=1 // pred_check
      _
    $region31: #{tpu_custom_call.1} parent=1 // pred_check_branch
      %33 = sbr.rel (0) target = $region33
    $region32: #{tpu_custom_call.1} parent=1 // pred_region
      _
    $region33: #{tpu_custom_call.1} parent=1 // pred_fallthru
      _
    // Predicated region
    $region34: #{tpu_custom_call.1} parent=1 // pred_check
      _
    $region35: #{tpu_custom_call.1} parent=1 // pred_check_branch
      %35 = sbr.rel (0) target = $region37
    $region36: #{tpu_custom_call.1} parent=1 // pred_region
      _
    $region37: #{tpu_custom_call.1} parent=1 // pred_fallthru
      _
    %v37 = vld [vmem:[%s0] sm:$0xff]
    %v38 = vld [vmem:[%s0 + $0x8] sm:$0xff]
    %v39 = vld [vmem:[%s1] sm:$0xff]
    %v40 = vld [vmem:[%s1 + $0x8] sm:$0xff]
    %v41 = vld [vmem:[%s7] sm:$0x3f]
    %v42 = vld [vmem:[%s8] sm:$0x1]
    %v43 = vadd.f32 %v37, %v39
    %v44 = vadd.f32 %v38, %v40
    %v45 = vpack.c.bf16 %v44, %v43
    %v46 = vpack.c.bf16 %v38, %v37
    %v47 = vld [vmem:[%s2] sm:$0xf]
    %v48 = vld [vmem:[%s2 + $0x4] sm:$0xf]
    %v49 = vld [vmem:[%s2 + $0x8] sm:$0xf]
    %v50 = vld [vmem:[%s2 + $0xc] sm:$0xf]
    %v51 = vld [vmem:[%s3] sm:$0x1]
    %v53 = vlaneseq
    %v54 = vshrl.u32 %v53, 7
    %v55 = vsub.s32 0, %v54
    %v56 = vrot.slane %v51, %v55
    %v62 = vunpack.c.l.b16 %v47
    %v63 = vunpack.c.l.b16 %v48
    %v64 = vunpack.c.l.b16 %v49
    %v65 = vunpack.c.l.b16 %v50
    %v66 = vpack.c.b16 %v63, %v62
    %v67 = vpack.c.b16 %v65, %v64
    %vm70 = vcmask 261120
    %v72 = vsel %vm70, %v45, 0
    %74 = vmatprep.subr.bf16.mxu0 0
    %75 = vmatpush1.bf16.msra.mxu0 %v66
    %76 = vmatprep.subr.bf16.mxu0 0
    %77 = vmatpush1.bf16.msra.mxu0 %v67
    %78 = vmatprep.subr.bf16.mxu0 0
    %79 = vmatpush1.bf16.msra.mxu0 0
    %80 = vmatprep.subr.bf16.mxu0 0
    %81 = vmatpush1.bf16.msra.mxu0 0
    %82 = vmatprep.subr.bf16.mxu0 0
    %83 = vmatpush1.bf16.msra.mxu0 0
    %84 = vmatprep.subr.bf16.mxu0 0
    %85 = vmatpush1.bf16.msra.mxu0 0
    %86 = vmatprep.subr.bf16.mxu0 0
    %87 = vmatpush1.bf16.msra.mxu0 0
    %88 = vmatprep.subr.bf16.mxu0 0
    %89 = vmatpush1.bf16.msra.mxu0 0
    %90 = vmatprep.subr.bf16.mxu0 0
    %91 = vmatpush1.bf16.msra.mxu0 0
    %92 = vmatprep.subr.bf16.mxu0 0
    %93 = vmatpush1.bf16.msra.mxu0 0
    %94 = vmatprep.subr.bf16.mxu0 0
    %95 = vmatpush1.bf16.msra.mxu0 0
    %96 = vmatprep.subr.bf16.mxu0 0
    %97 = vmatpush1.bf16.msra.mxu0 0
    %98 = vmatprep.subr.bf16.mxu0 0
    %99 = vmatpush1.bf16.msra.mxu0 0
    %100 = vmatprep.subr.bf16.mxu0 0
    %101 = vmatpush1.bf16.msra.mxu0 0
    %102 = vmatprep.subr.bf16.mxu0 0
    %103 = vmatpush1.bf16.msra.mxu0 0
    %104 = vmatprep.subr.bf16.mxu0 0
    %105 = vmatpush1.bf16.msra.mxu0 0
    %106 = vmatprep.mubr.bf16.mxu0 0
    %107 = vmatmul.mubr.bf16.gmra.mrb[0].mxu0 %v72
    %v108 = vpop.f32.mrb[0].mxu0
    %v109 = vadd.f32 %v56, %v108
    %v110 = vpop.f32.mrb[0].mxu0
    %v111 = vpop.f32.mrb[0].mxu0
    %v112 = vadd.f32 %v56, %v111
    %v113 = vpop.f32.mrb[0].mxu0
    %114 = vdwg.mxu0
    %s115 = scalar_lea.vmem %s2, 64
    %v116 = vld [vmem:[%s115] sm:$0xf]
    %v117 = vld [vmem:[%s115 + $0x4] sm:$0xf]
    %v118 = vld [vmem:[%s115 + $0x8] sm:$0xf]
    %v119 = vld [vmem:[%s115 + $0xc] sm:$0xf]
    %s120 = scalar_lea.vmem %s3, 4
    %v121 = vld [vmem:[%s120] sm:$0x1]
    %v123 = vlaneseq
    %v124 = vshrl.u32 %v123, 7
    %v125 = vsub.s32 0, %v124
    %v126 = vrot.slane %v121, %v125
    %v132 = vunpack.c.l.b16 %v116
    %v133 = vunpack.c.l.b16 %v117
    %v134 = vunpack.c.l.b16 %v118
    %v135 = vunpack.c.l.b16 %v119
    %v136 = vpack.c.b16 %v133, %v132
    %v137 = vpack.c.b16 %v135, %v134
    %140 = vmatprep.subr.bf16.mxu0 0
    %141 = vmatpush1.bf16.msra.mxu0 %v136
    %142 = vmatprep.subr.bf16.mxu0 0
    %143 = vmatpush1.bf16.msra.mxu0 %v137
    %144 = vmatprep.subr.bf16.mxu0 0
    %145 = vmatpush1.bf16.msra.mxu0 0
    %146 = vmatprep.subr.bf16.mxu0 0
    %147 = vmatpush1.bf16.msra.mxu0 0
    %148 = vmatprep.subr.bf16.mxu0 0
    %149 = vmatpush1.bf16.msra.mxu0 0
    %150 = vmatprep.subr.bf16.mxu0 0
    %151 = vmatpush1.bf16.msra.mxu0 0
    %152 = vmatprep.subr.bf16.mxu0 0
    %153 = vmatpush1.bf16.msra.mxu0 0
    %154 = vmatprep.subr.bf16.mxu0 0
    %155 = vmatpush1.bf16.msra.mxu0 0
    %156 = vmatprep.subr.bf16.mxu0 0
    %157 = vmatpush1.bf16.msra.mxu0 0
    %158 = vmatprep.subr.bf16.mxu0 0
    %159 = vmatpush1.bf16.msra.mxu0 0
    %160 = vmatprep.subr.bf16.mxu0 0
    %161 = vmatpush1.bf16.msra.mxu0 0
    %162 = vmatprep.subr.bf16.mxu0 0
    %163 = vmatpush1.bf16.msra.mxu0 0
    %164 = vmatprep.subr.bf16.mxu0 0
    %165 = vmatpush1.bf16.msra.mxu0 0
    %166 = vmatprep.subr.bf16.mxu0 0
    %167 = vmatpush1.bf16.msra.mxu0 0
    %168 = vmatprep.subr.bf16.mxu0 0
    %169 = vmatpush1.bf16.msra.mxu0 0
    %170 = vmatprep.subr.bf16.mxu0 0
    %171 = vmatpush1.bf16.msra.mxu0 0
    %172 = vmatprep.mubr.bf16.mxu0 0
    %173 = vmatmul.mubr.bf16.gmra.mrb[0].mxu0 %v72
    %v174 = vpop.f32.mrb[0].mxu0
    %v175 = vadd.f32 %v126, %v174
    %v176 = vpop.f32.mrb[0].mxu0
    %v177 = vpop.f32.mrb[0].mxu0
    %v178 = vadd.f32 %v126, %v177
    %v179 = vpop.f32.mrb[0].mxu0
    %180 = vdwg.mxu0
    %s181 = scalar_lea.vmem %s2, 128
    %v182 = vld [vmem:[%s181] sm:$0xf]
    %v183 = vld [vmem:[%s181 + $0x4] sm:$0xf]
    %v184 = vld [vmem:[%s181 + $0x8] sm:$0xf]
    %v185 = vld [vmem:[%s181 + $0xc] sm:$0xf]
    %s186 = scalar_lea.vmem %s3, 8
    %v187 = vld [vmem:[%s186] sm:$0x1]
    %v189 = vlaneseq
    %v190 = vshrl.u32 %v189, 7
    %v191 = vsub.s32 0, %v190
    %v192 = vrot.slane %v187, %v191
    %v198 = vunpack.c.l.b16 %v182
    %v199 = vunpack.c.l.b16 %v183
    %v200 = vunpack.c.l.b16 %v184
    %v201 = vunpack.c.l.b16 %v185
    %v202 = vpack.c.b16 %v199, %v198
    %v203 = vpack.c.b16 %v201, %v200
    %v207 = vsel %vm70, %v46, 0
    %209 = vmatprep.subr.bf16.mxu0 0
    %210 = vmatpush1.bf16.msra.mxu0 %v202
    %211 = vmatprep.subr.bf16.mxu0 0
    %212 = vmatpush1.bf16.msra.mxu0 %v203
    %213 = vmatprep.subr.bf16.mxu0 0
    %214 = vmatpush1.bf16.msra.mxu0 0
    %215 = vmatprep.subr.bf16.mxu0 0
    %216 = vmatpush1.bf16.msra.mxu0 0
    %217 = vmatprep.subr.bf16.mxu0 0
    %218 = vmatpush1.bf16.msra.mxu0 0
    %219 = vmatprep.subr.bf16.mxu0 0
    %220 = vmatpush1.bf16.msra.mxu0 0
    %221 = vmatprep.subr.bf16.mxu0 0
    %222 = vmatpush1.bf16.msra.mxu0 0
    %223 = vmatprep.subr.bf16.mxu0 0
    %224 = vmatpush1.bf16.msra.mxu0 0
    %225 = vmatprep.subr.bf16.mxu0 0
    %226 = vmatpush1.bf16.msra.mxu0 0
    %227 = vmatprep.subr.bf16.mxu0 0
    %228 = vmatpush1.bf16.msra.mxu0 0
    %229 = vmatprep.subr.bf16.mxu0 0
    %230 = vmatpush1.bf16.msra.mxu0 0
    %231 = vmatprep.subr.bf16.mxu0 0
    %232 = vmatpush1.bf16.msra.mxu0 0
    %233 = vmatprep.subr.bf16.mxu0 0
    %234 = vmatpush1.bf16.msra.mxu0 0
    %235 = vmatprep.subr.bf16.mxu0 0
    %236 = vmatpush1.bf16.msra.mxu0 0
    %237 = vmatprep.subr.bf16.mxu0 0
    %238 = vmatpush1.bf16.msra.mxu0 0
    %239 = vmatprep.subr.bf16.mxu0 0
    %240 = vmatpush1.bf16.msra.mxu0 0
    %241 = vmatprep.mubr.bf16.mxu0 0
    %242 = vmatmul.mubr.bf16.gmra.mrb[0].mxu0 %v207
    %v243 = vpop.f32.mrb[0].mxu0
    %v244 = vadd.f32 %v192, %v243
    %v245 = vpop.f32.mrb[0].mxu0
    %v246 = vpop.f32.mrb[0].mxu0
    %v247 = vadd.f32 %v192, %v246
    %v248 = vpop.f32.mrb[0].mxu0
    %249 = vdwg.mxu0
    %vm250 = vcmask 64512
    %v252 = vsel %vm250, %v109, 0
    %v255 = vsel %vm250, %v175, 0
    %257 = vmatprep.subr.mxu0 0.0
    %258 = vmatpush1.xpose.msra.mxu0 %v255
    %259 = vmatprep.subr.mxu0 0.0
    %260 = vmatpush1.xpose.msra.mxu0 0.0
    %261 = vmatprep.subr.mxu0 0.0
    %262 = vmatpush1.xpose.msra.mxu0 0.0
    %263 = vmatprep.subr.mxu0 0.0
    %264 = vmatpush1.xpose.msra.mxu0 0.0
    %265 = vmatprep.subr.mxu0 0.0
    %266 = vmatpush1.xpose.msra.mxu0 0.0
    %267 = vmatprep.subr.mxu0 0.0
    %268 = vmatpush1.xpose.msra.mxu0 0.0
    %269 = vmatprep.subr.mxu0 0.0
    %270 = vmatpush1.xpose.msra.mxu0 0.0
    %271 = vmatprep.subr.mxu0 0.0
    %272 = vmatpush1.xpose.msra.mxu0 0.0
    %273 = vmatprep.subr.mxu0 0.0
    %274 = vmatpush1.xpose.msra.mxu0 0.0
    %275 = vmatprep.subr.mxu0 0.0
    %276 = vmatpush1.xpose.msra.mxu0 0.0
    %277 = vmatprep.subr.mxu0 0.0
    %278 = vmatpush1.xpose.msra.mxu0 0.0
    %279 = vmatprep.subr.mxu0 0.0
    %280 = vmatpush1.xpose.msra.mxu0 0.0
    %281 = vmatprep.subr.mxu0 0.0
    %282 = vmatpush1.xpose.msra.mxu0 0.0
    %283 = vmatprep.subr.mxu0 0.0
    %284 = vmatpush1.xpose.msra.mxu0 0.0
    %285 = vmatprep.subr.mxu0 0.0
    %286 = vmatpush1.xpose.msra.mxu0 0.0
    %287 = vmatprep.subr.mxu0 0.0
    %288 = vmatpush1.xpose.msra.mxu0 0.0
    %289 = vmatprep.subr.mxu0 0.0
    %290 = vmatpush1.xpose.msra.mxu0 0.0
    %291 = vmatprep.subr.mxu0 0.0
    %292 = vmatpush1.xpose.msra.mxu0 0.0
    %293 = vmatprep.subr.mxu0 0.0
    %294 = vmatpush1.xpose.msra.mxu0 0.0
    %295 = vmatprep.subr.mxu0 0.0
    %296 = vmatpush1.xpose.msra.mxu0 0.0
    %297 = vmatprep.subr.mxu0 0.0
    %298 = vmatpush1.xpose.msra.mxu0 0.0
    %299 = vmatprep.subr.mxu0 0.0
    %300 = vmatpush1.xpose.msra.mxu0 0.0
    %301 = vmatprep.subr.mxu0 0.0
    %302 = vmatpush1.xpose.msra.mxu0 0.0
    %303 = vmatprep.subr.mxu0 0.0
    %304 = vmatpush1.xpose.msra.mxu0 0.0
    %305 = vmatprep.subr.mxu0 0.0
    %306 = vmatpush1.xpose.msra.mxu0 0.0
    %307 = vmatprep.subr.mxu0 0.0
    %308 = vmatpush1.xpose.msra.mxu0 0.0
    %309 = vmatprep.subr.mxu0 0.0
    %310 = vmatpush1.xpose.msra.mxu0 0.0
    %311 = vmatprep.subr.mxu0 0.0
    %312 = vmatpush1.xpose.msra.mxu0 0.0
    %313 = vmatprep.subr.mxu0 0.0
    %314 = vmatpush1.xpose.msra.mxu0 0.0
    %315 = vmatprep.subr.mxu0 0.0
    %316 = vmatpush1.xpose.msra.mxu0 0.0
    %317 = vmatprep.subr.mxu0 0.0
    %318 = vmatpush1.xpose.msra.mxu0 0.0
    %319 = vmatprep.subr.mxu0 0.0
    %320 = vmatpush1.xpose.msra.mxu0 0.0
    %321 = vmatprep.mubr.f32.mxu0 0.0
    %322 = vmatmul.mubr.f32.gmra.mrb[0].mxu0 %v252
    %v323 = vpop.f32.mrb[0].mxu0
    %v324 = vadd.f32 0.0, %v323
    %v325 = vpop.f32.mrb[0].mxu0
    %326 = vdwg.mxu0
    %v328 = vsel %vm250, %v112, 0
    %v331 = vsel %vm250, %v178, 0
    %333 = vmatprep.subr.mxu0 0.0
    %334 = vmatpush1.xpose.msra.mxu0 %v331
    %335 = vmatprep.subr.mxu0 0.0
    %336 = vmatpush1.xpose.msra.mxu0 0.0
    %337 = vmatprep.subr.mxu0 0.0
    %338 = vmatpush1.xpose.msra.mxu0 0.0
    %339 = vmatprep.subr.mxu0 0.0
    %340 = vmatpush1.xpose.msra.mxu0 0.0
    %341 = vmatprep.subr.mxu0 0.0
    %342 = vmatpush1.xpose.msra.mxu0 0.0
    %343 = vmatprep.subr.mxu0 0.0
    %344 = vmatpush1.xpose.msra.mxu0 0.0
    %345 = vmatprep.subr.mxu0 0.0
    %346 = vmatpush1.xpose.msra.mxu0 0.0
    %347 = vmatprep.subr.mxu0 0.0
    %348 = vmatpush1.xpose.msra.mxu0 0.0
    %349 = vmatprep.subr.mxu0 0.0
    %350 = vmatpush1.xpose.msra.mxu0 0.0
    %351 = vmatprep.subr.mxu0 0.0
    %352 = vmatpush1.xpose.msra.mxu0 0.0
    %353 = vmatprep.subr.mxu0 0.0
    %354 = vmatpush1.xpose.msra.mxu0 0.0
    %355 = vmatprep.subr.mxu0 0.0
    %356 = vmatpush1.xpose.msra.mxu0 0.0
    %357 = vmatprep.subr.mxu0 0.0
    %358 = vmatpush1.xpose.msra.mxu0 0.0
    %359 = vmatprep.subr.mxu0 0.0
    %360 = vmatpush1.xpose.msra.mxu0 0.0
    %361 = vmatprep.subr.mxu0 0.0
    %362 = vmatpush1.xpose.msra.mxu0 0.0
    %363 = vmatprep.subr.mxu0 0.0
    %364 = vmatpush1.xpose.msra.mxu0 0.0
    %365 = vmatprep.subr.mxu0 0.0
    %366 = vmatpush1.xpose.msra.mxu0 0.0
    %367 = vmatprep.subr.mxu0 0.0
    %368 = vmatpush1.xpose.msra.mxu0 0.0
    %369 = vmatprep.subr.mxu0 0.0
    %370 = vmatpush1.xpose.msra.mxu0 0.0
    %371 = vmatprep.subr.mxu0 0.0
    %372 = vmatpush1.xpose.msra.mxu0 0.0
    %373 = vmatprep.subr.mxu0 0.0
    %374 = vmatpush1.xpose.msra.mxu0 0.0
    %375 = vmatprep.subr.mxu0 0.0
    %376 = vmatpush1.xpose.msra.mxu0 0.0
    %377 = vmatprep.subr.mxu0 0.0
    %378 = vmatpush1.xpose.msra.mxu0 0.0
    %379 = vmatprep.subr.mxu0 0.0
    %380 = vmatpush1.xpose.msra.mxu0 0.0
    %381 = vmatprep.subr.mxu0 0.0
    %382 = vmatpush1.xpose.msra.mxu0 0.0
    %383 = vmatprep.subr.mxu0 0.0
    %384 = vmatpush1.xpose.msra.mxu0 0.0
    %385 = vmatprep.subr.mxu0 0.0
    %386 = vmatpush1.xpose.msra.mxu0 0.0
    %387 = vmatprep.subr.mxu0 0.0
    %388 = vmatpush1.xpose.msra.mxu0 0.0
    %389 = vmatprep.subr.mxu0 0.0
    %390 = vmatpush1.xpose.msra.mxu0 0.0
    %391 = vmatprep.subr.mxu0 0.0
    %392 = vmatpush1.xpose.msra.mxu0 0.0
    %393 = vmatprep.subr.mxu0 0.0
    %394 = vmatpush1.xpose.msra.mxu0 0.0
    %395 = vmatprep.subr.mxu0 0.0
    %396 = vmatpush1.xpose.msra.mxu0 0.0
    %397 = vmatprep.mubr.f32.mxu0 0.0
    %398 = vmatmul.mubr.f32.gmra.mrb[0].mxu0 %v328
    %v399 = vpop.f32.mrb[0].mxu0
    %v400 = vadd.f32 0.0, %v399
    %v401 = vpop.f32.mrb[0].mxu0
    %402 = vdwg.mxu0
    %v403 = vsel %vm250, %v324, -inf
    %404 = vmax.xlane.f32.xlu0 %v403
    %v405 = vpop.xlane.xlu0 %404
    %v406 = vsel %vm250, %v400, -inf
    %407 = vmax.xlane.f32.xlu0 %v406
    %v408 = vpop.xlane.xlu0 %407
    %v409 = vsub.f32 %v324, %v405
    %v410 = vsub.f32 %v400, %v408
    %v411 = vmul.f32 %v409, 1.442695
    %v412 = vpow.pop %v411
    %v413 = vmul.f32 %v410, 1.442695
    %v414 = vpow.pop %v413
    %v415 = vsel %vm250, %v412, 0.0
    %416 = vadd.xlane.f32.xlu0 %v415
    %v417 = vpop.xlane.xlu0 %416
    %v418 = vsel %vm250, %v414, 0.0
    %419 = vadd.xlane.f32.xlu0 %v418
    %v420 = vpop.xlane.xlu0 %419
    %v421 = vrcp.pop %v417
    %v422 = vmul.f32 %v412, %v421
    %v423 = vrcp.pop %v420
    %v424 = vmul.f32 %v414, %v423
    %v426 = vsel %vm250, %v422, 0
    %428 = vmatprep.subr.mxu0 0.0
    %429 = vmatpush1.msra.mxu0 %v244
    %430 = vmatprep.subr.mxu0 0.0
    %431 = vmatpush1.msra.mxu0 0.0
    %432 = vmatprep.subr.mxu0 0.0
    %433 = vmatpush1.msra.mxu0 0.0
    %434 = vmatprep.subr.mxu0 0.0
    %435 = vmatpush1.msra.mxu0 0.0
    %436 = vmatprep.subr.mxu0 0.0
    %437 = vmatpush1.msra.mxu0 0.0
    %438 = vmatprep.subr.mxu0 0.0
    %439 = vmatpush1.msra.mxu0 0.0
    %440 = vmatprep.subr.mxu0 0.0
    %441 = vmatpush1.msra.mxu0 0.0
    %442 = vmatprep.subr.mxu0 0.0
    %443 = vmatpush1.msra.mxu0 0.0
    %444 = vmatprep.subr.mxu0 0.0
    %445 = vmatpush1.msra.mxu0 0.0
    %446 = vmatprep.subr.mxu0 0.0
    %447 = vmatpush1.msra.mxu0 0.0
    %448 = vmatprep.subr.mxu0 0.0
    %449 = vmatpush1.msra.mxu0 0.0
    %450 = vmatprep.subr.mxu0 0.0
    %451 = vmatpush1.msra.mxu0 0.0
    %452 = vmatprep.subr.mxu0 0.0
    %453 = vmatpush1.msra.mxu0 0.0
    %454 = vmatprep.subr.mxu0 0.0
    %455 = vmatpush1.msra.mxu0 0.0
    %456 = vmatprep.subr.mxu0 0.0
    %457 = vmatpush1.msra.mxu0 0.0
    %458 = vmatprep.subr.mxu0 0.0
    %459 = vmatpush1.msra.mxu0 0.0
    %460 = vmatprep.subr.mxu0 0.0
    %461 = vmatpush1.msra.mxu0 0.0
    %462 = vmatprep.subr.mxu0 0.0
    %463 = vmatpush1.msra.mxu0 0.0
    %464 = vmatprep.subr.mxu0 0.0
    %465 = vmatpush1.msra.mxu0 0.0
    %466 = vmatprep.subr.mxu0 0.0
    %467 = vmatpush1.msra.mxu0 0.0
    %468 = vmatprep.subr.mxu0 0.0
    %469 = vmatpush1.msra.mxu0 0.0
    %470 = vmatprep.subr.mxu0 0.0
    %471 = vmatpush1.msra.mxu0 0.0
    %472 = vmatprep.subr.mxu0 0.0
    %473 = vmatpush1.msra.mxu0 0.0
    %474 = vmatprep.subr.mxu0 0.0
    %475 = vmatpush1.msra.mxu0 0.0
    %476 = vmatprep.subr.mxu0 0.0
    %477 = vmatpush1.msra.mxu0 0.0
    %478 = vmatprep.subr.mxu0 0.0
    %479 = vmatpush1.msra.mxu0 0.0
    %480 = vmatprep.subr.mxu0 0.0
    %481 = vmatpush1.msra.mxu0 0.0
    %482 = vmatprep.subr.mxu0 0.0
    %483 = vmatpush1.msra.mxu0 0.0
    %484 = vmatprep.subr.mxu0 0.0
    %485 = vmatpush1.msra.mxu0 0.0
    %486 = vmatprep.subr.mxu0 0.0
    %487 = vmatpush1.msra.mxu0 0.0
    %488 = vmatprep.subr.mxu0 0.0
    %489 = vmatpush1.msra.mxu0 0.0
    %490 = vmatprep.subr.mxu0 0.0
    %491 = vmatpush1.msra.mxu0 0.0
    %492 = vmatprep.mubr.f32.mxu0 0.0
    %493 = vmatmul.mubr.f32.gmra.mrb[0].mxu0 %v426
    %v494 = vpop.f32.mrb[0].mxu0
    %v495 = vadd.f32 0.0, %v494
    %v496 = vpop.f32.mrb[0].mxu0
    %497 = vdwg.mxu0
    %v499 = vsel %vm250, %v424, 0
    %501 = vmatprep.subr.mxu0 0.0
    %502 = vmatpush1.msra.mxu0 %v247
    %503 = vmatprep.subr.mxu0 0.0
    %504 = vmatpush1.msra.mxu0 0.0
    %505 = vmatprep.subr.mxu0 0.0
    %506 = vmatpush1.msra.mxu0 0.0
    %507 = vmatprep.subr.mxu0 0.0
    %508 = vmatpush1.msra.mxu0 0.0
    %509 = vmatprep.subr.mxu0 0.0
    %510 = vmatpush1.msra.mxu0 0.0
    %511 = vmatprep.subr.mxu0 0.0
    %512 = vmatpush1.msra.mxu0 0.0
    %513 = vmatprep.subr.mxu0 0.0
    %514 = vmatpush1.msra.mxu0 0.0
    %515 = vmatprep.subr.mxu0 0.0
    %516 = vmatpush1.msra.mxu0 0.0
    %517 = vmatprep.subr.mxu0 0.0
    %518 = vmatpush1.msra.mxu0 0.0
    %519 = vmatprep.subr.mxu0 0.0
    %520 = vmatpush1.msra.mxu0 0.0
    %521 = vmatprep.subr.mxu0 0.0
    %522 = vmatpush1.msra.mxu0 0.0
    %523 = vmatprep.subr.mxu0 0.0
    %524 = vmatpush1.msra.mxu0 0.0
    %525 = vmatprep.subr.mxu0 0.0
    %526 = vmatpush1.msra.mxu0 0.0
    %527 = vmatprep.subr.mxu0 0.0
    %528 = vmatpush1.msra.mxu0 0.0
    %529 = vmatprep.subr.mxu0 0.0
    %530 = vmatpush1.msra.mxu0 0.0
    %531 = vmatprep.subr.mxu0 0.0
    %532 = vmatpush1.msra.mxu0 0.0
    %533 = vmatprep.subr.mxu0 0.0
    %534 = vmatpush1.msra.mxu0 0.0
    %535 = vmatprep.subr.mxu0 0.0
    %536 = vmatpush1.msra.mxu0 0.0
    %537 = vmatprep.subr.mxu0 0.0
    %538 = vmatpush1.msra.mxu0 0.0
    %539 = vmatprep.subr.mxu0 0.0
    %540 = vmatpush1.msra.mxu0 0.0
    %541 = vmatprep.subr.mxu0 0.0
    %542 = vmatpush1.msra.mxu0 0.0
    %543 = vmatprep.subr.mxu0 0.0
    %544 = vmatpush1.msra.mxu0 0.0
    %545 = vmatprep.subr.mxu0 0.0
    %546 = vmatpush1.msra.mxu0 0.0
    %547 = vmatprep.subr.mxu0 0.0
    %548 = vmatpush1.msra.mxu0 0.0
    %549 = vmatprep.subr.mxu0 0.0
    %550 = vmatpush1.msra.mxu0 0.0
    %551 = vmatprep.subr.mxu0 0.0
    %552 = vmatpush1.msra.mxu0 0.0
    %553 = vmatprep.subr.mxu0 0.0
    %554 = vmatpush1.msra.mxu0 0.0
    %555 = vmatprep.subr.mxu0 0.0
    %556 = vmatpush1.msra.mxu0 0.0
    %557 = vmatprep.subr.mxu0 0.0
    %558 = vmatpush1.msra.mxu0 0.0
    %559 = vmatprep.subr.mxu0 0.0
    %560 = vmatpush1.msra.mxu0 0.0
    %561 = vmatprep.subr.mxu0 0.0
    %562 = vmatpush1.msra.mxu0 0.0
    %563 = vmatprep.subr.mxu0 0.0
    %564 = vmatpush1.msra.mxu0 0.0
    %565 = vmatprep.mubr.f32.mxu0 0.0
    %566 = vmatmul.mubr.f32.gmra.mrb[0].mxu0 %v499
    %v567 = vpop.f32.mrb[0].mxu0
    %v568 = vadd.f32 0.0, %v567
    %v569 = vpop.f32.mrb[0].mxu0
    %570 = vdwg.mxu0
    %v571 = vpack.c.bf16 %v568, %v495
    %v572 = vld [vmem:[%s4] sm:$0xf]
    %s573 = scalar_lea.vmem %s2, 16
    %v574 = vld [vmem:[%s573] sm:$0xf]
    %v575 = vld [vmem:[%s573 + $0x4] sm:$0xf]
    %v576 = vld [vmem:[%s573 + $0x8] sm:$0xf]
    %v577 = vld [vmem:[%s573 + $0xc] sm:$0xf]
    %s578 = scalar_lea.vmem %s3, 1
    %v579 = vld [vmem:[%s578] sm:$0x1]
    %v581 = vlaneseq
    %v582 = vshrl.u32 %v581, 7
    %v583 = vsub.s32 0, %v582
    %v584 = vrot.slane %v579, %v583
    %v590 = vunpack.c.l.b16 %v574
    %v591 = vunpack.c.l.b16 %v575
    %v592 = vunpack.c.l.b16 %v576
    %v593 = vunpack.c.l.b16 %v577
    %v594 = vpack.c.b16 %v591, %v590
    %v595 = vpack.c.b16 %v593, %v592
    %598 = vmatprep.subr.bf16.mxu0 0
    %599 = vmatpush1.bf16.msra.mxu0 %v594
    %600 = vmatprep.subr.bf16.mxu0 0
    %601 = vmatpush1.bf16.msra.mxu0 %v595
    %602 = vmatprep.subr.bf16.mxu0 0
    %603 = vmatpush1.bf16.msra.mxu0 0
    %604 = vmatprep.subr.bf16.mxu0 0
    %605 = vmatpush1.bf16.msra.mxu0 0
    %606 = vmatprep.subr.bf16.mxu0 0
    %607 = vmatpush1.bf16.msra.mxu0 0
    %608 = vmatprep.subr.bf16.mxu0 0
    %609 = vmatpush1.bf16.msra.mxu0 0
    %610 = vmatprep.subr.bf16.mxu0 0
    %611 = vmatpush1.bf16.msra.mxu0 0
    %612 = vmatprep.subr.bf16.mxu0 0
    %613 = vmatpush1.bf16.msra.mxu0 0
    %614 = vmatprep.subr.bf16.mxu0 0
    %615 = vmatpush1.bf16.msra.mxu0 0
    %616 = vmatprep.subr.bf16.mxu0 0
    %617 = vmatpush1.bf16.msra.mxu0 0
    %618 = vmatprep.subr.bf16.mxu0 0
    %619 = vmatpush1.bf16.msra.mxu0 0
    %620 = vmatprep.subr.bf16.mxu0 0
    %621 = vmatpush1.bf16.msra.mxu0 0
    %622 = vmatprep.subr.bf16.mxu0 0
    %623 = vmatpush1.bf16.msra.mxu0 0
    %624 = vmatprep.subr.bf16.mxu0 0
    %625 = vmatpush1.bf16.msra.mxu0 0
    %626 = vmatprep.subr.bf16.mxu0 0
    %627 = vmatpush1.bf16.msra.mxu0 0
    %628 = vmatprep.subr.bf16.mxu0 0
    %629 = vmatpush1.bf16.msra.mxu0 0
    %630 = vmatprep.mubr.bf16.mxu0 0
    %631 = vmatmul.mubr.bf16.gmra.mrb[0].mxu0 %v72
    %v632 = vpop.f32.mrb[0].mxu0
    %v633 = vadd.f32 %v584, %v632
    %v634 = vpop.f32.mrb[0].mxu0
    %v635 = vpop.f32.mrb[0].mxu0
    %v636 = vadd.f32 %v584, %v635
    %v637 = vpop.f32.mrb[0].mxu0
    %638 = vdwg.mxu0
    %s639 = scalar_lea.vmem %s2, 80
    %v640 = vld [vmem:[%s639] sm:$0xf]
    %v641 = vld [vmem:[%s639 + $0x4] sm:$0xf]
    %v642 = vld [vmem:[%s639 + $0x8] sm:$0xf]
    %v643 = vld [vmem:[%s639 + $0xc] sm:$0xf]
    %s644 = scalar_lea.vmem %s3, 5
    %v645 = vld [vmem:[%s644] sm:$0x1]
    %v647 = vlaneseq
    %v648 = vshrl.u32 %v647, 7
    %v649 = vsub.s32 0, %v648
    %v650 = vrot.slane %v645, %v649
    %v656 = vunpack.c.l.b16 %v640
    %v657 = vunpack.c.l.b16 %v641
    %v658 = vunpack.c.l.b16 %v642
    %v659 = vunpack.c.l.b16 %v643
    %v660 = vpack.c.b16 %v657, %v656
    %v661 = vpack.c.b16 %v659, %v658
    %664 = vmatprep.subr.bf16.mxu0 0
    %665 = vmatpush1.bf16.msra.mxu0 %v660
    %666 = vmatprep.subr.bf16.mxu0 0
    %667 = vmatpush1.bf16.msra.mxu0 %v661
    %668 = vmatprep.subr.bf16.mxu0 0
    %669 = vmatpush1.bf16.msra.mxu0 0
    %670 = vmatprep.subr.bf16.mxu0 0
    %671 = vmatpush1.bf16.msra.mxu0 0
    %672 = vmatprep.subr.bf16.mxu0 0
    %673 = vmatpush1.bf16.msra.mxu0 0
    %674 = vmatprep.subr.bf16.mxu0 0
    %675 = vmatpush1.bf16.msra.mxu0 0
    %676 = vmatprep.subr.bf16.mxu0 0
    %677 = vmatpush1.bf16.msra.mxu0 0
    %678 = vmatprep.subr.bf16.mxu0 0
    %679 = vmatpush1.bf16.msra.mxu0 0
    %680 = vmatprep.subr.bf16.mxu0 0
    %681 = vmatpush1.bf16.msra.mxu0 0
    %682 = vmatprep.subr.bf16.mxu0 0
    %683 = vmatpush1.bf16.msra.mxu0 0
    %684 = vmatprep.subr.bf16.mxu0 0
    %685 = vmatpush1.bf16.msra.mxu0 0
    %686 = vmatprep.subr.bf16.mxu0 0
    %687 = vmatpush1.bf16.msra.mxu0 0
    %688 = vmatprep.subr.bf16.mxu0 0
    %689 = vmatpush1.bf16.msra.mxu0 0
    %690 = vmatprep.subr.bf16.mxu0 0
    %691 = vmatpush1.bf16.msra.mxu0 0
    %692 = vmatprep.subr.bf16.mxu0 0
    %693 = vmatpush1.bf16.msra.mxu0 0
    %694 = vmatprep.subr.bf16.mxu0 0
    %695 = vmatpush1.bf16.msra.mxu0 0
    %696 = vmatprep.mubr.bf16.mxu0 0
    %697 = vmatmul.mubr.bf16.gmra.mrb[0].mxu0 %v72
    %v698 = vpop.f32.mrb[0].mxu0
    %v699 = vadd.f32 %v650, %v698
    %v700 = vpop.f32.mrb[0].mxu0
    %v701 = vpop.f32.mrb[0].mxu0
    %v702 = vadd.f32 %v650, %v701
    %v703 = vpop.f32.mrb[0].mxu0
    %704 = vdwg.mxu0
    %s705 = scalar_lea.vmem %s2, 144
    %v706 = vld [vmem:[%s705] sm:$0xf]
    %v707 = vld [vmem:[%s705 + $0x4] sm:$0xf]
    %v708 = vld [vmem:[%s705 + $0x8] sm:$0xf]
    %v709 = vld [vmem:[%s705 + $0xc] sm:$0xf]
    %s710 = scalar_lea.vmem %s3, 9
    %v711 = vld [vmem:[%s710] sm:$0x1]
    %v713 = vlaneseq
    %v714 = vshrl.u32 %v713, 7
    %v715 = vsub.s32 0, %v714
    %v716 = vrot.slane %v711, %v715
    %v722 = vunpack.c.l.b16 %v706
    %v723 = vunpack.c.l.b16 %v707
    %v724 = vunpack.c.l.b16 %v708
    %v725 = vunpack.c.l.b16 %v709
    %v726 = vpack.c.b16 %v723, %v722
    %v727 = vpack.c.b16 %v725, %v724
    %730 = vmatprep.subr.bf16.mxu0 0
    %731 = vmatpush1.bf16.msra.mxu0 %v726
    %732 = vmatprep.subr.bf16.mxu0 0
    %733 = vmatpush1.bf16.msra.mxu0 %v727
    %734 = vmatprep.subr.bf16.mxu0 0
    %735 = vmatpush1.bf16.msra.mxu0 0
    %736 = vmatprep.subr.bf16.mxu0 0
    %737 = vmatpush1.bf16.msra.mxu0 0
    %738 = vmatprep.subr.bf16.mxu0 0
    %739 = vmatpush1.bf16.msra.mxu0 0
    %740 = vmatprep.subr.bf16.mxu0 0
    %741 = vmatpush1.bf16.msra.mxu0 0
    %742 = vmatprep.subr.bf16.mxu0 0
    %743 = vmatpush1.bf16.msra.mxu0 0
    %744 = vmatprep.subr.bf16.mxu0 0
    %745 = vmatpush1.bf16.msra.mxu0 0
    %746 = vmatprep.subr.bf16.mxu0 0
    %747 = vmatpush1.bf16.msra.mxu0 0
    %748 = vmatprep.subr.bf16.mxu0 0
    %749 = vmatpush1.bf16.msra.mxu0 0
    %750 = vmatprep.subr.bf16.mxu0 0
    %751 = vmatpush1.bf16.msra.mxu0 0
    %752 = vmatprep.subr.bf16.mxu0 0
    %753 = vmatpush1.bf16.msra.mxu0 0
    %754 = vmatprep.subr.bf16.mxu0 0
    %755 = vmatpush1.bf16.msra.mxu0 0
    %756 = vmatprep.subr.bf16.mxu0 0
    %757 = vmatpush1.bf16.msra.mxu0 0
    %758 = vmatprep.subr.bf16.mxu0 0
    %759 = vmatpush1.bf16.msra.mxu0 0
    %760 = vmatprep.subr.bf16.mxu0 0
    %761 = vmatpush1.bf16.msra.mxu0 0
    %762 = vmatprep.mubr.bf16.mxu0 0
    %763 = vmatmul.mubr.bf16.gmra.mrb[0].mxu0 %v207
    %v764 = vpop.f32.mrb[0].mxu0
    %v765 = vadd.f32 %v716, %v764
    %v766 = vpop.f32.mrb[0].mxu0
    %v767 = vpop.f32.mrb[0].mxu0
    %v768 = vadd.f32 %v716, %v767
    %v769 = vpop.f32.mrb[0].mxu0
    %770 = vdwg.mxu0
    %v772 = vsel %vm250, %v633, 0
    %v775 = vsel %vm250, %v699, 0
    %777 = vmatprep.subr.mxu0 0.0
    %778 = vmatpush1.xpose.msra.mxu0 %v775
    %779 = vmatprep.subr.mxu0 0.0
    %780 = vmatpush1.xpose.msra.mxu0 0.0
    %781 = vmatprep.subr.mxu0 0.0
    %782 = vmatpush1.xpose.msra.mxu0 0.0
    %783 = vmatprep.subr.mxu0 0.0
    %784 = vmatpush1.xpose.msra.mxu0 0.0
    %785 = vmatprep.subr.mxu0 0.0
    %786 = vmatpush1.xpose.msra.mxu0 0.0
    %787 = vmatprep.subr.mxu0 0.0
    %788 = vmatpush1.xpose.msra.mxu0 0.0
    %789 = vmatprep.subr.mxu0 0.0
    %790 = vmatpush1.xpose.msra.mxu0 0.0
    %791 = vmatprep.subr.mxu0 0.0
    %792 = vmatpush1.xpose.msra.mxu0 0.0
    %793 = vmatprep.subr.mxu0 0.0
    %794 = vmatpush1.xpose.msra.mxu0 0.0
    %795 = vmatprep.subr.mxu0 0.0
    %796 = vmatpush1.xpose.msra.mxu0 0.0
    %797 = vmatprep.subr.mxu0 0.0
    %798 = vmatpush1.xpose.msra.mxu0 0.0
    %799 = vmatprep.subr.mxu0 0.0
    %800 = vmatpush1.xpose.msra.mxu0 0.0
    %801 = vmatprep.subr.mxu0 0.0
    %802 = vmatpush1.xpose.msra.mxu0 0.0
    %803 = vmatprep.subr.mxu0 0.0
    %804 = vmatpush1.xpose.msra.mxu0 0.0
    %805 = vmatprep.subr.mxu0 0.0
    %806 = vmatpush1.xpose.msra.mxu0 0.0
    %807 = vmatprep.subr.mxu0 0.0
    %808 = vmatpush1.xpose.msra.mxu0 0.0
    %809 = vmatprep.subr.mxu0 0.0
    %810 = vmatpush1.xpose.msra.mxu0 0.0
    %811 = vmatprep.subr.mxu0 0.0
    %812 = vmatpush1.xpose.msra.mxu0 0.0
    %813 = vmatprep.subr.mxu0 0.0
    %814 = vmatpush1.xpose.msra.mxu0 0.0
    %815 = vmatprep.subr.mxu0 0.0
    %816 = vmatpush1.xpose.msra.mxu0 0.0
    %817 = vmatprep.subr.mxu0 0.0
    %818 = vmatpush1.xpose.msra.mxu0 0.0
    %819 = vmatprep.subr.mxu0 0.0
    %820 = vmatpush1.xpose.msra.mxu0 0.0
    %821 = vmatprep.subr.mxu0 0.0
    %822 = vmatpush1.xpose.msra.mxu0 0.0
    %823 = vmatprep.subr.mxu0 0.0
    %824 = vmatpush1.xpose.msra.mxu0 0.0
    %825 = vmatprep.subr.mxu0 0.0
    %826 = vmatpush1.xpose.msra.mxu0 0.0
    %827 = vmatprep.subr.mxu0 0.0
    %828 = vmatpush1.xpose.msra.mxu0 0.0
    %829 = vmatprep.subr.mxu0 0.0
    %830 = vmatpush1.xpose.msra.mxu0 0.0
    %831 = vmatprep.subr.mxu0 0.0
    %832 = vmatpush1.xpose.msra.mxu0 0.0
    %833 = vmatprep.subr.mxu0 0.0
    %834 = vmatpush1.xpose.msra.mxu0 0.0
    %835 = vmatprep.subr.mxu0 0.0
    %836 = vmatpush1.xpose.msra.mxu0 0.0
    %837 = vmatprep.subr.mxu0 0.0
    %838 = vmatpush1.xpose.msra.mxu0 0.0
    %839 = vmatprep.subr.mxu0 0.0
    %840 = vmatpush1.xpose.msra.mxu0 0.0
    %841 = vmatprep.mubr.f32.mxu0 0.0
    %842 = vmatmul.mubr.f32.gmra.mrb[0].mxu0 %v772
    %v843 = vpop.f32.mrb[0].mxu0
    %v844 = vadd.f32 0.0, %v843
    %v845 = vpop.f32.mrb[0].mxu0
    %846 = vdwg.mxu0
    %v848 = vsel %vm250, %v636, 0
    %v851 = vsel %vm250, %v702, 0
    %853 = vmatprep.subr.mxu0 0.0
    %854 = vmatpush1.xpose.msra.mxu0 %v851
    %855 = vmatprep.subr.mxu0 0.0
    %856 = vmatpush1.xpose.msra.mxu0 0.0
    %857 = vmatprep.subr.mxu0 0.0
    %858 = vmatpush1.xpose.msra.mxu0 0.0
    %859 = vmatprep.subr.mxu0 0.0
    %860 = vmatpush1.xpose.msra.mxu0 0.0
    %861 = vmatprep.subr.mxu0 0.0
    %862 = vmatpush1.xpose.msra.mxu0 0.0
    %863 = vmatprep.subr.mxu0 0.0
    %864 = vmatpush1.xpose.msra.mxu0 0.0
    %865 = vmatprep.subr.mxu0 0.0
    %866 = vmatpush1.xpose.msra.mxu0 0.0
    %867 = vmatprep.subr.mxu0 0.0
    %868 = vmatpush1.xpose.msra.mxu0 0.0
    %869 = vmatprep.subr.mxu0 0.0
    %870 = vmatpush1.xpose.msra.mxu0 0.0
    %871 = vmatprep.subr.mxu0 0.0
    %872 = vmatpush1.xpose.msra.mxu0 0.0
    %873 = vmatprep.subr.mxu0 0.0
    %874 = vmatpush1.xpose.msra.mxu0 0.0
    %875 = vmatprep.subr.mxu0 0.0
    %876 = vmatpush1.xpose.msra.mxu0 0.0
    %877 = vmatprep.subr.mxu0 0.0
    %878 = vmatpush1.xpose.msra.mxu0 0.0
    %879 = vmatprep.subr.mxu0 0.0
    %880 = vmatpush1.xpose.msra.mxu0 0.0
    %881 = vmatprep.subr.mxu0 0.0
    %882 = vmatpush1.xpose.msra.mxu0 0.0
    %883 = vmatprep.subr.mxu0 0.0
    %884 = vmatpush1.xpose.msra.mxu0 0.0
    %885 = vmatprep.subr.mxu0 0.0
    %886 = vmatpush1.xpose.msra.mxu0 0.0
    %887 = vmatprep.subr.mxu0 0.0
    %888 = vmatpush1.xpose.msra.mxu0 0.0
    %889 = vmatprep.subr.mxu0 0.0
    %890 = vmatpush1.xpose.msra.mxu0 0.0
    %891 = vmatprep.subr.mxu0 0.0
    %892 = vmatpush1.xpose.msra.mxu0 0.0
    %893 = vmatprep.subr.mxu0 0.0
    %894 = vmatpush1.xpose.msra.mxu0 0.0
    %895 = vmatprep.subr.mxu0 0.0
    %896 = vmatpush1.xpose.msra.mxu0 0.0
    %897 = vmatprep.subr.mxu0 0.0
    %898 = vmatpush1.xpose.msra.mxu0 0.0
    %899 = vmatprep.subr.mxu0 0.0
    %900 = vmatpush1.xpose.msra.mxu0 0.0
    %901 = vmatprep.subr.mxu0 0.0
    %902 = vmatpush1.xpose.msra.mxu0 0.0
    %903 = vmatprep.subr.mxu0 0.0
    %904 = vmatpush1.xpose.msra.mxu0 0.0
    %905 = vmatprep.subr.mxu0 0.0
    %906 = vmatpush1.xpose.msra.mxu0 0.0
    %907 = vmatprep.subr.mxu0 0.0
    %908 = vmatpush1.xpose.msra.mxu0 0.0
    %909 = vmatprep.subr.mxu0 0.0
    %910 = vmatpush1.xpose.msra.mxu0 0.0
    %911 = vmatprep.subr.mxu0 0.0
    %912 = vmatpush1.xpose.msra.mxu0 0.0
    %913 = vmatprep.subr.mxu0 0.0
    %914 = vmatpush1.xpose.msra.mxu0 0.0
    %915 = vmatprep.subr.mxu0 0.0
    %916 = vmatpush1.xpose.msra.mxu0 0.0
    %917 = vmatprep.mubr.f32.mxu0 0.0
    %918 = vmatmul.mubr.f32.gmra.mrb[0].mxu0 %v848
    %v919 = vpop.f32.mrb[0].mxu0
    %v920 = vadd.f32 0.0, %v919
    %v921 = vpop.f32.mrb[0].mxu0
    %922 = vdwg.mxu0
    %v923 = vsel %vm250, %v844, -inf
    %924 = vmax.xlane.f32.xlu0 %v923
    %v925 = vpop.xlane.xlu0 %924
    %v926 = vsel %vm250, %v920, -inf
    %927 = vmax.xlane.f32.xlu0 %v926
    %v928 = vpop.xlane.xlu0 %927
    %v929 = vsub.f32 %v844, %v925
    %v930 = vsub.f32 %v920, %v928
    %v931 = vmul.f32 %v929, 1.442695
    %v932 = vpow.pop %v931
    %v933 = vmul.f32 %v930, 1.442695
    %v934 = vpow.pop %v933
    %v935 = vsel %vm250, %v932, 0.0
    %936 = vadd.xlane.f32.xlu0 %v935
    %v937 = vpop.xlane.xlu0 %936
    %v938 = vsel %vm250, %v934, 0.0
    %939 = vadd.xlane.f32.xlu0 %v938
    %v940 = vpop.xlane.xlu0 %939
    %v941 = vrcp.pop %v937
    %v942 = vmul.f32 %v932, %v941
    %v943 = vrcp.pop %v940
    %v944 = vmul.f32 %v934, %v943
    %v946 = vsel %vm250, %v942, 0
    %948 = vmatprep.subr.mxu0 0.0
    %949 = vmatpush1.msra.mxu0 %v765
    %950 = vmatprep.subr.mxu0 0.0
    %951 = vmatpush1.msra.mxu0 0.0
    %952 = vmatprep.subr.mxu0 0.0
    %953 = vmatpush1.msra.mxu0 0.0
    %954 = vmatprep.subr.mxu0 0.0
    %955 = vmatpush1.msra.mxu0 0.0
    %956 = vmatprep.subr.mxu0 0.0
    %957 = vmatpush1.msra.mxu0 0.0
    %958 = vmatprep.subr.mxu0 0.0
    %959 = vmatpush1.msra.mxu0 0.0
    %960 = vmatprep.subr.mxu0 0.0
    %961 = vmatpush1.msra.mxu0 0.0
    %962 = vmatprep.subr.mxu0 0.0
    %963 = vmatpush1.msra.mxu0 0.0
    %964 = vmatprep.subr.mxu0 0.0
    %965 = vmatpush1.msra.mxu0 0.0
    %966 = vmatprep.subr.mxu0 0.0
    %967 = vmatpush1.msra.mxu0 0.0
    %968 = vmatprep.subr.mxu0 0.0
    %969 = vmatpush1.msra.mxu0 0.0
    %970 = vmatprep.subr.mxu0 0.0
    %971 = vmatpush1.msra.mxu0 0.0
    %972 = vmatprep.subr.mxu0 0.0
    %973 = vmatpush1.msra.mxu0 0.0
    %974 = vmatprep.subr.mxu0 0.0
    %975 = vmatpush1.msra.mxu0 0.0
    %976 = vmatprep.subr.mxu0 0.0
    %977 = vmatpush1.msra.mxu0 0.0
    %978 = vmatprep.subr.mxu0 0.0
    %979 = vmatpush1.msra.mxu0 0.0
    %980 = vmatprep.subr.mxu0 0.0
    %981 = vmatpush1.msra.mxu0 0.0
    %982 = vmatprep.subr.mxu0 0.0
    %983 = vmatpush1.msra.mxu0 0.0
    %984 = vmatprep.subr.mxu0 0.0
    %985 = vmatpush1.msra.mxu0 0.0
    %986 = vmatprep.subr.mxu0 0.0
    %987 = vmatpush1.msra.mxu0 0.0
    %988 = vmatprep.subr.mxu0 0.0
    %989 = vmatpush1.msra.mxu0 0.0
    %990 = vmatprep.subr.mxu0 0.0
    %991 = vmatpush1.msra.mxu0 0.0
    %992 = vmatprep.subr.mxu0 0.0
    %993 = vmatpush1.msra.mxu0 0.0
    %994 = vmatprep.subr.mxu0 0.0
    %995 = vmatpush1.msra.mxu0 0.0
    %996 = vmatprep.subr.mxu0 0.0
    %997 = vmatpush1.msra.mxu0 0.0
    %998 = vmatprep.subr.mxu0 0.0
    %999 = vmatpush1.msra.mxu0 0.0
    %1000 = vmatprep.subr.mxu0 0.0
    %1001 = vmatpush1.msra.mxu0 0.0
    %1002 = vmatprep.subr.mxu0 0.0
    %1003 = vmatpush1.msra.mxu0 0.0
    %1004 = vmatprep.subr.mxu0 0.0
    %1005 = vmatpush1.msra.mxu0 0.0
    %1006 = vmatprep.subr.mxu0 0.0
    %1007 = vmatpush1.msra.mxu0 0.0
    %1008 = vmatprep.subr.mxu0 0.0
    %1009 = vmatpush1.msra.mxu0 0.0
    %1010 = vmatprep.subr.mxu0 0.0
    %1011 = vmatpush1.msra.mxu0 0.0
    %1012 = vmatprep.mubr.f32.mxu0 0.0
    %1013 = vmatmul.mubr.f32.gmra.mrb[0].mxu0 %v946
    %v1014 = vpop.f32.mrb[0].mxu0
    %v1015 = vadd.f32 0.0, %v1014
    %v1016 = vpop.f32.mrb[0].mxu0
    %1017 = vdwg.mxu0
    %v1019 = vsel %vm250, %v944, 0
    %1021 = vmatprep.subr.mxu0 0.0
    %1022 = vmatpush1.msra.mxu0 %v768
    %1023 = vmatprep.subr.mxu0 0.0
    %1024 = vmatpush1.msra.mxu0 0.0
    %1025 = vmatprep.subr.mxu0 0.0
    %1026 = vmatpush1.msra.mxu0 0.0
    %1027 = vmatprep.subr.mxu0 0.0
    %1028 = vmatpush1.msra.mxu0 0.0
    %1029 = vmatprep.subr.mxu0 0.0
    %1030 = vmatpush1.msra.mxu0 0.0
    %1031 = vmatprep.subr.mxu0 0.0
    %1032 = vmatpush1.msra.mxu0 0.0
    %1033 = vmatprep.subr.mxu0 0.0
    %1034 = vmatpush1.msra.mxu0 0.0
    %1035 = vmatprep.subr.mxu0 0.0
    %1036 = vmatpush1.msra.mxu0 0.0
    %1037 = vmatprep.subr.mxu0 0.0
    %1038 = vmatpush1.msra.mxu0 0.0
    %1039 = vmatprep.subr.mxu0 0.0
    %1040 = vmatpush1.msra.mxu0 0.0
    %1041 = vmatprep.subr.mxu0 0.0
    %1042 = vmatpush1.msra.mxu0 0.0
    %1043 = vmatprep.subr.mxu0 0.0
    %1044 = vmatpush1.msra.mxu0 0.0
    %1045 = vmatprep.subr.mxu0 0.0
    %1046 = vmatpush1.msra.mxu0 0.0
    %1047 = vmatprep.subr.mxu0 0.0
    %1048 = vmatpush1.msra.mxu0 0.0
    %1049 = vmatprep.subr.mxu0 0.0
    %1050 = vmatpush1.msra.mxu0 0.0
    %1051 = vmatprep.subr.mxu0 0.0
    %1052 = vmatpush1.msra.mxu0 0.0
    %1053 = vmatprep.subr.mxu0 0.0
    %1054 = vmatpush1.msra.mxu0 0.0
    %1055 = vmatprep.subr.mxu0 0.0
    %1056 = vmatpush1.msra.mxu0 0.0
    %1057 = vmatprep.subr.mxu0 0.0
    %1058 = vmatpush1.msra.mxu0 0.0
    %1059 = vmatprep.subr.mxu0 0.0
    %1060 = vmatpush1.msra.mxu0 0.0
    %1061 = vmatprep.subr.mxu0 0.0
    %1062 = vmatpush1.msra.mxu0 0.0
    %1063 = vmatprep.subr.mxu0 0.0
    %1064 = vmatpush1.msra.mxu0 0.0
    %1065 = vmatprep.subr.mxu0 0.0
    %1066 = vmatpush1.msra.mxu0 0.0
    %1067 = vmatprep.subr.mxu0 0.0
    %1068 = vmatpush1.msra.mxu0 0.0
    %1069 = vmatprep.subr.mxu0 0.0
    %1070 = vmatpush1.msra.mxu0 0.0
    %1071 = vmatprep.subr.mxu0 0.0
    %1072 = vmatpush1.msra.mxu0 0.0
    %1073 = vmatprep.subr.mxu0 0.0
    %1074 = vmatpush1.msra.mxu0 0.0
    %1075 = vmatprep.subr.mxu0 0.0
    %1076 = vmatpush1.msra.mxu0 0.0
    %1077 = vmatprep.subr.mxu0 0.0
    %1078 = vmatpush1.msra.mxu0 0.0
    %1079 = vmatprep.subr.mxu0 0.0
    %1080 = vmatpush1.msra.mxu0 0.0
    %1081 = vmatprep.subr.mxu0 0.0
    %1082 = vmatpush1.msra.mxu0 0.0
    %1083 = vmatprep.subr.mxu0 0.0
    %1084 = vmatpush1.msra.mxu0 0.0
    %1085 = vmatprep.mubr.f32.mxu0 0.0
    %1086 = vmatmul.mubr.f32.gmra.mrb[0].mxu0 %v1019
    %v1087 = vpop.f32.mrb[0].mxu0
    %v1088 = vadd.f32 0.0, %v1087
    %v1089 = vpop.f32.mrb[0].mxu0
    %1090 = vdwg.mxu0
    %v1091 = vpack.c.bf16 %v1088, %v1015
    %s1092 = scalar_lea.vmem %s4, 4
    %v1093 = vld [vmem:[%s1092] sm:$0xf]
    %v1095 = vsel %vm250, %v1091, 0
    %vm1097 = vcmask 1043456
    %v1099 = vsel %vm1097, %v1093, 0
    %1101 = vmatprep.subr.bf16.mxu0 0
    %1102 = vmatpush1.bf16.msra.mxu0 %v1099
    %1103 = vmatprep.subr.bf16.mxu0 0
    %1104 = vmatpush1.bf16.msra.mxu0 0
    %1105 = vmatprep.subr.bf16.mxu0 0
    %1106 = vmatpush1.bf16.msra.mxu0 0
    %1107 = vmatprep.subr.bf16.mxu0 0
    %1108 = vmatpush1.bf16.msra.mxu0 0
    %1109 = vmatprep.subr.bf16.mxu0 0
    %1110 = vmatpush1.bf16.msra.mxu0 0
    %1111 = vmatprep.subr.bf16.mxu0 0
    %1112 = vmatpush1.bf16.msra.mxu0 0
    %1113 = vmatprep.subr.bf16.mxu0 0
    %1114 = vmatpush1.bf16.msra.mxu0 0
    %1115 = vmatprep.subr.bf16.mxu0 0
    %1116 = vmatpush1.bf16.msra.mxu0 0
    %1117 = vmatprep.subr.bf16.mxu0 0
    %1118 = vmatpush1.bf16.msra.mxu0 0
    %1119 = vmatprep.subr.bf16.mxu0 0
    %1120 = vmatpush1.bf16.msra.mxu0 0
    %1121 = vmatprep.subr.bf16.mxu0 0
    %1122 = vmatpush1.bf16.msra.mxu0 0
    %1123 = vmatprep.subr.bf16.mxu0 0
    %1124 = vmatpush1.bf16.msra.mxu0 0
    %1125 = vmatprep.subr.bf16.mxu0 0
    %1126 = vmatpush1.bf16.msra.mxu0 0
    %1127 = vmatprep.subr.bf16.mxu0 0
    %1128 = vmatpush1.bf16.msra.mxu0 0
    %1129 = vmatprep.subr.bf16.mxu0 0
    %1130 = vmatpush1.bf16.msra.mxu0 0
    %1131 = vmatprep.subr.bf16.mxu0 0
    %1132 = vmatpush1.bf16.msra.mxu0 0
    %1133 = vmatprep.mubr.bf16.mxu0 0
    %1134 = vmatmul.mubr.bf16.gmra.mrb[0].mxu0 %v1095
    %v1135 = vpop.f32.mrb[0].mxu0
    %v1136 = vadd.f32 0.0, %v1135
    %v1137 = vpop.f32.mrb[0].mxu0
    %v1138 = vpop.f32.mrb[0].mxu0
    %v1139 = vadd.f32 0.0, %v1138
    %v1140 = vpop.f32.mrb[0].mxu0
    %1141 = vdwg.mxu0
    %v1143 = vsel %vm250, %v571, 0
    %v1146 = vsel %vm1097, %v572, 0
    %1148 = vmatprep.subr.bf16.mxu0 0
    %1149 = vmatpush1.bf16.msra.mxu0 %v1146
    %1150 = vmatprep.subr.bf16.mxu0 0
    %1151 = vmatpush1.bf16.msra.mxu0 0
    %1152 = vmatprep.subr.bf16.mxu0 0
    %1153 = vmatpush1.bf16.msra.mxu0 0
    %1154 = vmatprep.subr.bf16.mxu0 0
    %1155 = vmatpush1.bf16.msra.mxu0 0
    %1156 = vmatprep.subr.bf16.mxu0 0
    %1157 = vmatpush1.bf16.msra.mxu0 0
    %1158 = vmatprep.subr.bf16.mxu0 0
    %1159 = vmatpush1.bf16.msra.mxu0 0
    %1160 = vmatprep.subr.bf16.mxu0 0
    %1161 = vmatpush1.bf16.msra.mxu0 0
    %1162 = vmatprep.subr.bf16.mxu0 0
    %1163 = vmatpush1.bf16.msra.mxu0 0
    %1164 = vmatprep.subr.bf16.mxu0 0
    %1165 = vmatpush1.bf16.msra.mxu0 0
    %1166 = vmatprep.subr.bf16.mxu0 0
    %1167 = vmatpush1.bf16.msra.mxu0 0
    %1168 = vmatprep.subr.bf16.mxu0 0
    %1169 = vmatpush1.bf16.msra.mxu0 0
    %1170 = vmatprep.subr.bf16.mxu0 0
    %1171 = vmatpush1.bf16.msra.mxu0 0
    %1172 = vmatprep.subr.bf16.mxu0 0
    %1173 = vmatpush1.bf16.msra.mxu0 0
    %1174 = vmatprep.subr.bf16.mxu0 0
    %1175 = vmatpush1.bf16.msra.mxu0 0
    %1176 = vmatprep.subr.bf16.mxu0 0
    %1177 = vmatpush1.bf16.msra.mxu0 0
    %1178 = vmatprep.subr.bf16.mxu0 0
    %1179 = vmatpush1.bf16.msra.mxu0 0
    %1180 = vmatprep.mubr.bf16.mxu0 0
    %1181 = vmatmul.mubr.bf16.gmra.mrb[0].mxu0 %v1143
    %v1182 = vpop.f32.mrb[0].mxu0
    %v1183 = vadd.f32 %v1136, %v1182
    %v1184 = vpop.f32.mrb[0].mxu0
    %v1185 = vpop.f32.mrb[0].mxu0
    %v1186 = vadd.f32 %v1139, %v1185
    %v1187 = vpop.f32.mrb[0].mxu0
    %1188 = vdwg.mxu0
    %s1189 = scalar_lea.vmem %s2, 32
    %v1190 = vld [vmem:[%s1189] sm:$0xf]
    %v1191 = vld [vmem:[%s1189 + $0x4] sm:$0xf]
    %v1192 = vld [vmem:[%s1189 + $0x8] sm:$0xf]
    %v1193 = vld [vmem:[%s1189 + $0xc] sm:$0xf]
    %s1194 = scalar_lea.vmem %s3, 2
    %v1195 = vld [vmem:[%s1194] sm:$0x1]
    %v1197 = vlaneseq
    %v1198 = vshrl.u32 %v1197, 7
    %v1199 = vsub.s32 0, %v1198
    %v1200 = vrot.slane %v1195, %v1199
    %v1206 = vunpack.c.l.b16 %v1190
    %v1207 = vunpack.c.l.b16 %v1191
    %v1208 = vunpack.c.l.b16 %v1192
    %v1209 = vunpack.c.l.b16 %v1193
    %v1210 = vpack.c.b16 %v1207, %v1206
    %v1211 = vpack.c.b16 %v1209, %v1208
    %1214 = vmatprep.subr.bf16.mxu0 0
    %1215 = vmatpush1.bf16.msra.mxu0 %v1210
    %1216 = vmatprep.subr.bf16.mxu0 0
    %1217 = vmatpush1.bf16.msra.mxu0 %v1211
    %1218 = vmatprep.subr.bf16.mxu0 0
    %1219 = vmatpush1.bf16.msra.mxu0 0
    %1220 = vmatprep.subr.bf16.mxu0 0
    %1221 = vmatpush1.bf16.msra.mxu0 0
    %1222 = vmatprep.subr.bf16.mxu0 0
    %1223 = vmatpush1.bf16.msra.mxu0 0
    %1224 = vmatprep.subr.bf16.mxu0 0
    %1225 = vmatpush1.bf16.msra.mxu0 0
    %1226 = vmatprep.subr.bf16.mxu0 0
    %1227 = vmatpush1.bf16.msra.mxu0 0
    %1228 = vmatprep.subr.bf16.mxu0 0
    %1229 = vmatpush1.bf16.msra.mxu0 0
    %1230 = vmatprep.subr.bf16.mxu0 0
    %1231 = vmatpush1.bf16.msra.mxu0 0
    %1232 = vmatprep.subr.bf16.mxu0 0
    %1233 = vmatpush1.bf16.msra.mxu0 0
    %1234 = vmatprep.subr.bf16.mxu0 0
    %1235 = vmatpush1.bf16.msra.mxu0 0
    %1236 = vmatprep.subr.bf16.mxu0 0
    %1237 = vmatpush1.bf16.msra.mxu0 0
    %1238 = vmatprep.subr.bf16.mxu0 0
    %1239 = vmatpush1.bf16.msra.mxu0 0
    %1240 = vmatprep.subr.bf16.mxu0 0
    %1241 = vmatpush1.bf16.msra.mxu0 0
    %1242 = vmatprep.subr.bf16.mxu0 0
    %1243 = vmatpush1.bf16.msra.mxu0 0
    %1244 = vmatprep.subr.bf16.mxu0 0
    %1245 = vmatpush1.bf16.msra.mxu0 0
    %1246 = vmatprep.mubr.bf16.mxu0 0
    %1247 = vmatmul.mubr.bf16.gmra.mrb[0].mxu0 %v72
    %v1248 = vpop.f32.mrb[0].mxu0
    %v1249 = vadd.f32 %v1200, %v1248
    %v1250 = vpop.f32.mrb[0].mxu0
    %v1251 = vpop.f32.mrb[0].mxu0
    %v1252 = vadd.f32 %v1200, %v1251
    %v1253 = vpop.f32.mrb[0].mxu0
    %1254 = vdwg.mxu0
    %s1255 = scalar_lea.vmem %s2, 96
    %v1256 = vld [vmem:[%s1255] sm:$0xf]
    %v1257 = vld [vmem:[%s1255 + $0x4] sm:$0xf]
    %v1258 = vld [vmem:[%s1255 + $0x8] sm:$0xf]
    %v1259 = vld [vmem:[%s1255 + $0xc] sm:$0xf]
    %s1260 = scalar_lea.vmem %s3, 6
    %v1261 = vld [vmem:[%s1260] sm:$0x1]
    %v1263 = vlaneseq
    %v1264 = vshrl.u32 %v1263, 7
    %v1265 = vsub.s32 0, %v1264
    %v1266 = vrot.slane %v1261, %v1265
    %v1272 = vunpack.c.l.b16 %v1256
    %v1273 = vunpack.c.l.b16 %v1257
    %v1274 = vunpack.c.l.b16 %v1258
    %v1275 = vunpack.c.l.b16 %v1259
    %v1276 = vpack.c.b16 %v1273, %v1272
    %v1277 = vpack.c.b16 %v1275, %v1274
    %1280 = vmatprep.subr.bf16.mxu0 0
    %1281 = vmatpush1.bf16.msra.mxu0 %v1276
    %1282 = vmatprep.subr.bf16.mxu0 0
    %1283 = vmatpush1.bf16.msra.mxu0 %v1277
    %1284 = vmatprep.subr.bf16.mxu0 0
    %1285 = vmatpush1.bf16.msra.mxu0 0
    %1286 = vmatprep.subr.bf16.mxu0 0
    %1287 = vmatpush1.bf16.msra.mxu0 0
    %1288 = vmatprep.subr.bf16.mxu0 0
    %1289 = vmatpush1.bf16.msra.mxu0 0
    %1290 = vmatprep.subr.bf16.mxu0 0
    %1291 = vmatpush1.bf16.msra.mxu0 0
    %1292 = vmatprep.subr.bf16.mxu0 0
    %1293 = vmatpush1.bf16.msra.mxu0 0
    %1294 = vmatprep.subr.bf16.mxu0 0
    %1295 = vmatpush1.bf16.msra.mxu0 0
    %1296 = vmatprep.subr.bf16.mxu0 0
    %1297 = vmatpush1.bf16.msra.mxu0 0
    %1298 = vmatprep.subr.bf16.mxu0 0
    %1299 = vmatpush1.bf16.msra.mxu0 0
    %1300 = vmatprep.subr.bf16.mxu0 0
    %1301 = vmatpush1.bf16.msra.mxu0 0
    %1302 = vmatprep.subr.bf16.mxu0 0
    %1303 = vmatpush1.bf16.msra.mxu0 0
    %1304 = vmatprep.subr.bf16.mxu0 0
    %1305 = vmatpush1.bf16.msra.mxu0 0
    %1306 = vmatprep.subr.bf16.mxu0 0
    %1307 = vmatpush1.bf16.msra.mxu0 0
    %1308 = vmatprep.subr.bf16.mxu0 0
    %1309 = vmatpush1.bf16.msra.mxu0 0
    %1310 = vmatprep.subr.bf16.mxu0 0
    %1311 = vmatpush1.bf16.msra.mxu0 0
    %1312 = vmatprep.mubr.bf16.mxu0 0
    %1313 = vmatmul.mubr.bf16.gmra.mrb[0].mxu0 %v72
    %v1314 = vpop.f32.mrb[0].mxu0
    %v1315 = vadd.f32 %v1266, %v1314
    %v1316 = vpop.f32.mrb[0].mxu0
    %v1317 = vpop.f32.mrb[0].mxu0
    %v1318 = vadd.f32 %v1266, %v1317
    %v1319 = vpop.f32.mrb[0].mxu0
    %1320 = vdwg.mxu0
    %s1321 = scalar_lea.vmem %s2, 160
    %v1322 = vld [vmem:[%s1321] sm:$0xf]
    %v1323 = vld [vmem:[%s1321 + $0x4] sm:$0xf]
    %v1324 = vld [vmem:[%s1321 + $0x8] sm:$0xf]
    %v1325 = vld [vmem:[%s1321 + $0xc] sm:$0xf]
    %s1326 = scalar_lea.vmem %s3, 10
    %v1327 = vld [vmem:[%s1326] sm:$0x1]
    %v1329 = vlaneseq
    %v1330 = vshrl.u32 %v1329, 7
    %v1331 = vsub.s32 0, %v1330
    %v1332 = vrot.slane %v1327, %v1331
    %v1338 = vunpack.c.l.b16 %v1322
    %v1339 = vunpack.c.l.b16 %v1323
    %v1340 = vunpack.c.l.b16 %v1324
    %v1341 = vunpack.c.l.b16 %v1325
    %v1342 = vpack.c.b16 %v1339, %v1338
    %v1343 = vpack.c.b16 %v1341, %v1340
    %1346 = vmatprep.subr.bf16.mxu0 0
    %1347 = vmatpush1.bf16.msra.mxu0 %v1342
    %1348 = vmatprep.subr.bf16.mxu0 0
    %1349 = vmatpush1.bf16.msra.mxu0 %v1343
    %1350 = vmatprep.subr.bf16.mxu0 0
    %1351 = vmatpush1.bf16.msra.mxu0 0
    %1352 = vmatprep.subr.bf16.mxu0 0
    %1353 = vmatpush1.bf16.msra.mxu0 0
    %1354 = vmatprep.subr.bf16.mxu0 0
    %1355 = vmatpush1.bf16.msra.mxu0 0
    %1356 = vmatprep.subr.bf16.mxu0 0
    %1357 = vmatpush1.bf16.msra.mxu0 0
    %1358 = vmatprep.subr.bf16.mxu0 0
    %1359 = vmatpush1.bf16.msra.mxu0 0
    %1360 = vmatprep.subr.bf16.mxu0 0
    %1361 = vmatpush1.bf16.msra.mxu0 0
    %1362 = vmatprep.subr.bf16.mxu0 0
    %1363 = vmatpush1.bf16.msra.mxu0 0
    %1364 = vmatprep.subr.bf16.mxu0 0
    %1365 = vmatpush1.bf16.msra.mxu0 0
    %1366 = vmatprep.subr.bf16.mxu0 0
    %1367 = vmatpush1.bf16.msra.mxu0 0
    %1368 = vmatprep.subr.bf16.mxu0 0
    %1369 = vmatpush1.bf16.msra.mxu0 0
    %1370 = vmatprep.subr.bf16.mxu0 0
    %1371 = vmatpush1.bf16.msra.mxu0 0
    %1372 = vmatprep.subr.bf16.mxu0 0
    %1373 = vmatpush1.bf16.msra.mxu0 0
    %1374 = vmatprep.subr.bf16.mxu0 0
    %1375 = vmatpush1.bf16.msra.mxu0 0
    %1376 = vmatprep.subr.bf16.mxu0 0
    %1377 = vmatpush1.bf16.msra.mxu0 0
    %1378 = vmatprep.mubr.bf16.mxu0 0
    %1379 = vmatmul.mubr.bf16.gmra.mrb[0].mxu0 %v207
    %v1380 = vpop.f32.mrb[0].mxu0
    %v1381 = vadd.f32 %v1332, %v1380
    %v1382 = vpop.f32.mrb[0].mxu0
    %v1383 = vpop.f32.mrb[0].mxu0
    %v1384 = vadd.f32 %v1332, %v1383
    %v1385 = vpop.f32.mrb[0].mxu0
    %1386 = vdwg.mxu0
    %v1388 = vsel %vm250, %v1249, 0
    %v1391 = vsel %vm250, %v1315, 0
    %1393 = vmatprep.subr.mxu0 0.0
    %1394 = vmatpush1.xpose.msra.mxu0 %v1391
    %1395 = vmatprep.subr.mxu0 0.0
    %1396 = vmatpush1.xpose.msra.mxu0 0.0
    %1397 = vmatprep.subr.mxu0 0.0
    %1398 = vmatpush1.xpose.msra.mxu0 0.0
    %1399 = vmatprep.subr.mxu0 0.0
    %1400 = vmatpush1.xpose.msra.mxu0 0.0
    %1401 = vmatprep.subr.mxu0 0.0
    %1402 = vmatpush1.xpose.msra.mxu0 0.0
    %1403 = vmatprep.subr.mxu0 0.0
    %1404 = vmatpush1.xpose.msra.mxu0 0.0
    %1405 = vmatprep.subr.mxu0 0.0
    %1406 = vmatpush1.xpose.msra.mxu0 0.0
    %1407 = vmatprep.subr.mxu0 0.0
    %1408 = vmatpush1.xpose.msra.mxu0 0.0
    %1409 = vmatprep.subr.mxu0 0.0
    %1410 = vmatpush1.xpose.msra.mxu0 0.0
    %1411 = vmatprep.subr.mxu0 0.0
    %1412 = vmatpush1.xpose.msra.mxu0 0.0
    %1413 = vmatprep.subr.mxu0 0.0
    %1414 = vmatpush1.xpose.msra.mxu0 0.0
    %1415 = vmatprep.subr.mxu0 0.0
    %1416 = vmatpush1.xpose.msra.mxu0 0.0
    %1417 = vmatprep.subr.mxu0 0.0
    %1418 = vmatpush1.xpose.msra.mxu0 0.0
    %1419 = vmatprep.subr.mxu0 0.0
    %1420 = vmatpush1.xpose.msra.mxu0 0.0
    %1421 = vmatprep.subr.mxu0 0.0
    %1422 = vmatpush1.xpose.msra.mxu0 0.0
    %1423 = vmatprep.subr.mxu0 0.0
    %1424 = vmatpush1.xpose.msra.mxu0 0.0
    %1425 = vmatprep.subr.mxu0 0.0
    %1426 = vmatpush1.xpose.msra.mxu0 0.0
    %1427 = vmatprep.subr.mxu0 0.0
    %1428 = vmatpush1.xpose.msra.mxu0 0.0
    %1429 = vmatprep.subr.mxu0 0.0
    %1430 = vmatpush1.xpose.msra.mxu0 0.0
    %1431 = vmatprep.subr.mxu0 0.0
    %1432 = vmatpush1.xpose.msra.mxu0 0.0
    %1433 = vmatprep.subr.mxu0 0.0
    %1434 = vmatpush1.xpose.msra.mxu0 0.0
    %1435 = vmatprep.subr.mxu0 0.0
    %1436 = vmatpush1.xpose.msra.mxu0 0.0
    %1437 = vmatprep.subr.mxu0 0.0
    %1438 = vmatpush1.xpose.msra.mxu0 0.0
    %1439 = vmatprep.subr.mxu0 0.0
    %1440 = vmatpush1.xpose.msra.mxu0 0.0
    %1441 = vmatprep.subr.mxu0 0.0
    %1442 = vmatpush1.xpose.msra.mxu0 0.0
    %1443 = vmatprep.subr.mxu0 0.0
    %1444 = vmatpush1.xpose.msra.mxu0 0.0
    %1445 = vmatprep.subr.mxu0 0.0
    %1446 = vmatpush1.xpose.msra.mxu0 0.0
    %1447 = vmatprep.subr.mxu0 0.0
    %1448 = vmatpush1.xpose.msra.mxu0 0.0
    %1449 = vmatprep.subr.mxu0 0.0
    %1450 = vmatpush1.xpose.msra.mxu0 0.0
    %1451 = vmatprep.subr.mxu0 0.0
    %1452 = vmatpush1.xpose.msra.mxu0 0.0
    %1453 = vmatprep.subr.mxu0 0.0
    %1454 = vmatpush1.xpose.msra.mxu0 0.0
    %1455 = vmatprep.subr.mxu0 0.0
    %1456 = vmatpush1.xpose.msra.mxu0 0.0
    %1457 = vmatprep.mubr.f32.mxu0 0.0
    %1458 = vmatmul.mubr.f32.gmra.mrb[0].mxu0 %v1388
    %v1459 = vpop.f32.mrb[0].mxu0
    %v1460 = vadd.f32 0.0, %v1459
    %v1461 = vpop.f32.mrb[0].mxu0
    %1462 = vdwg.mxu0
    %v1464 = vsel %vm250, %v1252, 0
    %v1467 = vsel %vm250, %v1318, 0
    %1469 = vmatprep.subr.mxu0 0.0
    %1470 = vmatpush1.xpose.msra.mxu0 %v1467
    %1471 = vmatprep.subr.mxu0 0.0
    %1472 = vmatpush1.xpose.msra.mxu0 0.0
    %1473 = vmatprep.subr.mxu0 0.0
    %1474 = vmatpush1.xpose.msra.mxu0 0.0
    %1475 = vmatprep.subr.mxu0 0.0
    %1476 = vmatpush1.xpose.msra.mxu0 0.0
    %1477 = vmatprep.subr.mxu0 0.0
    %1478 = vmatpush1.xpose.msra.mxu0 0.0
    %1479 = vmatprep.subr.mxu0 0.0
    %1480 = vmatpush1.xpose.msra.mxu0 0.0
    %1481 = vmatprep.subr.mxu0 0.0
    %1482 = vmatpush1.xpose.msra.mxu0 0.0
    %1483 = vmatprep.subr.mxu0 0.0
    %1484 = vmatpush1.xpose.msra.mxu0 0.0
    %1485 = vmatprep.subr.mxu0 0.0
    %1486 = vmatpush1.xpose.msra.mxu0 0.0
    %1487 = vmatprep.subr.mxu0 0.0
    %1488 = vmatpush1.xpose.msra.mxu0 0.0
    %1489 = vmatprep.subr.mxu0 0.0
    %1490 = vmatpush1.xpose.msra.mxu0 0.0
    %1491 = vmatprep.subr.mxu0 0.0
    %1492 = vmatpush1.xpose.msra.mxu0 0.0
    %1493 = vmatprep.subr.mxu0 0.0
    %1494 = vmatpush1.xpose.msra.mxu0 0.0
    %1495 = vmatprep.subr.mxu0 0.0
    %1496 = vmatpush1.xpose.msra.mxu0 0.0
    %1497 = vmatprep.subr.mxu0 0.0
    %1498 = vmatpush1.xpose.msra.mxu0 0.0
    %1499 = vmatprep.subr.mxu0 0.0
    %1500 = vmatpush1.xpose.msra.mxu0 0.0
    %1501 = vmatprep.subr.mxu0 0.0
    %1502 = vmatpush1.xpose.msra.mxu0 0.0
    %1503 = vmatprep.subr.mxu0 0.0
    %1504 = vmatpush1.xpose.msra.mxu0 0.0
    %1505 = vmatprep.subr.mxu0 0.0
    %1506 = vmatpush1.xpose.msra.mxu0 0.0
    %1507 = vmatprep.subr.mxu0 0.0
    %1508 = vmatpush1.xpose.msra.mxu0 0.0
    %1509 = vmatprep.subr.mxu0 0.0
    %1510 = vmatpush1.xpose.msra.mxu0 0.0
    %1511 = vmatprep.subr.mxu0 0.0
    %1512 = vmatpush1.xpose.msra.mxu0 0.0
    %1513 = vmatprep.subr.mxu0 0.0
    %1514 = vmatpush1.xpose.msra.mxu0 0.0
    %1515 = vmatprep.subr.mxu0 0.0
    %1516 = vmatpush1.xpose.msra.mxu0 0.0
    %1517 = vmatprep.subr.mxu0 0.0
    %1518 = vmatpush1.xpose.msra.mxu0 0.0
    %1519 = vmatprep.subr.mxu0 0.0
    %1520 = vmatpush1.xpose.msra.mxu0 0.0
    %1521 = vmatprep.subr.mxu0 0.0
    %1522 = vmatpush1.xpose.msra.mxu0 0.0
    %1523 = vmatprep.subr.mxu0 0.0
    %1524 = vmatpush1.xpose.msra.mxu0 0.0
    %1525 = vmatprep.subr.mxu0 0.0
    %1526 = vmatpush1.xpose.msra.mxu0 0.0
    %1527 = vmatprep.subr.mxu0 0.0
    %1528 = vmatpush1.xpose.msra.mxu0 0.0
    %1529 = vmatprep.subr.mxu0 0.0
    %1530 = vmatpush1.xpose.msra.mxu0 0.0
    %1531 = vmatprep.subr.mxu0 0.0
    %1532 = vmatpush1.xpose.msra.mxu0 0.0
    %1533 = vmatprep.mubr.f32.mxu0 0.0
    %1534 = vmatmul.mubr.f32.gmra.mrb[0].mxu0 %v1464
    %v1535 = vpop.f32.mrb[0].mxu0
    %v1536 = vadd.f32 0.0, %v1535
    %v1537 = vpop.f32.mrb[0].mxu0
    %1538 = vdwg.mxu0
    %v1539 = vsel %vm250, %v1460, -inf
    %1540 = vmax.xlane.f32.xlu0 %v1539
    %v1541 = vpop.xlane.xlu0 %1540
    %v1542 = vsel %vm250, %v1536, -inf
    %1543 = vmax.xlane.f32.xlu0 %v1542
    %v1544 = vpop.xlane.xlu0 %1543
    %v1545 = vsub.f32 %v1460, %v1541
    %v1546 = vsub.f32 %v1536, %v1544
    %v1547 = vmul.f32 %v1545, 1.442695
    %v1548 = vpow.pop %v1547
    %v1549 = vmul.f32 %v1546, 1.442695
    %v1550 = vpow.pop %v1549
    %v1551 = vsel %vm250, %v1548, 0.0
    %1552 = vadd.xlane.f32.xlu0 %v1551
    %v1553 = vpop.xlane.xlu0 %1552
    %v1554 = vsel %vm250, %v1550, 0.0
    %1555 = vadd.xlane.f32.xlu0 %v1554
    %v1556 = vpop.xlane.xlu0 %1555
    %v1557 = vrcp.pop %v1553
    %v1558 = vmul.f32 %v1548, %v1557
    %v1559 = vrcp.pop %v1556
    %v1560 = vmul.f32 %v1550, %v1559
    %v1562 = vsel %vm250, %v1558, 0
    %1564 = vmatprep.subr.mxu0 0.0
    %1565 = vmatpush1.msra.mxu0 %v1381
    %1566 = vmatprep.subr.mxu0 0.0
    %1567 = vmatpush1.msra.mxu0 0.0
    %1568 = vmatprep.subr.mxu0 0.0
    %1569 = vmatpush1.msra.mxu0 0.0
    %1570 = vmatprep.subr.mxu0 0.0
    %1571 = vmatpush1.msra.mxu0 0.0
    %1572 = vmatprep.subr.mxu0 0.0
    %1573 = vmatpush1.msra.mxu0 0.0
    %1574 = vmatprep.subr.mxu0 0.0
    %1575 = vmatpush1.msra.mxu0 0.0
    %1576 = vmatprep.subr.mxu0 0.0
    %1577 = vmatpush1.msra.mxu0 0.0
    %1578 = vmatprep.subr.mxu0 0.0
    %1579 = vmatpush1.msra.mxu0 0.0
    %1580 = vmatprep.subr.mxu0 0.0
    %1581 = vmatpush1.msra.mxu0 0.0
    %1582 = vmatprep.subr.mxu0 0.0
    %1583 = vmatpush1.msra.mxu0 0.0
    %1584 = vmatprep.subr.mxu0 0.0
    %1585 = vmatpush1.msra.mxu0 0.0
    %1586 = vmatprep.subr.mxu0 0.0
    %1587 = vmatpush1.msra.mxu0 0.0
    %1588 = vmatprep.subr.mxu0 0.0
    %1589 = vmatpush1.msra.mxu0 0.0
    %1590 = vmatprep.subr.mxu0 0.0
    %1591 = vmatpush1.msra.mxu0 0.0
    %1592 = vmatprep.subr.mxu0 0.0
    %1593 = vmatpush1.msra.mxu0 0.0
    %1594 = vmatprep.subr.mxu0 0.0
    %1595 = vmatpush1.msra.mxu0 0.0
    %1596 = vmatprep.subr.mxu0 0.0
    %1597 = vmatpush1.msra.mxu0 0.0
    %1598 = vmatprep.subr.mxu0 0.0
    %1599 = vmatpush1.msra.mxu0 0.0
    %1600 = vmatprep.subr.mxu0 0.0
    %1601 = vmatpush1.msra.mxu0 0.0
    %1602 = vmatprep.subr.mxu0 0.0
    %1603 = vmatpush1.msra.mxu0 0.0
    %1604 = vmatprep.subr.mxu0 0.0
    %1605 = vmatpush1.msra.mxu0 0.0
    %1606 = vmatprep.subr.mxu0 0.0
    %1607 = vmatpush1.msra.mxu0 0.0
    %1608 = vmatprep.subr.mxu0 0.0
    %1609 = vmatpush1.msra.mxu0 0.0
    %1610 = vmatprep.subr.mxu0 0.0
    %1611 = vmatpush1.msra.mxu0 0.0
    %1612 = vmatprep.subr.mxu0 0.0
    %1613 = vmatpush1.msra.mxu0 0.0
    %1614 = vmatprep.subr.mxu0 0.0
    %1615 = vmatpush1.msra.mxu0 0.0
    %1616 = vmatprep.subr.mxu0 0.0
    %1617 = vmatpush1.msra.mxu0 0.0
    %1618 = vmatprep.subr.mxu0 0.0
    %1619 = vmatpush1.msra.mxu0 0.0
    %1620 = vmatprep.subr.mxu0 0.0
    %1621 = vmatpush1.msra.mxu0 0.0
    %1622 = vmatprep.subr.mxu0 0.0
    %1623 = vmatpush1.msra.mxu0 0.0
    %1624 = vmatprep.subr.mxu0 0.0
    %1625 = vmatpush1.msra.mxu0 0.0
    %1626 = vmatprep.subr.mxu0 0.0
    %1627 = vmatpush1.msra.mxu0 0.0
    %1628 = vmatprep.mubr.f32.mxu0 0.0
    %1629 = vmatmul.mubr.f32.gmra.mrb[0].mxu0 %v1562
    %v1630 = vpop.f32.mrb[0].mxu0
    %v1631 = vadd.f32 0.0, %v1630
    %v1632 = vpop.f32.mrb[0].mxu0
    %1633 = vdwg.mxu0
    %v1635 = vsel %vm250, %v1560, 0
    %1637 = vmatprep.subr.mxu0 0.0
    %1638 = vmatpush1.msra.mxu0 %v1384
    %1639 = vmatprep.subr.mxu0 0.0
    %1640 = vmatpush1.msra.mxu0 0.0
    %1641 = vmatprep.subr.mxu0 0.0
    %1642 = vmatpush1.msra.mxu0 0.0
    %1643 = vmatprep.subr.mxu0 0.0
    %1644 = vmatpush1.msra.mxu0 0.0
    %1645 = vmatprep.subr.mxu0 0.0
    %1646 = vmatpush1.msra.mxu0 0.0
    %1647 = vmatprep.subr.mxu0 0.0
    %1648 = vmatpush1.msra.mxu0 0.0
    %1649 = vmatprep.subr.mxu0 0.0
    %1650 = vmatpush1.msra.mxu0 0.0
    %1651 = vmatprep.subr.mxu0 0.0
    %1652 = vmatpush1.msra.mxu0 0.0
    %1653 = vmatprep.subr.mxu0 0.0
    %1654 = vmatpush1.msra.mxu0 0.0
    %1655 = vmatprep.subr.mxu0 0.0
    %1656 = vmatpush1.msra.mxu0 0.0
    %1657 = vmatprep.subr.mxu0 0.0
    %1658 = vmatpush1.msra.mxu0 0.0
    %1659 = vmatprep.subr.mxu0 0.0
    %1660 = vmatpush1.msra.mxu0 0.0
    %1661 = vmatprep.subr.mxu0 0.0
    %1662 = vmatpush1.msra.mxu0 0.0
    %1663 = vmatprep.subr.mxu0 0.0
    %1664 = vmatpush1.msra.mxu0 0.0
    %1665 = vmatprep.subr.mxu0 0.0
    %1666 = vmatpush1.msra.mxu0 0.0
    %1667 = vmatprep.subr.mxu0 0.0
    %1668 = vmatpush1.msra.mxu0 0.0
    %1669 = vmatprep.subr.mxu0 0.0
    %1670 = vmatpush1.msra.mxu0 0.0
    %1671 = vmatprep.subr.mxu0 0.0
    %1672 = vmatpush1.msra.mxu0 0.0
    %1673 = vmatprep.subr.mxu0 0.0
    %1674 = vmatpush1.msra.mxu0 0.0
    %1675 = vmatprep.subr.mxu0 0.0
    %1676 = vmatpush1.msra.mxu0 0.0
    %1677 = vmatprep.subr.mxu0 0.0
    %1678 = vmatpush1.msra.mxu0 0.0
    %1679 = vmatprep.subr.mxu0 0.0
    %1680 = vmatpush1.msra.mxu0 0.0
    %1681 = vmatprep.subr.mxu0 0.0
    %1682 = vmatpush1.msra.mxu0 0.0
    %1683 = vmatprep.subr.mxu0 0.0
    %1684 = vmatpush1.msra.mxu0 0.0
    %1685 = vmatprep.subr.mxu0 0.0
    %1686 = vmatpush1.msra.mxu0 0.0
    %1687 = vmatprep.subr.mxu0 0.0
    %1688 = vmatpush1.msra.mxu0 0.0
    %1689 = vmatprep.subr.mxu0 0.0
    %1690 = vmatpush1.msra.mxu0 0.0
    %1691 = vmatprep.subr.mxu0 0.0
    %1692 = vmatpush1.msra.mxu0 0.0
    %1693 = vmatprep.subr.mxu0 0.0
    %1694 = vmatpush1.msra.mxu0 0.0
    %1695 = vmatprep.subr.mxu0 0.0
    %1696 = vmatpush1.msra.mxu0 0.0
    %1697 = vmatprep.subr.mxu0 0.0
    %1698 = vmatpush1.msra.mxu0 0.0
    %1699 = vmatprep.subr.mxu0 0.0
    %1700 = vmatpush1.msra.mxu0 0.0
    %1701 = vmatprep.mubr.f32.mxu0 0.0
    %1702 = vmatmul.mubr.f32.gmra.mrb[0].mxu0 %v1635
    %v1703 = vpop.f32.mrb[0].mxu0
    %v1704 = vadd.f32 0.0, %v1703
    %v1705 = vpop.f32.mrb[0].mxu0
    %1706 = vdwg.mxu0
    %v1707 = vpack.c.bf16 %v1704, %v1631
    %s1708 = scalar_lea.vmem %s4, 8
    %v1709 = vld [vmem:[%s1708] sm:$0xf]
    %v1711 = vsel %vm250, %v1707, 0
    %v1714 = vsel %vm1097, %v1709, 0
    %1716 = vmatprep.subr.bf16.mxu0 0
    %1717 = vmatpush1.bf16.msra.mxu0 %v1714
    %1718 = vmatprep.subr.bf16.mxu0 0
    %1719 = vmatpush1.bf16.msra.mxu0 0
    %1720 = vmatprep.subr.bf16.mxu0 0
    %1721 = vmatpush1.bf16.msra.mxu0 0
    %1722 = vmatprep.subr.bf16.mxu0 0
    %1723 = vmatpush1.bf16.msra.mxu0 0
    %1724 = vmatprep.subr.bf16.mxu0 0
    %1725 = vmatpush1.bf16.msra.mxu0 0
    %1726 = vmatprep.subr.bf16.mxu0 0
    %1727 = vmatpush1.bf16.msra.mxu0 0
    %1728 = vmatprep.subr.bf16.mxu0 0
    %1729 = vmatpush1.bf16.msra.mxu0 0
    %1730 = vmatprep.subr.bf16.mxu0 0
    %1731 = vmatpush1.bf16.msra.mxu0 0
    %1732 = vmatprep.subr.bf16.mxu0 0
    %1733 = vmatpush1.bf16.msra.mxu0 0
    %1734 = vmatprep.subr.bf16.mxu0 0
    %1735 = vmatpush1.bf16.msra.mxu0 0
    %1736 = vmatprep.subr.bf16.mxu0 0
    %1737 = vmatpush1.bf16.msra.mxu0 0
    %1738 = vmatprep.subr.bf16.mxu0 0
    %1739 = vmatpush1.bf16.msra.mxu0 0
    %1740 = vmatprep.subr.bf16.mxu0 0
    %1741 = vmatpush1.bf16.msra.mxu0 0
    %1742 = vmatprep.subr.bf16.mxu0 0
    %1743 = vmatpush1.bf16.msra.mxu0 0
    %1744 = vmatprep.subr.bf16.mxu0 0
    %1745 = vmatpush1.bf16.msra.mxu0 0
    %1746 = vmatprep.subr.bf16.mxu0 0
    %1747 = vmatpush1.bf16.msra.mxu0 0
    %1748 = vmatprep.mubr.bf16.mxu0 0
    %1749 = vmatmul.mubr.bf16.gmra.mrb[0].mxu0 %v1711
    %v1750 = vpop.f32.mrb[0].mxu0
    %v1751 = vadd.f32 0.0, %v1750
    %v1752 = vpop.f32.mrb[0].mxu0
    %v1753 = vpop.f32.mrb[0].mxu0
    %v1754 = vadd.f32 0.0, %v1753
    %v1755 = vpop.f32.mrb[0].mxu0
    %1756 = vdwg.mxu0
    %v1757 = vadd.f32 %v1183, %v1751
    %v1758 = vadd.f32 %v1186, %v1754
    %s1759 = scalar_lea.vmem %s2, 48
    %v1760 = vld [vmem:[%s1759] sm:$0xf]
    %v1761 = vld [vmem:[%s1759 + $0x4] sm:$0xf]
    %v1762 = vld [vmem:[%s1759 + $0x8] sm:$0xf]
    %v1763 = vld [vmem:[%s1759 + $0xc] sm:$0xf]
    %s1764 = scalar_lea.vmem %s3, 3
    %v1765 = vld [vmem:[%s1764] sm:$0x1]
    %v1767 = vlaneseq
    %v1768 = vshrl.u32 %v1767, 7
    %v1769 = vsub.s32 0, %v1768
    %v1770 = vrot.slane %v1765, %v1769
    %v1776 = vunpack.c.l.b16 %v1760
    %v1777 = vunpack.c.l.b16 %v1761
    %v1778 = vunpack.c.l.b16 %v1762
    %v1779 = vunpack.c.l.b16 %v1763
    %v1780 = vpack.c.b16 %v1777, %v1776
    %v1781 = vpack.c.b16 %v1779, %v1778
    %1784 = vmatprep.subr.bf16.mxu0 0
    %1785 = vmatpush1.bf16.msra.mxu0 %v1780
    %1786 = vmatprep.subr.bf16.mxu0 0
    %1787 = vmatpush1.bf16.msra.mxu0 %v1781
    %1788 = vmatprep.subr.bf16.mxu0 0
    %1789 = vmatpush1.bf16.msra.mxu0 0
    %1790 = vmatprep.subr.bf16.mxu0 0
    %1791 = vmatpush1.bf16.msra.mxu0 0
    %1792 = vmatprep.subr.bf16.mxu0 0
    %1793 = vmatpush1.bf16.msra.mxu0 0
    %1794 = vmatprep.subr.bf16.mxu0 0
    %1795 = vmatpush1.bf16.msra.mxu0 0
    %1796 = vmatprep.subr.bf16.mxu0 0
    %1797 = vmatpush1.bf16.msra.mxu0 0
    %1798 = vmatprep.subr.bf16.mxu0 0
    %1799 = vmatpush1.bf16.msra.mxu0 0
    %1800 = vmatprep.subr.bf16.mxu0 0
    %1801 = vmatpush1.bf16.msra.mxu0 0
    %1802 = vmatprep.subr.bf16.mxu0 0
    %1803 = vmatpush1.bf16.msra.mxu0 0
    %1804 = vmatprep.subr.bf16.mxu0 0
    %1805 = vmatpush1.bf16.msra.mxu0 0
    %1806 = vmatprep.subr.bf16.mxu0 0
    %1807 = vmatpush1.bf16.msra.mxu0 0
    %1808 = vmatprep.subr.bf16.mxu0 0
    %1809 = vmatpush1.bf16.msra.mxu0 0
    %1810 = vmatprep.subr.bf16.mxu0 0
    %1811 = vmatpush1.bf16.msra.mxu0 0
    %1812 = vmatprep.subr.bf16.mxu0 0
    %1813 = vmatpush1.bf16.msra.mxu0 0
    %1814 = vmatprep.subr.bf16.mxu0 0
    %1815 = vmatpush1.bf16.msra.mxu0 0
    %1816 = vmatprep.mubr.bf16.mxu0 0
    %1817 = vmatmul.mubr.bf16.gmra.mrb[0].mxu0 %v72
    %v1818 = vpop.f32.mrb[0].mxu0
    %v1819 = vadd.f32 %v1770, %v1818
    %v1820 = vpop.f32.mrb[0].mxu0
    %v1821 = vpop.f32.mrb[0].mxu0
    %v1822 = vadd.f32 %v1770, %v1821
    %v1823 = vpop.f32.mrb[0].mxu0
    %1824 = vdwg.mxu0
    %s1825 = scalar_lea.vmem %s2, 112
    %v1826 = vld [vmem:[%s1825] sm:$0xf]
    %v1827 = vld [vmem:[%s1825 + $0x4] sm:$0xf]
    %v1828 = vld [vmem:[%s1825 + $0x8] sm:$0xf]
    %v1829 = vld [vmem:[%s1825 + $0xc] sm:$0xf]
    %s1830 = scalar_lea.vmem %s3, 7
    %v1831 = vld [vmem:[%s1830] sm:$0x1]
    %v1833 = vlaneseq
    %v1834 = vshrl.u32 %v1833, 7
    %v1835 = vsub.s32 0, %v1834
    %v1836 = vrot.slane %v1831, %v1835
    %v1842 = vunpack.c.l.b16 %v1826
    %v1843 = vunpack.c.l.b16 %v1827
    %v1844 = vunpack.c.l.b16 %v1828
    %v1845 = vunpack.c.l.b16 %v1829
    %v1846 = vpack.c.b16 %v1843, %v1842
    %v1847 = vpack.c.b16 %v1845, %v1844
    %1850 = vmatprep.subr.bf16.mxu0 0
    %1851 = vmatpush1.bf16.msra.mxu0 %v1846
    %1852 = vmatprep.subr.bf16.mxu0 0
    %1853 = vmatpush1.bf16.msra.mxu0 %v1847
    %1854 = vmatprep.subr.bf16.mxu0 0
    %1855 = vmatpush1.bf16.msra.mxu0 0
    %1856 = vmatprep.subr.bf16.mxu0 0
    %1857 = vmatpush1.bf16.msra.mxu0 0
    %1858 = vmatprep.subr.bf16.mxu0 0
    %1859 = vmatpush1.bf16.msra.mxu0 0
    %1860 = vmatprep.subr.bf16.mxu0 0
    %1861 = vmatpush1.bf16.msra.mxu0 0
    %1862 = vmatprep.subr.bf16.mxu0 0
    %1863 = vmatpush1.bf16.msra.mxu0 0
    %1864 = vmatprep.subr.bf16.mxu0 0
    %1865 = vmatpush1.bf16.msra.mxu0 0
    %1866 = vmatprep.subr.bf16.mxu0 0
    %1867 = vmatpush1.bf16.msra.mxu0 0
    %1868 = vmatprep.subr.bf16.mxu0 0
    %1869 = vmatpush1.bf16.msra.mxu0 0
    %1870 = vmatprep.subr.bf16.mxu0 0
    %1871 = vmatpush1.bf16.msra.mxu0 0
    %1872 = vmatprep.subr.bf16.mxu0 0
    %1873 = vmatpush1.bf16.msra.mxu0 0
    %1874 = vmatprep.subr.bf16.mxu0 0
    %1875 = vmatpush1.bf16.msra.mxu0 0
    %1876 = vmatprep.subr.bf16.mxu0 0
    %1877 = vmatpush1.bf16.msra.mxu0 0
    %1878 = vmatprep.subr.bf16.mxu0 0
    %1879 = vmatpush1.bf16.msra.mxu0 0
    %1880 = vmatprep.subr.bf16.mxu0 0
    %1881 = vmatpush1.bf16.msra.mxu0 0
    %1882 = vmatprep.mubr.bf16.mxu0 0
    %1883 = vmatmul.mubr.bf16.gmra.mrb[0].mxu0 %v72
    %v1884 = vpop.f32.mrb[0].mxu0
    %v1885 = vadd.f32 %v1836, %v1884
    %v1886 = vpop.f32.mrb[0].mxu0
    %v1887 = vpop.f32.mrb[0].mxu0
    %v1888 = vadd.f32 %v1836, %v1887
    %v1889 = vpop.f32.mrb[0].mxu0
    %1890 = vdwg.mxu0
    %s1891 = scalar_lea.vmem %s2, 176
    %v1892 = vld [vmem:[%s1891] sm:$0xf]
    %v1893 = vld [vmem:[%s1891 + $0x4] sm:$0xf]
    %v1894 = vld [vmem:[%s1891 + $0x8] sm:$0xf]
    %v1895 = vld [vmem:[%s1891 + $0xc] sm:$0xf]
    %s1896 = scalar_lea.vmem %s3, 11
    %v1897 = vld [vmem:[%s1896] sm:$0x1]
    %v1899 = vlaneseq
    %v1900 = vshrl.u32 %v1899, 7
    %v1901 = vsub.s32 0, %v1900
    %v1902 = vrot.slane %v1897, %v1901
    %v1908 = vunpack.c.l.b16 %v1892
    %v1909 = vunpack.c.l.b16 %v1893
    %v1910 = vunpack.c.l.b16 %v1894
    %v1911 = vunpack.c.l.b16 %v1895
    %v1912 = vpack.c.b16 %v1909, %v1908
    %v1913 = vpack.c.b16 %v1911, %v1910
    %1916 = vmatprep.subr.bf16.mxu0 0
    %1917 = vmatpush1.bf16.msra.mxu0 %v1912
    %1918 = vmatprep.subr.bf16.mxu0 0
    %1919 = vmatpush1.bf16.msra.mxu0 %v1913
    %1920 = vmatprep.subr.bf16.mxu0 0
    %1921 = vmatpush1.bf16.msra.mxu0 0
    %1922 = vmatprep.subr.bf16.mxu0 0
    %1923 = vmatpush1.bf16.msra.mxu0 0
    %1924 = vmatprep.subr.bf16.mxu0 0
    %1925 = vmatpush1.bf16.msra.mxu0 0
    %1926 = vmatprep.subr.bf16.mxu0 0
    %1927 = vmatpush1.bf16.msra.mxu0 0
    %1928 = vmatprep.subr.bf16.mxu0 0
    %1929 = vmatpush1.bf16.msra.mxu0 0
    %1930 = vmatprep.subr.bf16.mxu0 0
    %1931 = vmatpush1.bf16.msra.mxu0 0
    %1932 = vmatprep.subr.bf16.mxu0 0
    %1933 = vmatpush1.bf16.msra.mxu0 0
    %1934 = vmatprep.subr.bf16.mxu0 0
    %1935 = vmatpush1.bf16.msra.mxu0 0
    %1936 = vmatprep.subr.bf16.mxu0 0
    %1937 = vmatpush1.bf16.msra.mxu0 0
    %1938 = vmatprep.subr.bf16.mxu0 0
    %1939 = vmatpush1.bf16.msra.mxu0 0
    %1940 = vmatprep.subr.bf16.mxu0 0
    %1941 = vmatpush1.bf16.msra.mxu0 0
    %1942 = vmatprep.subr.bf16.mxu0 0
    %1943 = vmatpush1.bf16.msra.mxu0 0
    %1944 = vmatprep.subr.bf16.mxu0 0
    %1945 = vmatpush1.bf16.msra.mxu0 0
    %1946 = vmatprep.subr.bf16.mxu0 0
    %1947 = vmatpush1.bf16.msra.mxu0 0
    %1948 = vmatprep.mubr.bf16.mxu0 0
    %1949 = vmatmul.mubr.bf16.gmra.mrb[0].mxu0 %v207
    %v1950 = vpop.f32.mrb[0].mxu0
    %v1951 = vadd.f32 %v1902, %v1950
    %v1952 = vpop.f32.mrb[0].mxu0
    %v1953 = vpop.f32.mrb[0].mxu0
    %v1954 = vadd.f32 %v1902, %v1953
    %v1955 = vpop.f32.mrb[0].mxu0
    %1956 = vdwg.mxu0
    %v1958 = vsel %vm250, %v1819, 0
    %v1961 = vsel %vm250, %v1885, 0
    %1963 = vmatprep.subr.mxu0 0.0
    %1964 = vmatpush1.xpose.msra.mxu0 %v1961
    %1965 = vmatprep.subr.mxu0 0.0
    %1966 = vmatpush1.xpose.msra.mxu0 0.0
    %1967 = vmatprep.subr.mxu0 0.0
    %1968 = vmatpush1.xpose.msra.mxu0 0.0
    %1969 = vmatprep.subr.mxu0 0.0
    %1970 = vmatpush1.xpose.msra.mxu0 0.0
    %1971 = vmatprep.subr.mxu0 0.0
    %1972 = vmatpush1.xpose.msra.mxu0 0.0
    %1973 = vmatprep.subr.mxu0 0.0
    %1974 = vmatpush1.xpose.msra.mxu0 0.0
    %1975 = vmatprep.subr.mxu0 0.0
    %1976 = vmatpush1.xpose.msra.mxu0 0.0
    %1977 = vmatprep.subr.mxu0 0.0
    %1978 = vmatpush1.xpose.msra.mxu0 0.0
    %1979 = vmatprep.subr.mxu0 0.0
    %1980 = vmatpush1.xpose.msra.mxu0 0.0
    %1981 = vmatprep.subr.mxu0 0.0
    %1982 = vmatpush1.xpose.msra.mxu0 0.0
    %1983 = vmatprep.subr.mxu0 0.0
    %1984 = vmatpush1.xpose.msra.mxu0 0.0
    %1985 = vmatprep.subr.mxu0 0.0
    %1986 = vmatpush1.xpose.msra.mxu0 0.0
    %1987 = vmatprep.subr.mxu0 0.0
    %1988 = vmatpush1.xpose.msra.mxu0 0.0
    %1989 = vmatprep.subr.mxu0 0.0
    %1990 = vmatpush1.xpose.msra.mxu0 0.0
    %1991 = vmatprep.subr.mxu0 0.0
    %1992 = vmatpush1.xpose.msra.mxu0 0.0
    %1993 = vmatprep.subr.mxu0 0.0
    %1994 = vmatpush1.xpose.msra.mxu0 0.0
    %1995 = vmatprep.subr.mxu0 0.0
    %1996 = vmatpush1.xpose.msra.mxu0 0.0
    %1997 = vmatprep.subr.mxu0 0.0
    %1998 = vmatpush1.xpose.msra.mxu0 0.0
    %1999 = vmatprep.subr.mxu0 0.0
    %2000 = vmatpush1.xpose.msra.mxu0 0.0
    %2001 = vmatprep.subr.mxu0 0.0
    %2002 = vmatpush1.xpose.msra.mxu0 0.0
    %2003 = vmatprep.subr.mxu0 0.0
    %2004 = vmatpush1.xpose.msra.mxu0 0.0
    %2005 = vmatprep.subr.mxu0 0.0
    %2006 = vmatpush1.xpose.msra.mxu0 0.0
    %2007 = vmatprep.subr.mxu0 0.0
    %2008 = vmatpush1.xpose.msra.mxu0 0.0
    %2009 = vmatprep.subr.mxu0 0.0
    %2010 = vmatpush1.xpose.msra.mxu0 0.0
    %2011 = vmatprep.subr.mxu0 0.0
    %2012 = vmatpush1.xpose.msra.mxu0 0.0
    %2013 = vmatprep.subr.mxu0 0.0
    %2014 = vmatpush1.xpose.msra.mxu0 0.0
    %2015 = vmatprep.subr.mxu0 0.0
    %2016 = vmatpush1.xpose.msra.mxu0 0.0
    %2017 = vmatprep.subr.mxu0 0.0
    %2018 = vmatpush1.xpose.msra.mxu0 0.0
    %2019 = vmatprep.subr.mxu0 0.0
    %2020 = vmatpush1.xpose.msra.mxu0 0.0
    %2021 = vmatprep.subr.mxu0 0.0
    %2022 = vmatpush1.xpose.msra.mxu0 0.0
    %2023 = vmatprep.subr.mxu0 0.0
    %2024 = vmatpush1.xpose.msra.mxu0 0.0
    %2025 = vmatprep.subr.mxu0 0.0
    %2026 = vmatpush1.xpose.msra.mxu0 0.0
    %2027 = vmatprep.mubr.f32.mxu0 0.0
    %2028 = vmatmul.mubr.f32.gmra.mrb[0].mxu0 %v1958
    %v2029 = vpop.f32.mrb[0].mxu0
    %v2030 = vadd.f32 0.0, %v2029
    %v2031 = vpop.f32.mrb[0].mxu0
    %2032 = vdwg.mxu0
    %v2034 = vsel %vm250, %v1822, 0
    %v2037 = vsel %vm250, %v1888, 0
    %2039 = vmatprep.subr.mxu0 0.0
    %2040 = vmatpush1.xpose.msra.mxu0 %v2037
    %2041 = vmatprep.subr.mxu0 0.0
    %2042 = vmatpush1.xpose.msra.mxu0 0.0
    %2043 = vmatprep.subr.mxu0 0.0
    %2044 = vmatpush1.xpose.msra.mxu0 0.0
    %2045 = vmatprep.subr.mxu0 0.0
    %2046 = vmatpush1.xpose.msra.mxu0 0.0
    %2047 = vmatprep.subr.mxu0 0.0
    %2048 = vmatpush1.xpose.msra.mxu0 0.0
    %2049 = vmatprep.subr.mxu0 0.0
    %2050 = vmatpush1.xpose.msra.mxu0 0.0
    %2051 = vmatprep.subr.mxu0 0.0
    %2052 = vmatpush1.xpose.msra.mxu0 0.0
    %2053 = vmatprep.subr.mxu0 0.0
    %2054 = vmatpush1.xpose.msra.mxu0 0.0
    %2055 = vmatprep.subr.mxu0 0.0
    %2056 = vmatpush1.xpose.msra.mxu0 0.0
    %2057 = vmatprep.subr.mxu0 0.0
    %2058 = vmatpush1.xpose.msra.mxu0 0.0
    %2059 = vmatprep.subr.mxu0 0.0
    %2060 = vmatpush1.xpose.msra.mxu0 0.0
    %2061 = vmatprep.subr.mxu0 0.0
    %2062 = vmatpush1.xpose.msra.mxu0 0.0
    %2063 = vmatprep.subr.mxu0 0.0
    %2064 = vmatpush1.xpose.msra.mxu0 0.0
    %2065 = vmatprep.subr.mxu0 0.0
    %2066 = vmatpush1.xpose.msra.mxu0 0.0
    %2067 = vmatprep.subr.mxu0 0.0
    %2068 = vmatpush1.xpose.msra.mxu0 0.0
    %2069 = vmatprep.subr.mxu0 0.0
    %2070 = vmatpush1.xpose.msra.mxu0 0.0
    %2071 = vmatprep.subr.mxu0 0.0
    %2072 = vmatpush1.xpose.msra.mxu0 0.0
    %2073 = vmatprep.subr.mxu0 0.0
    %2074 = vmatpush1.xpose.msra.mxu0 0.0
    %2075 = vmatprep.subr.mxu0 0.0
    %2076 = vmatpush1.xpose.msra.mxu0 0.0
    %2077 = vmatprep.subr.mxu0 0.0
    %2078 = vmatpush1.xpose.msra.mxu0 0.0
    %2079 = vmatprep.subr.mxu0 0.0
    %2080 = vmatpush1.xpose.msra.mxu0 0.0
    %2081 = vmatprep.subr.mxu0 0.0
    %2082 = vmatpush1.xpose.msra.mxu0 0.0
    %2083 = vmatprep.subr.mxu0 0.0
    %2084 = vmatpush1.xpose.msra.mxu0 0.0
    %2085 = vmatprep.subr.mxu0 0.0
    %2086 = vmatpush1.xpose.msra.mxu0 0.0
    %2087 = vmatprep.subr.mxu0 0.0
    %2088 = vmatpush1.xpose.msra.mxu0 0.0
    %2089 = vmatprep.subr.mxu0 0.0
    %2090 = vmatpush1.xpose.msra.mxu0 0.0
    %2091 = vmatprep.subr.mxu0 0.0
    %2092 = vmatpush1.xpose.msra.mxu0 0.0
    %2093 = vmatprep.subr.mxu0 0.0
    %2094 = vmatpush1.xpose.msra.mxu0 0.0
    %2095 = vmatprep.subr.mxu0 0.0
    %2096 = vmatpush1.xpose.msra.mxu0 0.0
    %2097 = vmatprep.subr.mxu0 0.0
    %2098 = vmatpush1.xpose.msra.mxu0 0.0
    %2099 = vmatprep.subr.mxu0 0.0
    %2100 = vmatpush1.xpose.msra.mxu0 0.0
    %2101 = vmatprep.subr.mxu0 0.0
    %2102 = vmatpush1.xpose.msra.mxu0 0.0
    %2103 = vmatprep.mubr.f32.mxu0 0.0
    %2104 = vmatmul.mubr.f32.gmra.mrb[0].mxu0 %v2034
    %v2105 = vpop.f32.mrb[0].mxu0
    %v2106 = vadd.f32 0.0, %v2105
    %v2107 = vpop.f32.mrb[0].mxu0
    %2108 = vdwg.mxu0
    %v2109 = vsel %vm250, %v2030, -inf
    %2110 = vmax.xlane.f32.xlu0 %v2109
    %v2111 = vpop.xlane.xlu0 %2110
    %v2112 = vsel %vm250, %v2106, -inf
    %2113 = vmax.xlane.f32.xlu0 %v2112
    %v2114 = vpop.xlane.xlu0 %2113
    %v2115 = vsub.f32 %v2030, %v2111
    %v2116 = vsub.f32 %v2106, %v2114
    %v2117 = vmul.f32 %v2115, 1.442695
    %v2118 = vpow.pop %v2117
    %v2119 = vmul.f32 %v2116, 1.442695
    %v2120 = vpow.pop %v2119
    %v2121 = vsel %vm250, %v2118, 0.0
    %2122 = vadd.xlane.f32.xlu0 %v2121
    %v2123 = vpop.xlane.xlu0 %2122
    %v2124 = vsel %vm250, %v2120, 0.0
    %2125 = vadd.xlane.f32.xlu0 %v2124
    %v2126 = vpop.xlane.xlu0 %2125
    %v2127 = vrcp.pop %v2123
    %v2128 = vmul.f32 %v2118, %v2127
    %v2129 = vrcp.pop %v2126
    %v2130 = vmul.f32 %v2120, %v2129
    %v2132 = vsel %vm250, %v2128, 0
    %2134 = vmatprep.subr.mxu0 0.0
    %2135 = vmatpush1.msra.mxu0 %v1951
    %2136 = vmatprep.subr.mxu0 0.0
    %2137 = vmatpush1.msra.mxu0 0.0
    %2138 = vmatprep.subr.mxu0 0.0
    %2139 = vmatpush1.msra.mxu0 0.0
    %2140 = vmatprep.subr.mxu0 0.0
    %2141 = vmatpush1.msra.mxu0 0.0
    %2142 = vmatprep.subr.mxu0 0.0
    %2143 = vmatpush1.msra.mxu0 0.0
    %2144 = vmatprep.subr.mxu0 0.0
    %2145 = vmatpush1.msra.mxu0 0.0
    %2146 = vmatprep.subr.mxu0 0.0
    %2147 = vmatpush1.msra.mxu0 0.0
    %2148 = vmatprep.subr.mxu0 0.0
    %2149 = vmatpush1.msra.mxu0 0.0
    %2150 = vmatprep.subr.mxu0 0.0
    %2151 = vmatpush1.msra.mxu0 0.0
    %2152 = vmatprep.subr.mxu0 0.0
    %2153 = vmatpush1.msra.mxu0 0.0
    %2154 = vmatprep.subr.mxu0 0.0
    %2155 = vmatpush1.msra.mxu0 0.0
    %2156 = vmatprep.subr.mxu0 0.0
    %2157 = vmatpush1.msra.mxu0 0.0
    %2158 = vmatprep.subr.mxu0 0.0
    %2159 = vmatpush1.msra.mxu0 0.0
    %2160 = vmatprep.subr.mxu0 0.0
    %2161 = vmatpush1.msra.mxu0 0.0
    %2162 = vmatprep.subr.mxu0 0.0
    %2163 = vmatpush1.msra.mxu0 0.0
    %2164 = vmatprep.subr.mxu0 0.0
    %2165 = vmatpush1.msra.mxu0 0.0
    %2166 = vmatprep.subr.mxu0 0.0
    %2167 = vmatpush1.msra.mxu0 0.0
    %2168 = vmatprep.subr.mxu0 0.0
    %2169 = vmatpush1.msra.mxu0 0.0
    %2170 = vmatprep.subr.mxu0 0.0
    %2171 = vmatpush1.msra.mxu0 0.0
    %2172 = vmatprep.subr.mxu0 0.0
    %2173 = vmatpush1.msra.mxu0 0.0
    %2174 = vmatprep.subr.mxu0 0.0
    %2175 = vmatpush1.msra.mxu0 0.0
    %2176 = vmatprep.subr.mxu0 0.0
    %2177 = vmatpush1.msra.mxu0 0.0
    %2178 = vmatprep.subr.mxu0 0.0
    %2179 = vmatpush1.msra.mxu0 0.0
    %2180 = vmatprep.subr.mxu0 0.0
    %2181 = vmatpush1.msra.mxu0 0.0
    %2182 = vmatprep.subr.mxu0 0.0
    %2183 = vmatpush1.msra.mxu0 0.0
    %2184 = vmatprep.subr.mxu0 0.0
    %2185 = vmatpush1.msra.mxu0 0.0
    %2186 = vmatprep.subr.mxu0 0.0
    %2187 = vmatpush1.msra.mxu0 0.0
    %2188 = vmatprep.subr.mxu0 0.0
    %2189 = vmatpush1.msra.mxu0 0.0
    %2190 = vmatprep.subr.mxu0 0.0
    %2191 = vmatpush1.msra.mxu0 0.0
    %2192 = vmatprep.subr.mxu0 0.0
    %2193 = vmatpush1.msra.mxu0 0.0
    %2194 = vmatprep.subr.mxu0 0.0
    %2195 = vmatpush1.msra.mxu0 0.0
    %2196 = vmatprep.subr.mxu0 0.0
    %2197 = vmatpush1.msra.mxu0 0.0
    %2198 = vmatprep.mubr.f32.mxu0 0.0
    %2199 = vmatmul.mubr.f32.gmra.mrb[0].mxu0 %v2132
    %v2200 = vpop.f32.mrb[0].mxu0
    %v2201 = vadd.f32 0.0, %v2200
    %v2202 = vpop.f32.mrb[0].mxu0
    %2203 = vdwg.mxu0
    %v2205 = vsel %vm250, %v2130, 0
    %2207 = vmatprep.subr.mxu0 0.0
    %2208 = vmatpush1.msra.mxu0 %v1954
    %2209 = vmatprep.subr.mxu0 0.0
    %2210 = vmatpush1.msra.mxu0 0.0
    %2211 = vmatprep.subr.mxu0 0.0
    %2212 = vmatpush1.msra.mxu0 0.0
    %2213 = vmatprep.subr.mxu0 0.0
    %2214 = vmatpush1.msra.mxu0 0.0
    %2215 = vmatprep.subr.mxu0 0.0
    %2216 = vmatpush1.msra.mxu0 0.0
    %2217 = vmatprep.subr.mxu0 0.0
    %2218 = vmatpush1.msra.mxu0 0.0
    %2219 = vmatprep.subr.mxu0 0.0
    %2220 = vmatpush1.msra.mxu0 0.0
    %2221 = vmatprep.subr.mxu0 0.0
    %2222 = vmatpush1.msra.mxu0 0.0
    %2223 = vmatprep.subr.mxu0 0.0
    %2224 = vmatpush1.msra.mxu0 0.0
    %2225 = vmatprep.subr.mxu0 0.0
    %2226 = vmatpush1.msra.mxu0 0.0
    %2227 = vmatprep.subr.mxu0 0.0
    %2228 = vmatpush1.msra.mxu0 0.0
    %2229 = vmatprep.subr.mxu0 0.0
    %2230 = vmatpush1.msra.mxu0 0.0
    %2231 = vmatprep.subr.mxu0 0.0
    %2232 = vmatpush1.msra.mxu0 0.0
    %2233 = vmatprep.subr.mxu0 0.0
    %2234 = vmatpush1.msra.mxu0 0.0
    %2235 = vmatprep.subr.mxu0 0.0
    %2236 = vmatpush1.msra.mxu0 0.0
    %2237 = vmatprep.subr.mxu0 0.0
    %2238 = vmatpush1.msra.mxu0 0.0
    %2239 = vmatprep.subr.mxu0 0.0
    %2240 = vmatpush1.msra.mxu0 0.0
    %2241 = vmatprep.subr.mxu0 0.0
    %2242 = vmatpush1.msra.mxu0 0.0
    %2243 = vmatprep.subr.mxu0 0.0
    %2244 = vmatpush1.msra.mxu0 0.0
    %2245 = vmatprep.subr.mxu0 0.0
    %2246 = vmatpush1.msra.mxu0 0.0
    %2247 = vmatprep.subr.mxu0 0.0
    %2248 = vmatpush1.msra.mxu0 0.0
    %2249 = vmatprep.subr.mxu0 0.0
    %2250 = vmatpush1.msra.mxu0 0.0
    %2251 = vmatprep.subr.mxu0 0.0
    %2252 = vmatpush1.msra.mxu0 0.0
    %2253 = vmatprep.subr.mxu0 0.0
    %2254 = vmatpush1.msra.mxu0 0.0
    %2255 = vmatprep.subr.mxu0 0.0
    %2256 = vmatpush1.msra.mxu0 0.0
    %2257 = vmatprep.subr.mxu0 0.0
    %2258 = vmatpush1.msra.mxu0 0.0
    %2259 = vmatprep.subr.mxu0 0.0
    %2260 = vmatpush1.msra.mxu0 0.0
    %2261 = vmatprep.subr.mxu0 0.0
    %2262 = vmatpush1.msra.mxu0 0.0
    %2263 = vmatprep.subr.mxu0 0.0
    %2264 = vmatpush1.msra.mxu0 0.0
    %2265 = vmatprep.subr.mxu0 0.0
    %2266 = vmatpush1.msra.mxu0 0.0
    %2267 = vmatprep.subr.mxu0 0.0
    %2268 = vmatpush1.msra.mxu0 0.0
    %2269 = vmatprep.subr.mxu0 0.0
    %2270 = vmatpush1.msra.mxu0 0.0
    %2271 = vmatprep.mubr.f32.mxu0 0.0
    %2272 = vmatmul.mubr.f32.gmra.mrb[0].mxu0 %v2205
    %v2273 = vpop.f32.mrb[0].mxu0
    %v2274 = vadd.f32 0.0, %v2273
    %v2275 = vpop.f32.mrb[0].mxu0
    %2276 = vdwg.mxu0
    %v2277 = vpack.c.bf16 %v2274, %v2201
    %s2278 = scalar_lea.vmem %s4, 12
    %v2279 = vld [vmem:[%s2278] sm:$0xf]
    %v2281 = vsel %vm250, %v2277, 0
    %v2284 = vsel %vm1097, %v2279, 0
    %2286 = vmatprep.subr.bf16.mxu0 0
    %2287 = vmatpush1.bf16.msra.mxu0 %v2284
    %2288 = vmatprep.subr.bf16.mxu0 0
    %2289 = vmatpush1.bf16.msra.mxu0 0
    %2290 = vmatprep.subr.bf16.mxu0 0
    %2291 = vmatpush1.bf16.msra.mxu0 0
    %2292 = vmatprep.subr.bf16.mxu0 0
    %2293 = vmatpush1.bf16.msra.mxu0 0
    %2294 = vmatprep.subr.bf16.mxu0 0
    %2295 = vmatpush1.bf16.msra.mxu0 0
    %2296 = vmatprep.subr.bf16.mxu0 0
    %2297 = vmatpush1.bf16.msra.mxu0 0
    %2298 = vmatprep.subr.bf16.mxu0 0
    %2299 = vmatpush1.bf16.msra.mxu0 0
    %2300 = vmatprep.subr.bf16.mxu0 0
    %2301 = vmatpush1.bf16.msra.mxu0 0
    %2302 = vmatprep.subr.bf16.mxu0 0
    %2303 = vmatpush1.bf16.msra.mxu0 0
    %2304 = vmatprep.subr.bf16.mxu0 0
    %2305 = vmatpush1.bf16.msra.mxu0 0
    %2306 = vmatprep.subr.bf16.mxu0 0
    %2307 = vmatpush1.bf16.msra.mxu0 0
    %2308 = vmatprep.subr.bf16.mxu0 0
    %2309 = vmatpush1.bf16.msra.mxu0 0
    %2310 = vmatprep.subr.bf16.mxu0 0
    %2311 = vmatpush1.bf16.msra.mxu0 0
    %2312 = vmatprep.subr.bf16.mxu0 0
    %2313 = vmatpush1.bf16.msra.mxu0 0
    %2314 = vmatprep.subr.bf16.mxu0 0
    %2315 = vmatpush1.bf16.msra.mxu0 0
    %2316 = vmatprep.subr.bf16.mxu0 0
    %2317 = vmatpush1.bf16.msra.mxu0 0
    %2318 = vmatprep.mubr.bf16.mxu0 0
    %2319 = vmatmul.mubr.bf16.gmra.mrb[0].mxu0 %v2281
    %v2320 = vpop.f32.mrb[0].mxu0
    %v2321 = vadd.f32 0.0, %v2320
    %v2322 = vpop.f32.mrb[0].mxu0
    %v2323 = vpop.f32.mrb[0].mxu0
    %v2324 = vadd.f32 0.0, %v2323
    %v2325 = vpop.f32.mrb[0].mxu0
    %2326 = vdwg.mxu0
    %v2327 = vadd.f32 %v1757, %v2321
    %v2328 = vadd.f32 %v1758, %v2324
    %v2329 = vlaneseq
    %v2330 = vshrl.u32 %v2329, 7
    %v2331 = vsub.s32 0, %v2330
    %v2332 = vrot.slane %v41, %v2331
    %v2333 = vadd.f32 %v2327, %v2332
    %v2334 = vadd.f32 %v2328, %v2332
    %v2335 = vadd.f32 %v37, %v2333
    %v2336 = vadd.f32 %v38, %v2334
    %v2337 = vsel %vm70, %v2335, 0.0
    %2338 = vadd.xlane.f32.xlu0 %v2337
    %v2339 = vpop.xlane.xlu0 %2338
    %v2340 = vsel %vm70, %v2336, 0.0
    %2341 = vadd.xlane.f32.xlu0 %v2340
    %v2342 = vpop.xlane.xlu0 %2341
    %v2343 = vrcp.pop 32.0
    %v2344 = vmul.f32 %v2339, %v2343
    %v2345 = vmul.f32 %v2342, %v2343
    %v2346 = vsub.f32 %v2335, %v2344
    %v2347 = vsub.f32 %v2336, %v2345
    %v2348 = vmul.f32 %v2346, %v2346
    %v2349 = vmul.f32 %v2347, %v2347
    %v2350 = vsel %vm70, %v2348, 0.0
    %2351 = vadd.xlane.f32.xlu0 %v2350
    %v2352 = vpop.xlane.xlu0 %2351
    %v2353 = vsel %vm70, %v2349, 0.0
    %2354 = vadd.xlane.f32.xlu0 %v2353
    %v2355 = vpop.xlane.xlu0 %2354
    %v2356 = vmul.f32 %v2352, %v2343
    %v2357 = vmul.f32 %v2355, %v2343
    %v2358 = vadd.f32 %v2356, 1e-05
    %v2359 = vadd.f32 %v2357, 1e-05
    %v2360 = vrsqrt.pop %v2358
    %v2361 = vrsqrt.pop %v2359
    %v2362 = vmul.f32 %v2346, %v2360
    %v2363 = vmul.f32 %v2347, %v2361
    %v2364 = vlaneseq
    %v2365 = vshrl.u32 %v2364, 7
    %v2366 = vsub.s32 2, %v2365
    %v2367 = vrot.slane %v41, %v2366
    %v2368 = vmul.f32 %v2362, %v2367
    %v2369 = vmul.f32 %v2363, %v2367
    %v2370 = vlaneseq
    %v2371 = vshrl.u32 %v2370, 7
    %v2372 = vsub.s32 3, %v2371
    %v2373 = vrot.slane %v41, %v2372
    %v2374 = vadd.f32 %v2368, %v2373
    %v2375 = vadd.f32 %v2369, %v2373
    %v2376 = vpack.c.bf16 %v2375, %v2374
    %v2377 = vld [vmem:[%s5] sm:$0xf]
    %v2378 = vld [vmem:[%s5 + $0x4] sm:$0xf]
    %v2379 = vld [vmem:[%s5 + $0x8] sm:$0xf]
    %v2380 = vld [vmem:[%s5 + $0xc] sm:$0xf]
    %v2382 = vlaneseq
    %v2383 = vshrl.u32 %v2382, 7
    %v2384 = vsub.s32 0, %v2383
    %v2385 = vrot.slane %v42, %v2384
    %v2391 = vunpack.c.l.b16 %v2377
    %v2392 = vunpack.c.l.b16 %v2378
    %v2393 = vunpack.c.l.b16 %v2379
    %v2394 = vunpack.c.l.b16 %v2380
    %v2395 = vpack.c.b16 %v2392, %v2391
    %v2396 = vpack.c.b16 %v2394, %v2393
    %v2400 = vsel %vm70, %v2376, 0
    %2402 = vmatprep.subr.bf16.mxu0 0
    %2403 = vmatpush1.bf16.msra.mxu0 %v2395
    %2404 = vmatprep.subr.bf16.mxu0 0
    %2405 = vmatpush1.bf16.msra.mxu0 %v2396
    %2406 = vmatprep.subr.bf16.mxu0 0
    %2407 = vmatpush1.bf16.msra.mxu0 0
    %2408 = vmatprep.subr.bf16.mxu0 0
    %2409 = vmatpush1.bf16.msra.mxu0 0
    %2410 = vmatprep.subr.bf16.mxu0 0
    %2411 = vmatpush1.bf16.msra.mxu0 0
    %2412 = vmatprep.subr.bf16.mxu0 0
    %2413 = vmatpush1.bf16.msra.mxu0 0
    %2414 = vmatprep.subr.bf16.mxu0 0
    %2415 = vmatpush1.bf16.msra.mxu0 0
    %2416 = vmatprep.subr.bf16.mxu0 0
    %2417 = vmatpush1.bf16.msra.mxu0 0
    %2418 = vmatprep.subr.bf16.mxu0 0
    %2419 = vmatpush1.bf16.msra.mxu0 0
    %2420 = vmatprep.subr.bf16.mxu0 0
    %2421 = vmatpush1.bf16.msra.mxu0 0
    %2422 = vmatprep.subr.bf16.mxu0 0
    %2423 = vmatpush1.bf16.msra.mxu0 0
    %2424 = vmatprep.subr.bf16.mxu0 0
    %2425 = vmatpush1.bf16.msra.mxu0 0
    %2426 = vmatprep.subr.bf16.mxu0 0
    %2427 = vmatpush1.bf16.msra.mxu0 0
    %2428 = vmatprep.subr.bf16.mxu0 0
    %2429 = vmatpush1.bf16.msra.mxu0 0
    %2430 = vmatprep.subr.bf16.mxu0 0
    %2431 = vmatpush1.bf16.msra.mxu0 0
    %2432 = vmatprep.subr.bf16.mxu0 0
    %2433 = vmatpush1.bf16.msra.mxu0 0
    %2434 = vmatprep.mubr.bf16.mxu0 0
    %2435 = vmatmul.mubr.bf16.gmra.mrb[0].mxu0 %v2400
    %v2436 = vpop.f32.mrb[0].mxu0
    %v2437 = vadd.f32 %v2385, %v2436
    %v2438 = vpop.f32.mrb[0].mxu0
    %v2439 = vpop.f32.mrb[0].mxu0
    %v2440 = vadd.f32 %v2385, %v2439
    %v2441 = vpop.f32.mrb[0].mxu0
    %2442 = vdwg.mxu0
    %v2443 = vmax.f32 %v2437, 0.0
    %v2444 = vmax.f32 %v2440, 0.0
    %v2445 = vpack.c.bf16 %v2444, %v2443
    %v2446 = vld [vmem:[%s6] sm:$0xf]
    %v2447 = vld [vmem:[%s6 + $0x4] sm:$0xf]
    %v2448 = vld [vmem:[%s6 + $0x8] sm:$0xf]
    %v2449 = vld [vmem:[%s6 + $0xc] sm:$0xf]
    %v2450 = vld [vmem:[%s6 + $0x10] sm:$0xf]
    %v2451 = vld [vmem:[%s6 + $0x14] sm:$0xf]
    %v2452 = vld [vmem:[%s6 + $0x18] sm:$0xf]
    %v2453 = vld [vmem:[%s6 + $0x1c] sm:$0xf]
    %v2454 = vlaneseq
    %v2455 = vshrl.u32 %v2454, 7
    %v2456 = vsub.s32 1, %v2455
    %v2457 = vrot.slane %v41, %v2456
    %v2466 = vunpack.c.l.b16 %v2446
    %v2467 = vunpack.c.l.b16 %v2447
    %v2468 = vunpack.c.l.b16 %v2448
    %v2469 = vunpack.c.l.b16 %v2449
    %v2470 = vunpack.c.l.b16 %v2450
    %v2471 = vunpack.c.l.b16 %v2451
    %v2472 = vunpack.c.l.b16 %v2452
    %v2473 = vunpack.c.l.b16 %v2453
    %v2474 = vpack.c.b16 %v2467, %v2466
    %v2475 = vpack.c.b16 %v2469, %v2468
    %v2476 = vpack.c.b16 %v2471, %v2470
    %v2477 = vpack.c.b16 %v2473, %v2472
    %vm2482 = vcmask 523264
    %v2484 = vsel %vm2482, %v2445, 0
    %2486 = vmatprep.subr.bf16.mxu0 0
    %2487 = vmatpush1.bf16.msra.mxu0 %v2474
    %2488 = vmatprep.subr.bf16.mxu0 0
    %2489 = vmatpush1.bf16.msra.mxu0 %v2475
    %2490 = vmatprep.subr.bf16.mxu0 0
    %2491 = vmatpush1.bf16.msra.mxu0 %v2476
    %2492 = vmatprep.subr.bf16.mxu0 0
    %2493 = vmatpush1.bf16.msra.mxu0 %v2477
    %2494 = vmatprep.subr.bf16.mxu0 0
    %2495 = vmatpush1.bf16.msra.mxu0 0
    %2496 = vmatprep.subr.bf16.mxu0 0
    %2497 = vmatpush1.bf16.msra.mxu0 0
    %2498 = vmatprep.subr.bf16.mxu0 0
    %2499 = vmatpush1.bf16.msra.mxu0 0
    %2500 = vmatprep.subr.bf16.mxu0 0
    %2501 = vmatpush1.bf16.msra.mxu0 0
    %2502 = vmatprep.subr.bf16.mxu0 0
    %2503 = vmatpush1.bf16.msra.mxu0 0
    %2504 = vmatprep.subr.bf16.mxu0 0
    %2505 = vmatpush1.bf16.msra.mxu0 0
    %2506 = vmatprep.subr.bf16.mxu0 0
    %2507 = vmatpush1.bf16.msra.mxu0 0
    %2508 = vmatprep.subr.bf16.mxu0 0
    %2509 = vmatpush1.bf16.msra.mxu0 0
    %2510 = vmatprep.subr.bf16.mxu0 0
    %2511 = vmatpush1.bf16.msra.mxu0 0
    %2512 = vmatprep.subr.bf16.mxu0 0
    %2513 = vmatpush1.bf16.msra.mxu0 0
    %2514 = vmatprep.subr.bf16.mxu0 0
    %2515 = vmatpush1.bf16.msra.mxu0 0
    %2516 = vmatprep.subr.bf16.mxu0 0
    %2517 = vmatpush1.bf16.msra.mxu0 0
    %2518 = vmatprep.mubr.bf16.mxu0 0
    %2519 = vmatmul.mubr.bf16.gmra.mrb[0].mxu0 %v2484
    %v2520 = vpop.f32.mrb[0].mxu0
    %v2521 = vadd.f32 %v2457, %v2520
    %v2522 = vpop.f32.mrb[0].mxu0
    %v2523 = vpop.f32.mrb[0].mxu0
    %v2524 = vadd.f32 %v2457, %v2523
    %v2525 = vpop.f32.mrb[0].mxu0
    %2526 = vdwg.mxu0
    %v2527 = vadd.f32 %v2374, %v2521
    %v2528 = vadd.f32 %v2375, %v2524
    %v2529 = vsel %vm70, %v2527, 0.0
    %2530 = vadd.xlane.f32.xlu0 %v2529
    %v2531 = vpop.xlane.xlu0 %2530
    %v2532 = vsel %vm70, %v2528, 0.0
    %2533 = vadd.xlane.f32.xlu0 %v2532
    %v2534 = vpop.xlane.xlu0 %2533
    %v2535 = vmul.f32 %v2531, %v2343
    %v2536 = vmul.f32 %v2534, %v2343
    %v2537 = vsub.f32 %v2527, %v2535
    %v2538 = vsub.f32 %v2528, %v2536
    %v2539 = vmul.f32 %v2537, %v2537
    %v2540 = vmul.f32 %v2538, %v2538
    %v2541 = vsel %vm70, %v2539, 0.0
    %2542 = vadd.xlane.f32.xlu0 %v2541
    %v2543 = vpop.xlane.xlu0 %2542
    %v2544 = vsel %vm70, %v2540, 0.0
    %2545 = vadd.xlane.f32.xlu0 %v2544
    %v2546 = vpop.xlane.xlu0 %2545
    %v2547 = vmul.f32 %v2543, %v2343
    %v2548 = vmul.f32 %v2546, %v2343
    %v2549 = vadd.f32 %v2547, 1e-05
    %v2550 = vadd.f32 %v2548, 1e-05
    %v2551 = vrsqrt.pop %v2549
    %v2552 = vrsqrt.pop %v2550
    %v2553 = vmul.f32 %v2537, %v2551
    %v2554 = vmul.f32 %v2538, %v2552
    %v2555 = vlaneseq
    %v2556 = vshrl.u32 %v2555, 7
    %v2557 = vsub.s32 4, %v2556
    %v2558 = vrot.slane %v41, %v2557
    %v2559 = vmul.f32 %v2553, %v2558
    %v2560 = vmul.f32 %v2554, %v2558
    %v2561 = vlaneseq
    %v2562 = vshrl.u32 %v2561, 7
    %v2563 = vsub.s32 5, %v2562
    %v2564 = vrot.slane %v41, %v2563
    %v2565 = vadd.f32 %v2559, %v2564
    %v2566 = vadd.f32 %v2560, %v2564
    %s2567 = scalar_lea.vmem %s7, 8
    %v2568 = vld [vmem:[%s2567] sm:$0x3f]
    %s2569 = scalar_lea.vmem %s8, 1
    %v2570 = vld [vmem:[%s2569] sm:$0x1]
    %v2571 = vadd.f32 %v2565, %v39
    %v2572 = vadd.f32 %v2566, %v40
    %v2573 = vpack.c.bf16 %v2572, %v2571
    %v2574 = vpack.c.bf16 %v2566, %v2565
    %s2575 = scalar_lea.vmem %s2, 192
    %v2576 = vld [vmem:[%s2575] sm:$0xf]
    %v2577 = vld [vmem:[%s2575 + $0x4] sm:$0xf]
    %v2578 = vld [vmem:[%s2575 + $0x8] sm:$0xf]
    %v2579 = vld [vmem:[%s2575 + $0xc] sm:$0xf]
    %s2580 = scalar_lea.vmem %s3, 12
    %v2581 = vld [vmem:[%s2580] sm:$0x1]
    %v2583 = vlaneseq
    %v2584 = vshrl.u32 %v2583, 7
    %v2585 = vsub.s32 0, %v2584
    %v2586 = vrot.slane %v2581, %v2585
    %v2592 = vunpack.c.l.b16 %v2576
    %v2593 = vunpack.c.l.b16 %v2577
    %v2594 = vunpack.c.l.b16 %v2578
    %v2595 = vunpack.c.l.b16 %v2579
    %v2596 = vpack.c.b16 %v2593, %v2592
    %v2597 = vpack.c.b16 %v2595, %v2594
    %v2601 = vsel %vm70, %v2573, 0
    %2603 = vmatprep.subr.bf16.mxu0 0
    %2604 = vmatpush1.bf16.msra.mxu0 %v2596
    %2605 = vmatprep.subr.bf16.mxu0 0
    %2606 = vmatpush1.bf16.msra.mxu0 %v2597
    %2607 = vmatprep.subr.bf16.mxu0 0
    %2608 = vmatpush1.bf16.msra.mxu0 0
    %2609 = vmatprep.subr.bf16.mxu0 0
    %2610 = vmatpush1.bf16.msra.mxu0 0
    %2611 = vmatprep.subr.bf16.mxu0 0
    %2612 = vmatpush1.bf16.msra.mxu0 0
    %2613 = vmatprep.subr.bf16.mxu0 0
    %2614 = vmatpush1.bf16.msra.mxu0 0
    %2615 = vmatprep.subr.bf16.mxu0 0
    %2616 = vmatpush1.bf16.msra.mxu0 0
    %2617 = vmatprep.subr.bf16.mxu0 0
    %2618 = vmatpush1.bf16.msra.mxu0 0
    %2619 = vmatprep.subr.bf16.mxu0 0
    %2620 = vmatpush1.bf16.msra.mxu0 0
    %2621 = vmatprep.subr.bf16.mxu0 0
    %2622 = vmatpush1.bf16.msra.mxu0 0
    %2623 = vmatprep.subr.bf16.mxu0 0
    %2624 = vmatpush1.bf16.msra.mxu0 0
    %2625 = vmatprep.subr.bf16.mxu0 0
    %2626 = vmatpush1.bf16.msra.mxu0 0
    %2627 = vmatprep.subr.bf16.mxu0 0
    %2628 = vmatpush1.bf16.msra.mxu0 0
    %2629 = vmatprep.subr.bf16.mxu0 0
    %2630 = vmatpush1.bf16.msra.mxu0 0
    %2631 = vmatprep.subr.bf16.mxu0 0
    %2632 = vmatpush1.bf16.msra.mxu0 0
    %2633 = vmatprep.subr.bf16.mxu0 0
    %2634 = vmatpush1.bf16.msra.mxu0 0
    %2635 = vmatprep.mubr.bf16.mxu0 0
    %2636 = vmatmul.mubr.bf16.gmra.mrb[0].mxu0 %v2601
    %v2637 = vpop.f32.mrb[0].mxu0
    %v2638 = vadd.f32 %v2586, %v2637
    %v2639 = vpop.f32.mrb[0].mxu0
    %v2640 = vpop.f32.mrb[0].mxu0
    %v2641 = vadd.f32 %v2586, %v2640
    %v2642 = vpop.f32.mrb[0].mxu0
    %2643 = vdwg.mxu0
    %s2644 = scalar_lea.vmem %s2, 256
    %v2645 = vld [vmem:[%s2644] sm:$0xf]
    %v2646 = vld [vmem:[%s2644 + $0x4] sm:$0xf]
    %v2647 = vld [vmem:[%s2644 + $0x8] sm:$0xf]
    %v2648 = vld [vmem:[%s2644 + $0xc] sm:$0xf]
    %s2649 = scalar_lea.vmem %s3, 16
    %v2650 = vld [vmem:[%s2649] sm:$0x1]
    %v2652 = vlaneseq
    %v2653 = vshrl.u32 %v2652, 7
    %v2654 = vsub.s32 0, %v2653
    %v2655 = vrot.slane %v2650, %v2654
    %v2661 = vunpack.c.l.b16 %v2645
    %v2662 = vunpack.c.l.b16 %v2646
    %v2663 = vunpack.c.l.b16 %v2647
    %v2664 = vunpack.c.l.b16 %v2648
    %v2665 = vpack.c.b16 %v2662, %v2661
    %v2666 = vpack.c.b16 %v2664, %v2663
    %2669 = vmatprep.subr.bf16.mxu0 0
    %2670 = vmatpush1.bf16.msra.mxu0 %v2665
    %2671 = vmatprep.subr.bf16.mxu0 0
    %2672 = vmatpush1.bf16.msra.mxu0 %v2666
    %2673 = vmatprep.subr.bf16.mxu0 0
    %2674 = vmatpush1.bf16.msra.mxu0 0
    %2675 = vmatprep.subr.bf16.mxu0 0
    %2676 = vmatpush1.bf16.msra.mxu0 0
    %2677 = vmatprep.subr.bf16.mxu0 0
    %2678 = vmatpush1.bf16.msra.mxu0 0
    %2679 = vmatprep.subr.bf16.mxu0 0
    %2680 = vmatpush1.bf16.msra.mxu0 0
    %2681 = vmatprep.subr.bf16.mxu0 0
    %2682 = vmatpush1.bf16.msra.mxu0 0
    %2683 = vmatprep.subr.bf16.mxu0 0
    %2684 = vmatpush1.bf16.msra.mxu0 0
    %2685 = vmatprep.subr.bf16.mxu0 0
    %2686 = vmatpush1.bf16.msra.mxu0 0
    %2687 = vmatprep.subr.bf16.mxu0 0
    %2688 = vmatpush1.bf16.msra.mxu0 0
    %2689 = vmatprep.subr.bf16.mxu0 0
    %2690 = vmatpush1.bf16.msra.mxu0 0
    %2691 = vmatprep.subr.bf16.mxu0 0
    %2692 = vmatpush1.bf16.msra.mxu0 0
    %2693 = vmatprep.subr.bf16.mxu0 0
    %2694 = vmatpush1.bf16.msra.mxu0 0
    %2695 = vmatprep.subr.bf16.mxu0 0
    %2696 = vmatpush1.bf16.msra.mxu0 0
    %2697 = vmatprep.subr.bf16.mxu0 0
    %2698 = vmatpush1.bf16.msra.mxu0 0
    %2699 = vmatprep.subr.bf16.mxu0 0
    %2700 = vmatpush1.bf16.msra.mxu0 0
    %2701 = vmatprep.mubr.bf16.mxu0 0
    %2702 = vmatmul.mubr.bf16.gmra.mrb[0].mxu0 %v2601
    %v2703 = vpop.f32.mrb[0].mxu0
    %v2704 = vadd.f32 %v2655, %v2703
    %v2705 = vpop.f32.mrb[0].mxu0
    %v2706 = vpop.f32.mrb[0].mxu0
    %v2707 = vadd.f32 %v2655, %v2706
    %v2708 = vpop.f32.mrb[0].mxu0
    %2709 = vdwg.mxu0
    %s2710 = scalar_lea.vmem %s2, 320
    %v2711 = vld [vmem:[%s2710] sm:$0xf]
    %v2712 = vld [vmem:[%s2710 + $0x4] sm:$0xf]
    %v2713 = vld [vmem:[%s2710 + $0x8] sm:$0xf]
    %v2714 = vld [vmem:[%s2710 + $0xc] sm:$0xf]
    %s2715 = scalar_lea.vmem %s3, 20
    %v2716 = vld [vmem:[%s2715] sm:$0x1]
    %v2718 = vlaneseq
    %v2719 = vshrl.u32 %v2718, 7
    %v2720 = vsub.s32 0, %v2719
    %v2721 = vrot.slane %v2716, %v2720
    %v2727 = vunpack.c.l.b16 %v2711
    %v2728 = vunpack.c.l.b16 %v2712
    %v2729 = vunpack.c.l.b16 %v2713
    %v2730 = vunpack.c.l.b16 %v2714
    %v2731 = vpack.c.b16 %v2728, %v2727
    %v2732 = vpack.c.b16 %v2730, %v2729
    %v2736 = vsel %vm70, %v2574, 0
    %2738 = vmatprep.subr.bf16.mxu0 0
    %2739 = vmatpush1.bf16.msra.mxu0 %v2731
    %2740 = vmatprep.subr.bf16.mxu0 0
    %2741 = vmatpush1.bf16.msra.mxu0 %v2732
    %2742 = vmatprep.subr.bf16.mxu0 0
    %2743 = vmatpush1.bf16.msra.mxu0 0
    %2744 = vmatprep.subr.bf16.mxu0 0
    %2745 = vmatpush1.bf16.msra.mxu0 0
    %2746 = vmatprep.subr.bf16.mxu0 0
    %2747 = vmatpush1.bf16.msra.mxu0 0
    %2748 = vmatprep.subr.bf16.mxu0 0
    %2749 = vmatpush1.bf16.msra.mxu0 0
    %2750 = vmatprep.subr.bf16.mxu0 0
    %2751 = vmatpush1.bf16.msra.mxu0 0
    %2752 = vmatprep.subr.bf16.mxu0 0
    %2753 = vmatpush1.bf16.msra.mxu0 0
    %2754 = vmatprep.subr.bf16.mxu0 0
    %2755 = vmatpush1.bf16.msra.mxu0 0
    %2756 = vmatprep.subr.bf16.mxu0 0
    %2757 = vmatpush1.bf16.msra.mxu0 0
    %2758 = vmatprep.subr.bf16.mxu0 0
    %2759 = vmatpush1.bf16.msra.mxu0 0
    %2760 = vmatprep.subr.bf16.mxu0 0
    %2761 = vmatpush1.bf16.msra.mxu0 0
    %2762 = vmatprep.subr.bf16.mxu0 0
    %2763 = vmatpush1.bf16.msra.mxu0 0
    %2764 = vmatprep.subr.bf16.mxu0 0
    %2765 = vmatpush1.bf16.msra.mxu0 0
    %2766 = vmatprep.subr.bf16.mxu0 0
    %2767 = vmatpush1.bf16.msra.mxu0 0
    %2768 = vmatprep.subr.bf16.mxu0 0
    %2769 = vmatpush1.bf16.msra.mxu0 0
    %2770 = vmatprep.mubr.bf16.mxu0 0
    %2771 = vmatmul.mubr.bf16.gmra.mrb[0].mxu0 %v2736
    %v2772 = vpop.f32.mrb[0].mxu0
    %v2773 = vadd.f32 %v2721, %v2772
    %v2774 = vpop.f32.mrb[0].mxu0
    %v2775 = vpop.f32.mrb[0].mxu0
    %v2776 = vadd.f32 %v2721, %v2775
    %v2777 = vpop.f32.mrb[0].mxu0
    %2778 = vdwg.mxu0
    %v2780 = vsel %vm250, %v2638, 0
    %v2783 = vsel %vm250, %v2704, 0
    %2785 = vmatprep.subr.mxu0 0.0
    %2786 = vmatpush1.xpose.msra.mxu0 %v2783
    %2787 = vmatprep.subr.mxu0 0.0
    %2788 = vmatpush1.xpose.msra.mxu0 0.0
    %2789 = vmatprep.subr.mxu0 0.0
    %2790 = vmatpush1.xpose.msra.mxu0 0.0
    %2791 = vmatprep.subr.mxu0 0.0
    %2792 = vmatpush1.xpose.msra.mxu0 0.0
    %2793 = vmatprep.subr.mxu0 0.0
    %2794 = vmatpush1.xpose.msra.mxu0 0.0
    %2795 = vmatprep.subr.mxu0 0.0
    %2796 = vmatpush1.xpose.msra.mxu0 0.0
    %2797 = vmatprep.subr.mxu0 0.0
    %2798 = vmatpush1.xpose.msra.mxu0 0.0
    %2799 = vmatprep.subr.mxu0 0.0
    %2800 = vmatpush1.xpose.msra.mxu0 0.0
    %2801 = vmatprep.subr.mxu0 0.0
    %2802 = vmatpush1.xpose.msra.mxu0 0.0
    %2803 = vmatprep.subr.mxu0 0.0
    %2804 = vmatpush1.xpose.msra.mxu0 0.0
    %2805 = vmatprep.subr.mxu0 0.0
    %2806 = vmatpush1.xpose.msra.mxu0 0.0
    %2807 = vmatprep.subr.mxu0 0.0
    %2808 = vmatpush1.xpose.msra.mxu0 0.0
    %2809 = vmatprep.subr.mxu0 0.0
    %2810 = vmatpush1.xpose.msra.mxu0 0.0
    %2811 = vmatprep.subr.mxu0 0.0
    %2812 = vmatpush1.xpose.msra.mxu0 0.0
    %2813 = vmatprep.subr.mxu0 0.0
    %2814 = vmatpush1.xpose.msra.mxu0 0.0
    %2815 = vmatprep.subr.mxu0 0.0
    %2816 = vmatpush1.xpose.msra.mxu0 0.0
    %2817 = vmatprep.subr.mxu0 0.0
    %2818 = vmatpush1.xpose.msra.mxu0 0.0
    %2819 = vmatprep.subr.mxu0 0.0
    %2820 = vmatpush1.xpose.msra.mxu0 0.0
    %2821 = vmatprep.subr.mxu0 0.0
    %2822 = vmatpush1.xpose.msra.mxu0 0.0
    %2823 = vmatprep.subr.mxu0 0.0
    %2824 = vmatpush1.xpose.msra.mxu0 0.0
    %2825 = vmatprep.subr.mxu0 0.0
    %2826 = vmatpush1.xpose.msra.mxu0 0.0
    %2827 = vmatprep.subr.mxu0 0.0
    %2828 = vmatpush1.xpose.msra.mxu0 0.0
    %2829 = vmatprep.subr.mxu0 0.0
    %2830 = vmatpush1.xpose.msra.mxu0 0.0
    %2831 = vmatprep.subr.mxu0 0.0
    %2832 = vmatpush1.xpose.msra.mxu0 0.0
    %2833 = vmatprep.subr.mxu0 0.0
    %2834 = vmatpush1.xpose.msra.mxu0 0.0
    %2835 = vmatprep.subr.mxu0 0.0
    %2836 = vmatpush1.xpose.msra.mxu0 0.0
    %2837 = vmatprep.subr.mxu0 0.0
    %2838 = vmatpush1.xpose.msra.mxu0 0.0
    %2839 = vmatprep.subr.mxu0 0.0
    %2840 = vmatpush1.xpose.msra.mxu0 0.0
    %2841 = vmatprep.subr.mxu0 0.0
    %2842 = vmatpush1.xpose.msra.mxu0 0.0
    %2843 = vmatprep.subr.mxu0 0.0
    %2844 = vmatpush1.xpose.msra.mxu0 0.0
    %2845 = vmatprep.subr.mxu0 0.0
    %2846 = vmatpush1.xpose.msra.mxu0 0.0
    %2847 = vmatprep.subr.mxu0 0.0
    %2848 = vmatpush1.xpose.msra.mxu0 0.0
    %2849 = vmatprep.mubr.f32.mxu0 0.0
    %2850 = vmatmul.mubr.f32.gmra.mrb[0].mxu0 %v2780
    %v2851 = vpop.f32.mrb[0].mxu0
    %v2852 = vadd.f32 0.0, %v2851
    %v2853 = vpop.f32.mrb[0].mxu0
    %2854 = vdwg.mxu0
    %v2856 = vsel %vm250, %v2641, 0
    %v2859 = vsel %vm250, %v2707, 0
    %2861 = vmatprep.subr.mxu0 0.0
    %2862 = vmatpush1.xpose.msra.mxu0 %v2859
    %2863 = vmatprep.subr.mxu0 0.0
    %2864 = vmatpush1.xpose.msra.mxu0 0.0
    %2865 = vmatprep.subr.mxu0 0.0
    %2866 = vmatpush1.xpose.msra.mxu0 0.0
    %2867 = vmatprep.subr.mxu0 0.0
    %2868 = vmatpush1.xpose.msra.mxu0 0.0
    %2869 = vmatprep.subr.mxu0 0.0
    %2870 = vmatpush1.xpose.msra.mxu0 0.0
    %2871 = vmatprep.subr.mxu0 0.0
    %2872 = vmatpush1.xpose.msra.mxu0 0.0
    %2873 = vmatprep.subr.mxu0 0.0
    %2874 = vmatpush1.xpose.msra.mxu0 0.0
    %2875 = vmatprep.subr.mxu0 0.0
    %2876 = vmatpush1.xpose.msra.mxu0 0.0
    %2877 = vmatprep.subr.mxu0 0.0
    %2878 = vmatpush1.xpose.msra.mxu0 0.0
    %2879 = vmatprep.subr.mxu0 0.0
    %2880 = vmatpush1.xpose.msra.mxu0 0.0
    %2881 = vmatprep.subr.mxu0 0.0
    %2882 = vmatpush1.xpose.msra.mxu0 0.0
    %2883 = vmatprep.subr.mxu0 0.0
    %2884 = vmatpush1.xpose.msra.mxu0 0.0
    %2885 = vmatprep.subr.mxu0 0.0
    %2886 = vmatpush1.xpose.msra.mxu0 0.0
    %2887 = vmatprep.subr.mxu0 0.0
    %2888 = vmatpush1.xpose.msra.mxu0 0.0
    %2889 = vmatprep.subr.mxu0 0.0
    %2890 = vmatpush1.xpose.msra.mxu0 0.0
    %2891 = vmatprep.subr.mxu0 0.0
    %2892 = vmatpush1.xpose.msra.mxu0 0.0
    %2893 = vmatprep.subr.mxu0 0.0
    %2894 = vmatpush1.xpose.msra.mxu0 0.0
    %2895 = vmatprep.subr.mxu0 0.0
    %2896 = vmatpush1.xpose.msra.mxu0 0.0
    %2897 = vmatprep.subr.mxu0 0.0
    %2898 = vmatpush1.xpose.msra.mxu0 0.0
    %2899 = vmatprep.subr.mxu0 0.0
    %2900 = vmatpush1.xpose.msra.mxu0 0.0
    %2901 = vmatprep.subr.mxu0 0.0
    %2902 = vmatpush1.xpose.msra.mxu0 0.0
    %2903 = vmatprep.subr.mxu0 0.0
    %2904 = vmatpush1.xpose.msra.mxu0 0.0
    %2905 = vmatprep.subr.mxu0 0.0
    %2906 = vmatpush1.xpose.msra.mxu0 0.0
    %2907 = vmatprep.subr.mxu0 0.0
    %2908 = vmatpush1.xpose.msra.mxu0 0.0
    %2909 = vmatprep.subr.mxu0 0.0
    %2910 = vmatpush1.xpose.msra.mxu0 0.0
    %2911 = vmatprep.subr.mxu0 0.0
    %2912 = vmatpush1.xpose.msra.mxu0 0.0
    %2913 = vmatprep.subr.mxu0 0.0
    %2914 = vmatpush1.xpose.msra.mxu0 0.0
    %2915 = vmatprep.subr.mxu0 0.0
    %2916 = vmatpush1.xpose.msra.mxu0 0.0
    %2917 = vmatprep.subr.mxu0 0.0
    %2918 = vmatpush1.xpose.msra.mxu0 0.0
    %2919 = vmatprep.subr.mxu0 0.0
    %2920 = vmatpush1.xpose.msra.mxu0 0.0
    %2921 = vmatprep.subr.mxu0 0.0
    %2922 = vmatpush1.xpose.msra.mxu0 0.0
    %2923 = vmatprep.subr.mxu0 0.0
    %2924 = vmatpush1.xpose.msra.mxu0 0.0
    %2925 = vmatprep.mubr.f32.mxu0 0.0
    %2926 = vmatmul.mubr.f32.gmra.mrb[0].mxu0 %v2856
    %v2927 = vpop.f32.mrb[0].mxu0
    %v2928 = vadd.f32 0.0, %v2927
    %v2929 = vpop.f32.mrb[0].mxu0
    %2930 = vdwg.mxu0
    %v2931 = vsel %vm250, %v2852, -inf
    %2932 = vmax.xlane.f32.xlu0 %v2931
    %v2933 = vpop.xlane.xlu0 %2932
    %v2934 = vsel %vm250, %v2928, -inf
    %2935 = vmax.xlane.f32.xlu0 %v2934
    %v2936 = vpop.xlane.xlu0 %2935
    %v2937 = vsub.f32 %v2852, %v2933
    %v2938 = vsub.f32 %v2928, %v2936
    %v2939 = vmul.f32 %v2937, 1.442695
    %v2940 = vpow.pop %v2939
    %v2941 = vmul.f32 %v2938, 1.442695
    %v2942 = vpow.pop %v2941
    %v2943 = vsel %vm250, %v2940, 0.0
    %2944 = vadd.xlane.f32.xlu0 %v2943
    %v2945 = vpop.xlane.xlu0 %2944
    %v2946 = vsel %vm250, %v2942, 0.0
    %2947 = vadd.xlane.f32.xlu0 %v2946
    %v2948 = vpop.xlane.xlu0 %2947
    %v2949 = vrcp.pop %v2945
    %v2950 = vmul.f32 %v2940, %v2949
    %v2951 = vrcp.pop %v2948
    %v2952 = vmul.f32 %v2942, %v2951
    %v2953 = vadd.f32 %v2950, 0.0
    %v2954 = vadd.f32 %v2952, 0.0
    %v2956 = vsel %vm250, %v2950, 0
    %2958 = vmatprep.subr.mxu0 0.0
    %2959 = vmatpush1.msra.mxu0 %v2773
    %2960 = vmatprep.subr.mxu0 0.0
    %2961 = vmatpush1.msra.mxu0 0.0
    %2962 = vmatprep.subr.mxu0 0.0
    %2963 = vmatpush1.msra.mxu0 0.0
    %2964 = vmatprep.subr.mxu0 0.0
    %2965 = vmatpush1.msra.mxu0 0.0
    %2966 = vmatprep.subr.mxu0 0.0
    %2967 = vmatpush1.msra.mxu0 0.0
    %2968 = vmatprep.subr.mxu0 0.0
    %2969 = vmatpush1.msra.mxu0 0.0
    %2970 = vmatprep.subr.mxu0 0.0
    %2971 = vmatpush1.msra.mxu0 0.0
    %2972 = vmatprep.subr.mxu0 0.0
    %2973 = vmatpush1.msra.mxu0 0.0
    %2974 = vmatprep.subr.mxu0 0.0
    %2975 = vmatpush1.msra.mxu0 0.0
    %2976 = vmatprep.subr.mxu0 0.0
    %2977 = vmatpush1.msra.mxu0 0.0
    %2978 = vmatprep.subr.mxu0 0.0
    %2979 = vmatpush1.msra.mxu0 0.0
    %2980 = vmatprep.subr.mxu0 0.0
    %2981 = vmatpush1.msra.mxu0 0.0
    %2982 = vmatprep.subr.mxu0 0.0
    %2983 = vmatpush1.msra.mxu0 0.0
    %2984 = vmatprep.subr.mxu0 0.0
    %2985 = vmatpush1.msra.mxu0 0.0
    %2986 = vmatprep.subr.mxu0 0.0
    %2987 = vmatpush1.msra.mxu0 0.0
    %2988 = vmatprep.subr.mxu0 0.0
    %2989 = vmatpush1.msra.mxu0 0.0
    %2990 = vmatprep.subr.mxu0 0.0
    %2991 = vmatpush1.msra.mxu0 0.0
    %2992 = vmatprep.subr.mxu0 0.0
    %2993 = vmatpush1.msra.mxu0 0.0
    %2994 = vmatprep.subr.mxu0 0.0
    %2995 = vmatpush1.msra.mxu0 0.0
    %2996 = vmatprep.subr.mxu0 0.0
    %2997 = vmatpush1.msra.mxu0 0.0
    %2998 = vmatprep.subr.mxu0 0.0
    %2999 = vmatpush1.msra.mxu0 0.0
    %3000 = vmatprep.subr.mxu0 0.0
    %3001 = vmatpush1.msra.mxu0 0.0
    %3002 = vmatprep.subr.mxu0 0.0
    %3003 = vmatpush1.msra.mxu0 0.0
    %3004 = vmatprep.subr.mxu0 0.0
    %3005 = vmatpush1.msra.mxu0 0.0
    %3006 = vmatprep.subr.mxu0 0.0
    %3007 = vmatpush1.msra.mxu0 0.0
    %3008 = vmatprep.subr.mxu0 0.0
    %3009 = vmatpush1.msra.mxu0 0.0
    %3010 = vmatprep.subr.mxu0 0.0
    %3011 = vmatpush1.msra.mxu0 0.0
    %3012 = vmatprep.subr.mxu0 0.0
    %3013 = vmatpush1.msra.mxu0 0.0
    %3014 = vmatprep.subr.mxu0 0.0
    %3015 = vmatpush1.msra.mxu0 0.0
    %3016 = vmatprep.subr.mxu0 0.0
    %3017 = vmatpush1.msra.mxu0 0.0
    %3018 = vmatprep.subr.mxu0 0.0
    %3019 = vmatpush1.msra.mxu0 0.0
    %3020 = vmatprep.subr.mxu0 0.0
    %3021 = vmatpush1.msra.mxu0 0.0
    %3022 = vmatprep.mubr.f32.mxu0 0.0
    %3023 = vmatmul.mubr.f32.gmra.mrb[0].mxu0 %v2956
    %v3024 = vpop.f32.mrb[0].mxu0
    %v3025 = vadd.f32 0.0, %v3024
    %v3026 = vpop.f32.mrb[0].mxu0
    %3027 = vdwg.mxu0
    %v3029 = vsel %vm250, %v2952, 0
    %3031 = vmatprep.subr.mxu0 0.0
    %3032 = vmatpush1.msra.mxu0 %v2776
    %3033 = vmatprep.subr.mxu0 0.0
    %3034 = vmatpush1.msra.mxu0 0.0
    %3035 = vmatprep.subr.mxu0 0.0
    %3036 = vmatpush1.msra.mxu0 0.0
    %3037 = vmatprep.subr.mxu0 0.0
    %3038 = vmatpush1.msra.mxu0 0.0
    %3039 = vmatprep.subr.mxu0 0.0
    %3040 = vmatpush1.msra.mxu0 0.0
    %3041 = vmatprep.subr.mxu0 0.0
    %3042 = vmatpush1.msra.mxu0 0.0
    %3043 = vmatprep.subr.mxu0 0.0
    %3044 = vmatpush1.msra.mxu0 0.0
    %3045 = vmatprep.subr.mxu0 0.0
    %3046 = vmatpush1.msra.mxu0 0.0
    %3047 = vmatprep.subr.mxu0 0.0
    %3048 = vmatpush1.msra.mxu0 0.0
    %3049 = vmatprep.subr.mxu0 0.0
    %3050 = vmatpush1.msra.mxu0 0.0
    %3051 = vmatprep.subr.mxu0 0.0
    %3052 = vmatpush1.msra.mxu0 0.0
    %3053 = vmatprep.subr.mxu0 0.0
    %3054 = vmatpush1.msra.mxu0 0.0
    %3055 = vmatprep.subr.mxu0 0.0
    %3056 = vmatpush1.msra.mxu0 0.0
    %3057 = vmatprep.subr.mxu0 0.0
    %3058 = vmatpush1.msra.mxu0 0.0
    %3059 = vmatprep.subr.mxu0 0.0
    %3060 = vmatpush1.msra.mxu0 0.0
    %3061 = vmatprep.subr.mxu0 0.0
    %3062 = vmatpush1.msra.mxu0 0.0
    %3063 = vmatprep.subr.mxu0 0.0
    %3064 = vmatpush1.msra.mxu0 0.0
    %3065 = vmatprep.subr.mxu0 0.0
    %3066 = vmatpush1.msra.mxu0 0.0
    %3067 = vmatprep.subr.mxu0 0.0
    %3068 = vmatpush1.msra.mxu0 0.0
    %3069 = vmatprep.subr.mxu0 0.0
    %3070 = vmatpush1.msra.mxu0 0.0
    %3071 = vmatprep.subr.mxu0 0.0
    %3072 = vmatpush1.msra.mxu0 0.0
    %3073 = vmatprep.subr.mxu0 0.0
    %3074 = vmatpush1.msra.mxu0 0.0
    %3075 = vmatprep.subr.mxu0 0.0
    %3076 = vmatpush1.msra.mxu0 0.0
    %3077 = vmatprep.subr.mxu0 0.0
    %3078 = vmatpush1.msra.mxu0 0.0
    %3079 = vmatprep.subr.mxu0 0.0
    %3080 = vmatpush1.msra.mxu0 0.0
    %3081 = vmatprep.subr.mxu0 0.0
    %3082 = vmatpush1.msra.mxu0 0.0
    %3083 = vmatprep.subr.mxu0 0.0
    %3084 = vmatpush1.msra.mxu0 0.0
    %3085 = vmatprep.subr.mxu0 0.0
    %3086 = vmatpush1.msra.mxu0 0.0
    %3087 = vmatprep.subr.mxu0 0.0
    %3088 = vmatpush1.msra.mxu0 0.0
    %3089 = vmatprep.subr.mxu0 0.0
    %3090 = vmatpush1.msra.mxu0 0.0
    %3091 = vmatprep.subr.mxu0 0.0
    %3092 = vmatpush1.msra.mxu0 0.0
    %3093 = vmatprep.subr.mxu0 0.0
    %3094 = vmatpush1.msra.mxu0 0.0
    %3095 = vmatprep.mubr.f32.mxu0 0.0
    %3096 = vmatmul.mubr.f32.gmra.mrb[0].mxu0 %v3029
    %v3097 = vpop.f32.mrb[0].mxu0
    %v3098 = vadd.f32 0.0, %v3097
    %v3099 = vpop.f32.mrb[0].mxu0
    %3100 = vdwg.mxu0
    %v3101 = vpack.c.bf16 %v3098, %v3025
    %s3102 = scalar_lea.vmem %s4, 16
    %v3103 = vld [vmem:[%s3102] sm:$0xf]
    %s3104 = scalar_lea.vmem %s2, 208
    %v3105 = vld [vmem:[%s3104] sm:$0xf]
    %v3106 = vld [vmem:[%s3104 + $0x4] sm:$0xf]
    %v3107 = vld [vmem:[%s3104 + $0x8] sm:$0xf]
    %v3108 = vld [vmem:[%s3104 + $0xc] sm:$0xf]
    %s3109 = scalar_lea.vmem %s3, 13
    %v3110 = vld [vmem:[%s3109] sm:$0x1]
    %v3112 = vlaneseq
    %v3113 = vshrl.u32 %v3112, 7
    %v3114 = vsub.s32 0, %v3113
    %v3115 = vrot.slane %v3110, %v3114
    %v3121 = vunpack.c.l.b16 %v3105
    %v3122 = vunpack.c.l.b16 %v3106
    %v3123 = vunpack.c.l.b16 %v3107
    %v3124 = vunpack.c.l.b16 %v3108
    %v3125 = vpack.c.b16 %v3122, %v3121
    %v3126 = vpack.c.b16 %v3124, %v3123
    %3129 = vmatprep.subr.bf16.mxu0 0
    %3130 = vmatpush1.bf16.msra.mxu0 %v3125
    %3131 = vmatprep.subr.bf16.mxu0 0
    %3132 = vmatpush1.bf16.msra.mxu0 %v3126
    %3133 = vmatprep.subr.bf16.mxu0 0
    %3134 = vmatpush1.bf16.msra.mxu0 0
    %3135 = vmatprep.subr.bf16.mxu0 0
    %3136 = vmatpush1.bf16.msra.mxu0 0
    %3137 = vmatprep.subr.bf16.mxu0 0
    %3138 = vmatpush1.bf16.msra.mxu0 0
    %3139 = vmatprep.subr.bf16.mxu0 0
    %3140 = vmatpush1.bf16.msra.mxu0 0
    %3141 = vmatprep.subr.bf16.mxu0 0
    %3142 = vmatpush1.bf16.msra.mxu0 0
    %3143 = vmatprep.subr.bf16.mxu0 0
    %3144 = vmatpush1.bf16.msra.mxu0 0
    %3145 = vmatprep.subr.bf16.mxu0 0
    %3146 = vmatpush1.bf16.msra.mxu0 0
    %3147 = vmatprep.subr.bf16.mxu0 0
    %3148 = vmatpush1.bf16.msra.mxu0 0
    %3149 = vmatprep.subr.bf16.mxu0 0
    %3150 = vmatpush1.bf16.msra.mxu0 0
    %3151 = vmatprep.subr.bf16.mxu0 0
    %3152 = vmatpush1.bf16.msra.mxu0 0
    %3153 = vmatprep.subr.bf16.mxu0 0
    %3154 = vmatpush1.bf16.msra.mxu0 0
    %3155 = vmatprep.subr.bf16.mxu0 0
    %3156 = vmatpush1.bf16.msra.mxu0 0
    %3157 = vmatprep.subr.bf16.mxu0 0
    %3158 = vmatpush1.bf16.msra.mxu0 0
    %3159 = vmatprep.subr.bf16.mxu0 0
    %3160 = vmatpush1.bf16.msra.mxu0 0
    %3161 = vmatprep.mubr.bf16.mxu0 0
    %3162 = vmatmul.mubr.bf16.gmra.mrb[0].mxu0 %v2601
    %v3163 = vpop.f32.mrb[0].mxu0
    %v3164 = vadd.f32 %v3115, %v3163
    %v3165 = vpop.f32.mrb[0].mxu0
    %v3166 = vpop.f32.mrb[0].mxu0
    %v3167 = vadd.f32 %v3115, %v3166
    %v3168 = vpop.f32.mrb[0].mxu0
    %3169 = vdwg.mxu0
    %s3170 = scalar_lea.vmem %s2, 272
    %v3171 = vld [vmem:[%s3170] sm:$0xf]
    %v3172 = vld [vmem:[%s3170 + $0x4] sm:$0xf]
    %v3173 = vld [vmem:[%s3170 + $0x8] sm:$0xf]
    %v3174 = vld [vmem:[%s3170 + $0xc] sm:$0xf]
    %s3175 = scalar_lea.vmem %s3, 17
    %v3176 = vld [vmem:[%s3175] sm:$0x1]
    %v3178 = vlaneseq
    %v3179 = vshrl.u32 %v3178, 7
    %v3180 = vsub.s32 0, %v3179
    %v3181 = vrot.slane %v3176, %v3180
    %v3187 = vunpack.c.l.b16 %v3171
    %v3188 = vunpack.c.l.b16 %v3172
    %v3189 = vunpack.c.l.b16 %v3173
    %v3190 = vunpack.c.l.b16 %v3174
    %v3191 = vpack.c.b16 %v3188, %v3187
    %v3192 = vpack.c.b16 %v3190, %v3189
    %3195 = vmatprep.subr.bf16.mxu0 0
    %3196 = vmatpush1.bf16.msra.mxu0 %v3191
    %3197 = vmatprep.subr.bf16.mxu0 0
    %3198 = vmatpush1.bf16.msra.mxu0 %v3192
    %3199 = vmatprep.subr.bf16.mxu0 0
    %3200 = vmatpush1.bf16.msra.mxu0 0
    %3201 = vmatprep.subr.bf16.mxu0 0
    %3202 = vmatpush1.bf16.msra.mxu0 0
    %3203 = vmatprep.subr.bf16.mxu0 0
    %3204 = vmatpush1.bf16.msra.mxu0 0
    %3205 = vmatprep.subr.bf16.mxu0 0
    %3206 = vmatpush1.bf16.msra.mxu0 0
    %3207 = vmatprep.subr.bf16.mxu0 0
    %3208 = vmatpush1.bf16.msra.mxu0 0
    %3209 = vmatprep.subr.bf16.mxu0 0
    %3210 = vmatpush1.bf16.msra.mxu0 0
    %3211 = vmatprep.subr.bf16.mxu0 0
    %3212 = vmatpush1.bf16.msra.mxu0 0
    %3213 = vmatprep.subr.bf16.mxu0 0
    %3214 = vmatpush1.bf16.msra.mxu0 0
    %3215 = vmatprep.subr.bf16.mxu0 0
    %3216 = vmatpush1.bf16.msra.mxu0 0
    %3217 = vmatprep.subr.bf16.mxu0 0
    %3218 = vmatpush1.bf16.msra.mxu0 0
    %3219 = vmatprep.subr.bf16.mxu0 0
    %3220 = vmatpush1.bf16.msra.mxu0 0
    %3221 = vmatprep.subr.bf16.mxu0 0
    %3222 = vmatpush1.bf16.msra.mxu0 0
    %3223 = vmatprep.subr.bf16.mxu0 0
    %3224 = vmatpush1.bf16.msra.mxu0 0
    %3225 = vmatprep.subr.bf16.mxu0 0
    %3226 = vmatpush1.bf16.msra.mxu0 0
    %3227 = vmatprep.mubr.bf16.mxu0 0
    %3228 = vmatmul.mubr.bf16.gmra.mrb[0].mxu0 %v2601
    %v3229 = vpop.f32.mrb[0].mxu0
    %v3230 = vadd.f32 %v3181, %v3229
    %v3231 = vpop.f32.mrb[0].mxu0
    %v3232 = vpop.f32.mrb[0].mxu0
    %v3233 = vadd.f32 %v3181, %v3232
    %v3234 = vpop.f32.mrb[0].mxu0
    %3235 = vdwg.mxu0
    %s3236 = scalar_lea.vmem %s2, 336
    %v3237 = vld [vmem:[%s3236] sm:$0xf]
    %v3238 = vld [vmem:[%s3236 + $0x4] sm:$0xf]
    %v3239 = vld [vmem:[%s3236 + $0x8] sm:$0xf]
    %v3240 = vld [vmem:[%s3236 + $0xc] sm:$0xf]
    %s3241 = scalar_lea.vmem %s3, 21
    %v3242 = vld [vmem:[%s3241] sm:$0x1]
    %v3244 = vlaneseq
    %v3245 = vshrl.u32 %v3244, 7
    %v3246 = vsub.s32 0, %v3245
    %v3247 = vrot.slane %v3242, %v3246
    %v3253 = vunpack.c.l.b16 %v3237
    %v3254 = vunpack.c.l.b16 %v3238
    %v3255 = vunpack.c.l.b16 %v3239
    %v3256 = vunpack.c.l.b16 %v3240
    %v3257 = vpack.c.b16 %v3254, %v3253
    %v3258 = vpack.c.b16 %v3256, %v3255
    %3261 = vmatprep.subr.bf16.mxu0 0
    %3262 = vmatpush1.bf16.msra.mxu0 %v3257
    %3263 = vmatprep.subr.bf16.mxu0 0
    %3264 = vmatpush1.bf16.msra.mxu0 %v3258
    %3265 = vmatprep.subr.bf16.mxu0 0
    %3266 = vmatpush1.bf16.msra.mxu0 0
    %3267 = vmatprep.subr.bf16.mxu0 0
    %3268 = vmatpush1.bf16.msra.mxu0 0
    %3269 = vmatprep.subr.bf16.mxu0 0
    %3270 = vmatpush1.bf16.msra.mxu0 0
    %3271 = vmatprep.subr.bf16.mxu0 0
    %3272 = vmatpush1.bf16.msra.mxu0 0
    %3273 = vmatprep.subr.bf16.mxu0 0
    %3274 = vmatpush1.bf16.msra.mxu0 0
    %3275 = vmatprep.subr.bf16.mxu0 0
    %3276 = vmatpush1.bf16.msra.mxu0 0
    %3277 = vmatprep.subr.bf16.mxu0 0
    %3278 = vmatpush1.bf16.msra.mxu0 0
    %3279 = vmatprep.subr.bf16.mxu0 0
    %3280 = vmatpush1.bf16.msra.mxu0 0
    %3281 = vmatprep.subr.bf16.mxu0 0
    %3282 = vmatpush1.bf16.msra.mxu0 0
    %3283 = vmatprep.subr.bf16.mxu0 0
    %3284 = vmatpush1.bf16.msra.mxu0 0
    %3285 = vmatprep.subr.bf16.mxu0 0
    %3286 = vmatpush1.bf16.msra.mxu0 0
    %3287 = vmatprep.subr.bf16.mxu0 0
    %3288 = vmatpush1.bf16.msra.mxu0 0
    %3289 = vmatprep.subr.bf16.mxu0 0
    %3290 = vmatpush1.bf16.msra.mxu0 0
    %3291 = vmatprep.subr.bf16.mxu0 0
    %3292 = vmatpush1.bf16.msra.mxu0 0
    %3293 = vmatprep.mubr.bf16.mxu0 0
    %3294 = vmatmul.mubr.bf16.gmra.mrb[0].mxu0 %v2736
    %v3295 = vpop.f32.mrb[0].mxu0
    %v3296 = vadd.f32 %v3247, %v3295
    %v3297 = vpop.f32.mrb[0].mxu0
    %v3298 = vpop.f32.mrb[0].mxu0
    %v3299 = vadd.f32 %v3247, %v3298
    %v3300 = vpop.f32.mrb[0].mxu0
    %3301 = vdwg.mxu0
    %v3303 = vsel %vm250, %v3164, 0
    %v3306 = vsel %vm250, %v3230, 0
    %3308 = vmatprep.subr.mxu0 0.0
    %3309 = vmatpush1.xpose.msra.mxu0 %v3306
    %3310 = vmatprep.subr.mxu0 0.0
    %3311 = vmatpush1.xpose.msra.mxu0 0.0
    %3312 = vmatprep.subr.mxu0 0.0
    %3313 = vmatpush1.xpose.msra.mxu0 0.0
    %3314 = vmatprep.subr.mxu0 0.0
    %3315 = vmatpush1.xpose.msra.mxu0 0.0
    %3316 = vmatprep.subr.mxu0 0.0
    %3317 = vmatpush1.xpose.msra.mxu0 0.0
    %3318 = vmatprep.subr.mxu0 0.0
    %3319 = vmatpush1.xpose.msra.mxu0 0.0
    %3320 = vmatprep.subr.mxu0 0.0
    %3321 = vmatpush1.xpose.msra.mxu0 0.0
    %3322 = vmatprep.subr.mxu0 0.0
    %3323 = vmatpush1.xpose.msra.mxu0 0.0
    %3324 = vmatprep.subr.mxu0 0.0
    %3325 = vmatpush1.xpose.msra.mxu0 0.0
    %3326 = vmatprep.subr.mxu0 0.0
    %3327 = vmatpush1.xpose.msra.mxu0 0.0
    %3328 = vmatprep.subr.mxu0 0.0
    %3329 = vmatpush1.xpose.msra.mxu0 0.0
    %3330 = vmatprep.subr.mxu0 0.0
    %3331 = vmatpush1.xpose.msra.mxu0 0.0
    %3332 = vmatprep.subr.mxu0 0.0
    %3333 = vmatpush1.xpose.msra.mxu0 0.0
    %3334 = vmatprep.subr.mxu0 0.0
    %3335 = vmatpush1.xpose.msra.mxu0 0.0
    %3336 = vmatprep.subr.mxu0 0.0
    %3337 = vmatpush1.xpose.msra.mxu0 0.0
    %3338 = vmatprep.subr.mxu0 0.0
    %3339 = vmatpush1.xpose.msra.mxu0 0.0
    %3340 = vmatprep.subr.mxu0 0.0
    %3341 = vmatpush1.xpose.msra.mxu0 0.0
    %3342 = vmatprep.subr.mxu0 0.0
    %3343 = vmatpush1.xpose.msra.mxu0 0.0
    %3344 = vmatprep.subr.mxu0 0.0
    %3345 = vmatpush1.xpose.msra.mxu0 0.0
    %3346 = vmatprep.subr.mxu0 0.0
    %3347 = vmatpush1.xpose.msra.mxu0 0.0
    %3348 = vmatprep.subr.mxu0 0.0
    %3349 = vmatpush1.xpose.msra.mxu0 0.0
    %3350 = vmatprep.subr.mxu0 0.0
    %3351 = vmatpush1.xpose.msra.mxu0 0.0
    %3352 = vmatprep.subr.mxu0 0.0
    %3353 = vmatpush1.xpose.msra.mxu0 0.0
    %3354 = vmatprep.subr.mxu0 0.0
    %3355 = vmatpush1.xpose.msra.mxu0 0.0
    %3356 = vmatprep.subr.mxu0 0.0
    %3357 = vmatpush1.xpose.msra.mxu0 0.0
    %3358 = vmatprep.subr.mxu0 0.0
    %3359 = vmatpush1.xpose.msra.mxu0 0.0
    %3360 = vmatprep.subr.mxu0 0.0
    %3361 = vmatpush1.xpose.msra.mxu0 0.0
    %3362 = vmatprep.subr.mxu0 0.0
    %3363 = vmatpush1.xpose.msra.mxu0 0.0
    %3364 = vmatprep.subr.mxu0 0.0
    %3365 = vmatpush1.xpose.msra.mxu0 0.0
    %3366 = vmatprep.subr.mxu0 0.0
    %3367 = vmatpush1.xpose.msra.mxu0 0.0
    %3368 = vmatprep.subr.mxu0 0.0
    %3369 = vmatpush1.xpose.msra.mxu0 0.0
    %3370 = vmatprep.subr.mxu0 0.0
    %3371 = vmatpush1.xpose.msra.mxu0 0.0
    %3372 = vmatprep.mubr.f32.mxu0 0.0
    %3373 = vmatmul.mubr.f32.gmra.mrb[0].mxu0 %v3303
    %v3374 = vpop.f32.mrb[0].mxu0
    %v3375 = vadd.f32 0.0, %v3374
    %v3376 = vpop.f32.mrb[0].mxu0
    %3377 = vdwg.mxu0
    %v3379 = vsel %vm250, %v3167, 0
    %v3382 = vsel %vm250, %v3233, 0
    %3384 = vmatprep.subr.mxu0 0.0
    %3385 = vmatpush1.xpose.msra.mxu0 %v3382
    %3386 = vmatprep.subr.mxu0 0.0
    %3387 = vmatpush1.xpose.msra.mxu0 0.0
    %3388 = vmatprep.subr.mxu0 0.0
    %3389 = vmatpush1.xpose.msra.mxu0 0.0
    %3390 = vmatprep.subr.mxu0 0.0
    %3391 = vmatpush1.xpose.msra.mxu0 0.0
    %3392 = vmatprep.subr.mxu0 0.0
    %3393 = vmatpush1.xpose.msra.mxu0 0.0
    %3394 = vmatprep.subr.mxu0 0.0
    %3395 = vmatpush1.xpose.msra.mxu0 0.0
    %3396 = vmatprep.subr.mxu0 0.0
    %3397 = vmatpush1.xpose.msra.mxu0 0.0
    %3398 = vmatprep.subr.mxu0 0.0
    %3399 = vmatpush1.xpose.msra.mxu0 0.0
    %3400 = vmatprep.subr.mxu0 0.0
    %3401 = vmatpush1.xpose.msra.mxu0 0.0
    %3402 = vmatprep.subr.mxu0 0.0
    %3403 = vmatpush1.xpose.msra.mxu0 0.0
    %3404 = vmatprep.subr.mxu0 0.0
    %3405 = vmatpush1.xpose.msra.mxu0 0.0
    %3406 = vmatprep.subr.mxu0 0.0
    %3407 = vmatpush1.xpose.msra.mxu0 0.0
    %3408 = vmatprep.subr.mxu0 0.0
    %3409 = vmatpush1.xpose.msra.mxu0 0.0
    %3410 = vmatprep.subr.mxu0 0.0
    %3411 = vmatpush1.xpose.msra.mxu0 0.0
    %3412 = vmatprep.subr.mxu0 0.0
    %3413 = vmatpush1.xpose.msra.mxu0 0.0
    %3414 = vmatprep.subr.mxu0 0.0
    %3415 = vmatpush1.xpose.msra.mxu0 0.0
    %3416 = vmatprep.subr.mxu0 0.0
    %3417 = vmatpush1.xpose.msra.mxu0 0.0
    %3418 = vmatprep.subr.mxu0 0.0
    %3419 = vmatpush1.xpose.msra.mxu0 0.0
    %3420 = vmatprep.subr.mxu0 0.0
    %3421 = vmatpush1.xpose.msra.mxu0 0.0
    %3422 = vmatprep.subr.mxu0 0.0
    %3423 = vmatpush1.xpose.msra.mxu0 0.0
    %3424 = vmatprep.subr.mxu0 0.0
    %3425 = vmatpush1.xpose.msra.mxu0 0.0
    %3426 = vmatprep.subr.mxu0 0.0
    %3427 = vmatpush1.xpose.msra.mxu0 0.0
    %3428 = vmatprep.subr.mxu0 0.0
    %3429 = vmatpush1.xpose.msra.mxu0 0.0
    %3430 = vmatprep.subr.mxu0 0.0
    %3431 = vmatpush1.xpose.msra.mxu0 0.0
    %3432 = vmatprep.subr.mxu0 0.0
    %3433 = vmatpush1.xpose.msra.mxu0 0.0
    %3434 = vmatprep.subr.mxu0 0.0
    %3435 = vmatpush1.xpose.msra.mxu0 0.0
    %3436 = vmatprep.subr.mxu0 0.0
    %3437 = vmatpush1.xpose.msra.mxu0 0.0
    %3438 = vmatprep.subr.mxu0 0.0
    %3439 = vmatpush1.xpose.msra.mxu0 0.0
    %3440 = vmatprep.subr.mxu0 0.0
    %3441 = vmatpush1.xpose.msra.mxu0 0.0
    %3442 = vmatprep.subr.mxu0 0.0
    %3443 = vmatpush1.xpose.msra.mxu0 0.0
    %3444 = vmatprep.subr.mxu0 0.0
    %3445 = vmatpush1.xpose.msra.mxu0 0.0
    %3446 = vmatprep.subr.mxu0 0.0
    %3447 = vmatpush1.xpose.msra.mxu0 0.0
    %3448 = vmatprep.mubr.f32.mxu0 0.0
    %3449 = vmatmul.mubr.f32.gmra.mrb[0].mxu0 %v3379
    %v3450 = vpop.f32.mrb[0].mxu0
    %v3451 = vadd.f32 0.0, %v3450
    %v3452 = vpop.f32.mrb[0].mxu0
    %3453 = vdwg.mxu0
    %v3454 = vsel %vm250, %v3375, -inf
    %3455 = vmax.xlane.f32.xlu0 %v3454
    %v3456 = vpop.xlane.xlu0 %3455
    %v3457 = vsel %vm250, %v3451, -inf
    %3458 = vmax.xlane.f32.xlu0 %v3457
    %v3459 = vpop.xlane.xlu0 %3458
    %v3460 = vsub.f32 %v3375, %v3456
    %v3461 = vsub.f32 %v3451, %v3459
    %v3462 = vmul.f32 %v3460, 1.442695
    %v3463 = vpow.pop %v3462
    %v3464 = vmul.f32 %v3461, 1.442695
    %v3465 = vpow.pop %v3464
    %v3466 = vsel %vm250, %v3463, 0.0
    %3467 = vadd.xlane.f32.xlu0 %v3466
    %v3468 = vpop.xlane.xlu0 %3467
    %v3469 = vsel %vm250, %v3465, 0.0
    %3470 = vadd.xlane.f32.xlu0 %v3469
    %v3471 = vpop.xlane.xlu0 %3470
    %v3472 = vrcp.pop %v3468
    %v3473 = vmul.f32 %v3463, %v3472
    %v3474 = vrcp.pop %v3471
    %v3475 = vmul.f32 %v3465, %v3474
    %v3476 = vadd.f32 %v2953, %v3473
    %v3477 = vadd.f32 %v2954, %v3475
    %v3479 = vsel %vm250, %v3473, 0
    %3481 = vmatprep.subr.mxu0 0.0
    %3482 = vmatpush1.msra.mxu0 %v3296
    %3483 = vmatprep.subr.mxu0 0.0
    %3484 = vmatpush1.msra.mxu0 0.0
    %3485 = vmatprep.subr.mxu0 0.0
    %3486 = vmatpush1.msra.mxu0 0.0
    %3487 = vmatprep.subr.mxu0 0.0
    %3488 = vmatpush1.msra.mxu0 0.0
    %3489 = vmatprep.subr.mxu0 0.0
    %3490 = vmatpush1.msra.mxu0 0.0
    %3491 = vmatprep.subr.mxu0 0.0
    %3492 = vmatpush1.msra.mxu0 0.0
    %3493 = vmatprep.subr.mxu0 0.0
    %3494 = vmatpush1.msra.mxu0 0.0
    %3495 = vmatprep.subr.mxu0 0.0
    %3496 = vmatpush1.msra.mxu0 0.0
    %3497 = vmatprep.subr.mxu0 0.0
    %3498 = vmatpush1.msra.mxu0 0.0
    %3499 = vmatprep.subr.mxu0 0.0
    %3500 = vmatpush1.msra.mxu0 0.0
    %3501 = vmatprep.subr.mxu0 0.0
    %3502 = vmatpush1.msra.mxu0 0.0
    %3503 = vmatprep.subr.mxu0 0.0
    %3504 = vmatpush1.msra.mxu0 0.0
    %3505 = vmatprep.subr.mxu0 0.0
    %3506 = vmatpush1.msra.mxu0 0.0
    %3507 = vmatprep.subr.mxu0 0.0
    %3508 = vmatpush1.msra.mxu0 0.0
    %3509 = vmatprep.subr.mxu0 0.0
    %3510 = vmatpush1.msra.mxu0 0.0
    %3511 = vmatprep.subr.mxu0 0.0
    %3512 = vmatpush1.msra.mxu0 0.0
    %3513 = vmatprep.subr.mxu0 0.0
    %3514 = vmatpush1.msra.mxu0 0.0
    %3515 = vmatprep.subr.mxu0 0.0
    %3516 = vmatpush1.msra.mxu0 0.0
    %3517 = vmatprep.subr.mxu0 0.0
    %3518 = vmatpush1.msra.mxu0 0.0
    %3519 = vmatprep.subr.mxu0 0.0
    %3520 = vmatpush1.msra.mxu0 0.0
    %3521 = vmatprep.subr.mxu0 0.0
    %3522 = vmatpush1.msra.mxu0 0.0
    %3523 = vmatprep.subr.mxu0 0.0
    %3524 = vmatpush1.msra.mxu0 0.0
    %3525 = vmatprep.subr.mxu0 0.0
    %3526 = vmatpush1.msra.mxu0 0.0
    %3527 = vmatprep.subr.mxu0 0.0
    %3528 = vmatpush1.msra.mxu0 0.0
    %3529 = vmatprep.subr.mxu0 0.0
    %3530 = vmatpush1.msra.mxu0 0.0
    %3531 = vmatprep.subr.mxu0 0.0
    %3532 = vmatpush1.msra.mxu0 0.0
    %3533 = vmatprep.subr.mxu0 0.0
    %3534 = vmatpush1.msra.mxu0 0.0
    %3535 = vmatprep.subr.mxu0 0.0
    %3536 = vmatpush1.msra.mxu0 0.0
    %3537 = vmatprep.subr.mxu0 0.0
    %3538 = vmatpush1.msra.mxu0 0.0
    %3539 = vmatprep.subr.mxu0 0.0
    %3540 = vmatpush1.msra.mxu0 0.0
    %3541 = vmatprep.subr.mxu0 0.0
    %3542 = vmatpush1.msra.mxu0 0.0
    %3543 = vmatprep.subr.mxu0 0.0
    %3544 = vmatpush1.msra.mxu0 0.0
    %3545 = vmatprep.mubr.f32.mxu0 0.0
    %3546 = vmatmul.mubr.f32.gmra.mrb[0].mxu0 %v3479
    %v3547 = vpop.f32.mrb[0].mxu0
    %v3548 = vadd.f32 0.0, %v3547
    %v3549 = vpop.f32.mrb[0].mxu0
    %3550 = vdwg.mxu0
    %v3552 = vsel %vm250, %v3475, 0
    %3554 = vmatprep.subr.mxu0 0.0
    %3555 = vmatpush1.msra.mxu0 %v3299
    %3556 = vmatprep.subr.mxu0 0.0
    %3557 = vmatpush1.msra.mxu0 0.0
    %3558 = vmatprep.subr.mxu0 0.0
    %3559 = vmatpush1.msra.mxu0 0.0
    %3560 = vmatprep.subr.mxu0 0.0
    %3561 = vmatpush1.msra.mxu0 0.0
    %3562 = vmatprep.subr.mxu0 0.0
    %3563 = vmatpush1.msra.mxu0 0.0
    %3564 = vmatprep.subr.mxu0 0.0
    %3565 = vmatpush1.msra.mxu0 0.0
    %3566 = vmatprep.subr.mxu0 0.0
    %3567 = vmatpush1.msra.mxu0 0.0
    %3568 = vmatprep.subr.mxu0 0.0
    %3569 = vmatpush1.msra.mxu0 0.0
    %3570 = vmatprep.subr.mxu0 0.0
    %3571 = vmatpush1.msra.mxu0 0.0
    %3572 = vmatprep.subr.mxu0 0.0
    %3573 = vmatpush1.msra.mxu0 0.0
    %3574 = vmatprep.subr.mxu0 0.0
    %3575 = vmatpush1.msra.mxu0 0.0
    %3576 = vmatprep.subr.mxu0 0.0
    %3577 = vmatpush1.msra.mxu0 0.0
    %3578 = vmatprep.subr.mxu0 0.0
    %3579 = vmatpush1.msra.mxu0 0.0
    %3580 = vmatprep.subr.mxu0 0.0
    %3581 = vmatpush1.msra.mxu0 0.0
    %3582 = vmatprep.subr.mxu0 0.0
    %3583 = vmatpush1.msra.mxu0 0.0
    %3584 = vmatprep.subr.mxu0 0.0
    %3585 = vmatpush1.msra.mxu0 0.0
    %3586 = vmatprep.subr.mxu0 0.0
    %3587 = vmatpush1.msra.mxu0 0.0
    %3588 = vmatprep.subr.mxu0 0.0
    %3589 = vmatpush1.msra.mxu0 0.0
    %3590 = vmatprep.subr.mxu0 0.0
    %3591 = vmatpush1.msra.mxu0 0.0
    %3592 = vmatprep.subr.mxu0 0.0
    %3593 = vmatpush1.msra.mxu0 0.0
    %3594 = vmatprep.subr.mxu0 0.0
    %3595 = vmatpush1.msra.mxu0 0.0
    %3596 = vmatprep.subr.mxu0 0.0
    %3597 = vmatpush1.msra.mxu0 0.0
    %3598 = vmatprep.subr.mxu0 0.0
    %3599 = vmatpush1.msra.mxu0 0.0
    %3600 = vmatprep.subr.mxu0 0.0
    %3601 = vmatpush1.msra.mxu0 0.0
    %3602 = vmatprep.subr.mxu0 0.0
    %3603 = vmatpush1.msra.mxu0 0.0
    %3604 = vmatprep.subr.mxu0 0.0
    %3605 = vmatpush1.msra.mxu0 0.0
    %3606 = vmatprep.subr.mxu0 0.0
    %3607 = vmatpush1.msra.mxu0 0.0
    %3608 = vmatprep.subr.mxu0 0.0
    %3609 = vmatpush1.msra.mxu0 0.0
    %3610 = vmatprep.subr.mxu0 0.0
    %3611 = vmatpush1.msra.mxu0 0.0
    %3612 = vmatprep.subr.mxu0 0.0
    %3613 = vmatpush1.msra.mxu0 0.0
    %3614 = vmatprep.subr.mxu0 0.0
    %3615 = vmatpush1.msra.mxu0 0.0
    %3616 = vmatprep.subr.mxu0 0.0
    %3617 = vmatpush1.msra.mxu0 0.0
    %3618 = vmatprep.mubr.f32.mxu0 0.0
    %3619 = vmatmul.mubr.f32.gmra.mrb[0].mxu0 %v3552
    %v3620 = vpop.f32.mrb[0].mxu0
    %v3621 = vadd.f32 0.0, %v3620
    %v3622 = vpop.f32.mrb[0].mxu0
    %3623 = vdwg.mxu0
    %v3624 = vpack.c.bf16 %v3621, %v3548
    %s3625 = scalar_lea.vmem %s4, 20
    %v3626 = vld [vmem:[%s3625] sm:$0xf]
    %v3628 = vsel %vm250, %v3624, 0
    %v3631 = vsel %vm1097, %v3626, 0
    %3633 = vmatprep.subr.bf16.mxu0 0
    %3634 = vmatpush1.bf16.msra.mxu0 %v3631
    %3635 = vmatprep.subr.bf16.mxu0 0
    %3636 = vmatpush1.bf16.msra.mxu0 0
    %3637 = vmatprep.subr.bf16.mxu0 0
    %3638 = vmatpush1.bf16.msra.mxu0 0
    %3639 = vmatprep.subr.bf16.mxu0 0
    %3640 = vmatpush1.bf16.msra.mxu0 0
    %3641 = vmatprep.subr.bf16.mxu0 0
    %3642 = vmatpush1.bf16.msra.mxu0 0
    %3643 = vmatprep.subr.bf16.mxu0 0
    %3644 = vmatpush1.bf16.msra.mxu0 0
    %3645 = vmatprep.subr.bf16.mxu0 0
    %3646 = vmatpush1.bf16.msra.mxu0 0
    %3647 = vmatprep.subr.bf16.mxu0 0
    %3648 = vmatpush1.bf16.msra.mxu0 0
    %3649 = vmatprep.subr.bf16.mxu0 0
    %3650 = vmatpush1.bf16.msra.mxu0 0
    %3651 = vmatprep.subr.bf16.mxu0 0
    %3652 = vmatpush1.bf16.msra.mxu0 0
    %3653 = vmatprep.subr.bf16.mxu0 0
    %3654 = vmatpush1.bf16.msra.mxu0 0
    %3655 = vmatprep.subr.bf16.mxu0 0
    %3656 = vmatpush1.bf16.msra.mxu0 0
    %3657 = vmatprep.subr.bf16.mxu0 0
    %3658 = vmatpush1.bf16.msra.mxu0 0
    %3659 = vmatprep.subr.bf16.mxu0 0
    %3660 = vmatpush1.bf16.msra.mxu0 0
    %3661 = vmatprep.subr.bf16.mxu0 0
    %3662 = vmatpush1.bf16.msra.mxu0 0
    %3663 = vmatprep.subr.bf16.mxu0 0
    %3664 = vmatpush1.bf16.msra.mxu0 0
    %3665 = vmatprep.mubr.bf16.mxu0 0
    %3666 = vmatmul.mubr.bf16.gmra.mrb[0].mxu0 %v3628
    %v3667 = vpop.f32.mrb[0].mxu0
    %v3668 = vadd.f32 0.0, %v3667
    %v3669 = vpop.f32.mrb[0].mxu0
    %v3670 = vpop.f32.mrb[0].mxu0
    %v3671 = vadd.f32 0.0, %v3670
    %v3672 = vpop.f32.mrb[0].mxu0
    %3673 = vdwg.mxu0
    %v3675 = vsel %vm250, %v3101, 0
    %v3678 = vsel %vm1097, %v3103, 0
    %3680 = vmatprep.subr.bf16.mxu0 0
    %3681 = vmatpush1.bf16.msra.mxu0 %v3678
    %3682 = vmatprep.subr.bf16.mxu0 0
    %3683 = vmatpush1.bf16.msra.mxu0 0
    %3684 = vmatprep.subr.bf16.mxu0 0
    %3685 = vmatpush1.bf16.msra.mxu0 0
    %3686 = vmatprep.subr.bf16.mxu0 0
    %3687 = vmatpush1.bf16.msra.mxu0 0
    %3688 = vmatprep.subr.bf16.mxu0 0
    %3689 = vmatpush1.bf16.msra.mxu0 0
    %3690 = vmatprep.subr.bf16.mxu0 0
    %3691 = vmatpush1.bf16.msra.mxu0 0
    %3692 = vmatprep.subr.bf16.mxu0 0
    %3693 = vmatpush1.bf16.msra.mxu0 0
    %3694 = vmatprep.subr.bf16.mxu0 0
    %3695 = vmatpush1.bf16.msra.mxu0 0
    %3696 = vmatprep.subr.bf16.mxu0 0
    %3697 = vmatpush1.bf16.msra.mxu0 0
    %3698 = vmatprep.subr.bf16.mxu0 0
    %3699 = vmatpush1.bf16.msra.mxu0 0
    %3700 = vmatprep.subr.bf16.mxu0 0
    %3701 = vmatpush1.bf16.msra.mxu0 0
    %3702 = vmatprep.subr.bf16.mxu0 0
    %3703 = vmatpush1.bf16.msra.mxu0 0
    %3704 = vmatprep.subr.bf16.mxu0 0
    %3705 = vmatpush1.bf16.msra.mxu0 0
    %3706 = vmatprep.subr.bf16.mxu0 0
    %3707 = vmatpush1.bf16.msra.mxu0 0
    %3708 = vmatprep.subr.bf16.mxu0 0
    %3709 = vmatpush1.bf16.msra.mxu0 0
    %3710 = vmatprep.subr.bf16.mxu0 0
    %3711 = vmatpush1.bf16.msra.mxu0 0
    %3712 = vmatprep.mubr.bf16.mxu0 0
    %3713 = vmatmul.mubr.bf16.gmra.mrb[0].mxu0 %v3675
    %v3714 = vpop.f32.mrb[0].mxu0
    %v3715 = vadd.f32 %v3668, %v3714
    %v3716 = vpop.f32.mrb[0].mxu0
    %v3717 = vpop.f32.mrb[0].mxu0
    %v3718 = vadd.f32 %v3671, %v3717
    %v3719 = vpop.f32.mrb[0].mxu0
    %3720 = vdwg.mxu0
    %s3721 = scalar_lea.vmem %s2, 224
    %v3722 = vld [vmem:[%s3721] sm:$0xf]
    %v3723 = vld [vmem:[%s3721 + $0x4] sm:$0xf]
    %v3724 = vld [vmem:[%s3721 + $0x8] sm:$0xf]
    %v3725 = vld [vmem:[%s3721 + $0xc] sm:$0xf]
    %s3726 = scalar_lea.vmem %s3, 14
    %v3727 = vld [vmem:[%s3726] sm:$0x1]
    %v3729 = vlaneseq
    %v3730 = vshrl.u32 %v3729, 7
    %v3731 = vsub.s32 0, %v3730
    %v3732 = vrot.slane %v3727, %v3731
    %v3738 = vunpack.c.l.b16 %v3722
    %v3739 = vunpack.c.l.b16 %v3723
    %v3740 = vunpack.c.l.b16 %v3724
    %v3741 = vunpack.c.l.b16 %v3725
    %v3742 = vpack.c.b16 %v3739, %v3738
    %v3743 = vpack.c.b16 %v3741, %v3740
    %3746 = vmatprep.subr.bf16.mxu0 0
    %3747 = vmatpush1.bf16.msra.mxu0 %v3742
    %3748 = vmatprep.subr.bf16.mxu0 0
    %3749 = vmatpush1.bf16.msra.mxu0 %v3743
    %3750 = vmatprep.subr.bf16.mxu0 0
    %3751 = vmatpush1.bf16.msra.mxu0 0
    %3752 = vmatprep.subr.bf16.mxu0 0
    %3753 = vmatpush1.bf16.msra.mxu0 0
    %3754 = vmatprep.subr.bf16.mxu0 0
    %3755 = vmatpush1.bf16.msra.mxu0 0
    %3756 = vmatprep.subr.bf16.mxu0 0
    %3757 = vmatpush1.bf16.msra.mxu0 0
    %3758 = vmatprep.subr.bf16.mxu0 0
    %3759 = vmatpush1.bf16.msra.mxu0 0
    %3760 = vmatprep.subr.bf16.mxu0 0
    %3761 = vmatpush1.bf16.msra.mxu0 0
    %3762 = vmatprep.subr.bf16.mxu0 0
    %3763 = vmatpush1.bf16.msra.mxu0 0
    %3764 = vmatprep.subr.bf16.mxu0 0
    %3765 = vmatpush1.bf16.msra.mxu0 0
    %3766 = vmatprep.subr.bf16.mxu0 0
    %3767 = vmatpush1.bf16.msra.mxu0 0
    %3768 = vmatprep.subr.bf16.mxu0 0
    %3769 = vmatpush1.bf16.msra.mxu0 0
    %3770 = vmatprep.subr.bf16.mxu0 0
    %3771 = vmatpush1.bf16.msra.mxu0 0
    %3772 = vmatprep.subr.bf16.mxu0 0
    %3773 = vmatpush1.bf16.msra.mxu0 0
    %3774 = vmatprep.subr.bf16.mxu0 0
    %3775 = vmatpush1.bf16.msra.mxu0 0
    %3776 = vmatprep.subr.bf16.mxu0 0
    %3777 = vmatpush1.bf16.msra.mxu0 0
    %3778 = vmatprep.mubr.bf16.mxu0 0
    %3779 = vmatmul.mubr.bf16.gmra.mrb[0].mxu0 %v2601
    %v3780 = vpop.f32.mrb[0].mxu0
    %v3781 = vadd.f32 %v3732, %v3780
    %v3782 = vpop.f32.mrb[0].mxu0
    %v3783 = vpop.f32.mrb[0].mxu0
    %v3784 = vadd.f32 %v3732, %v3783
    %v3785 = vpop.f32.mrb[0].mxu0
    %3786 = vdwg.mxu0
    %s3787 = scalar_lea.vmem %s2, 288
    %v3788 = vld [vmem:[%s3787] sm:$0xf]
    %v3789 = vld [vmem:[%s3787 + $0x4] sm:$0xf]
    %v3790 = vld [vmem:[%s3787 + $0x8] sm:$0xf]
    %v3791 = vld [vmem:[%s3787 + $0xc] sm:$0xf]
    %s3792 = scalar_lea.vmem %s3, 18
    %v3793 = vld [vmem:[%s3792] sm:$0x1]
    %v3795 = vlaneseq
    %v3796 = vshrl.u32 %v3795, 7
    %v3797 = vsub.s32 0, %v3796
    %v3798 = vrot.slane %v3793, %v3797
    %v3804 = vunpack.c.l.b16 %v3788
    %v3805 = vunpack.c.l.b16 %v3789
    %v3806 = vunpack.c.l.b16 %v3790
    %v3807 = vunpack.c.l.b16 %v3791
    %v3808 = vpack.c.b16 %v3805, %v3804
    %v3809 = vpack.c.b16 %v3807, %v3806
    %3812 = vmatprep.subr.bf16.mxu0 0
    %3813 = vmatpush1.bf16.msra.mxu0 %v3808
    %3814 = vmatprep.subr.bf16.mxu0 0
    %3815 = vmatpush1.bf16.msra.mxu0 %v3809
    %3816 = vmatprep.subr.bf16.mxu0 0
    %3817 = vmatpush1.bf16.msra.mxu0 0
    %3818 = vmatprep.subr.bf16.mxu0 0
    %3819 = vmatpush1.bf16.msra.mxu0 0
    %3820 = vmatprep.subr.bf16.mxu0 0
    %3821 = vmatpush1.bf16.msra.mxu0 0
    %3822 = vmatprep.subr.bf16.mxu0 0
    %3823 = vmatpush1.bf16.msra.mxu0 0
    %3824 = vmatprep.subr.bf16.mxu0 0
    %3825 = vmatpush1.bf16.msra.mxu0 0
    %3826 = vmatprep.subr.bf16.mxu0 0
    %3827 = vmatpush1.bf16.msra.mxu0 0
    %3828 = vmatprep.subr.bf16.mxu0 0
    %3829 = vmatpush1.bf16.msra.mxu0 0
    %3830 = vmatprep.subr.bf16.mxu0 0
    %3831 = vmatpush1.bf16.msra.mxu0 0
    %3832 = vmatprep.subr.bf16.mxu0 0
    %3833 = vmatpush1.bf16.msra.mxu0 0
    %3834 = vmatprep.subr.bf16.mxu0 0
    %3835 = vmatpush1.bf16.msra.mxu0 0
    %3836 = vmatprep.subr.bf16.mxu0 0
    %3837 = vmatpush1.bf16.msra.mxu0 0
    %3838 = vmatprep.subr.bf16.mxu0 0
    %3839 = vmatpush1.bf16.msra.mxu0 0
    %3840 = vmatprep.subr.bf16.mxu0 0
    %3841 = vmatpush1.bf16.msra.mxu0 0
    %3842 = vmatprep.subr.bf16.mxu0 0
    %3843 = vmatpush1.bf16.msra.mxu0 0
    %3844 = vmatprep.mubr.bf16.mxu0 0
    %3845 = vmatmul.mubr.bf16.gmra.mrb[0].mxu0 %v2601
    %v3846 = vpop.f32.mrb[0].mxu0
    %v3847 = vadd.f32 %v3798, %v3846
    %v3848 = vpop.f32.mrb[0].mxu0
    %v3849 = vpop.f32.mrb[0].mxu0
    %v3850 = vadd.f32 %v3798, %v3849
    %v3851 = vpop.f32.mrb[0].mxu0
    %3852 = vdwg.mxu0
    %s3853 = scalar_lea.vmem %s2, 352
    %v3854 = vld [vmem:[%s3853] sm:$0xf]
    %v3855 = vld [vmem:[%s3853 + $0x4] sm:$0xf]
    %v3856 = vld [vmem:[%s3853 + $0x8] sm:$0xf]
    %v3857 = vld [vmem:[%s3853 + $0xc] sm:$0xf]
    %s3858 = scalar_lea.vmem %s3, 22
    %v3859 = vld [vmem:[%s3858] sm:$0x1]
    %v3861 = vlaneseq
    %v3862 = vshrl.u32 %v3861, 7
    %v3863 = vsub.s32 0, %v3862
    %v3864 = vrot.slane %v3859, %v3863
    %v3870 = vunpack.c.l.b16 %v3854
    %v3871 = vunpack.c.l.b16 %v3855
    %v3872 = vunpack.c.l.b16 %v3856
    %v3873 = vunpack.c.l.b16 %v3857
    %v3874 = vpack.c.b16 %v3871, %v3870
    %v3875 = vpack.c.b16 %v3873, %v3872
    %3878 = vmatprep.subr.bf16.mxu0 0
    %3879 = vmatpush1.bf16.msra.mxu0 %v3874
    %3880 = vmatprep.subr.bf16.mxu0 0
    %3881 = vmatpush1.bf16.msra.mxu0 %v3875
    %3882 = vmatprep.subr.bf16.mxu0 0
    %3883 = vmatpush1.bf16.msra.mxu0 0
    %3884 = vmatprep.subr.bf16.mxu0 0
    %3885 = vmatpush1.bf16.msra.mxu0 0
    %3886 = vmatprep.subr.bf16.mxu0 0
    %3887 = vmatpush1.bf16.msra.mxu0 0
    %3888 = vmatprep.subr.bf16.mxu0 0
    %3889 = vmatpush1.bf16.msra.mxu0 0
    %3890 = vmatprep.subr.bf16.mxu0 0
    %3891 = vmatpush1.bf16.msra.mxu0 0
    %3892 = vmatprep.subr.bf16.mxu0 0
    %3893 = vmatpush1.bf16.msra.mxu0 0
    %3894 = vmatprep.subr.bf16.mxu0 0
    %3895 = vmatpush1.bf16.msra.mxu0 0
    %3896 = vmatprep.subr.bf16.mxu0 0
    %3897 = vmatpush1.bf16.msra.mxu0 0
    %3898 = vmatprep.subr.bf16.mxu0 0
    %3899 = vmatpush1.bf16.msra.mxu0 0
    %3900 = vmatprep.subr.bf16.mxu0 0
    %3901 = vmatpush1.bf16.msra.mxu0 0
    %3902 = vmatprep.subr.bf16.mxu0 0
    %3903 = vmatpush1.bf16.msra.mxu0 0
    %3904 = vmatprep.subr.bf16.mxu0 0
    %3905 = vmatpush1.bf16.msra.mxu0 0
    %3906 = vmatprep.subr.bf16.mxu0 0
    %3907 = vmatpush1.bf16.msra.mxu0 0
    %3908 = vmatprep.subr.bf16.mxu0 0
    %3909 = vmatpush1.bf16.msra.mxu0 0
    %3910 = vmatprep.mubr.bf16.mxu0 0
    %3911 = vmatmul.mubr.bf16.gmra.mrb[0].mxu0 %v2736
    %v3912 = vpop.f32.mrb[0].mxu0
    %v3913 = vadd.f32 %v3864, %v3912
    %v3914 = vpop.f32.mrb[0].mxu0
    %v3915 = vpop.f32.mrb[0].mxu0
    %v3916 = vadd.f32 %v3864, %v3915
    %v3917 = vpop.f32.mrb[0].mxu0
    %3918 = vdwg.mxu0
    %v3920 = vsel %vm250, %v3781, 0
    %v3923 = vsel %vm250, %v3847, 0
    %3925 = vmatprep.subr.mxu0 0.0
    %3926 = vmatpush1.xpose.msra.mxu0 %v3923
    %3927 = vmatprep.subr.mxu0 0.0
    %3928 = vmatpush1.xpose.msra.mxu0 0.0
    %3929 = vmatprep.subr.mxu0 0.0
    %3930 = vmatpush1.xpose.msra.mxu0 0.0
    %3931 = vmatprep.subr.mxu0 0.0
    %3932 = vmatpush1.xpose.msra.mxu0 0.0
    %3933 = vmatprep.subr.mxu0 0.0
    %3934 = vmatpush1.xpose.msra.mxu0 0.0
    %3935 = vmatprep.subr.mxu0 0.0
    %3936 = vmatpush1.xpose.msra.mxu0 0.0
    %3937 = vmatprep.subr.mxu0 0.0
    %3938 = vmatpush1.xpose.msra.mxu0 0.0
    %3939 = vmatprep.subr.mxu0 0.0
    %3940 = vmatpush1.xpose.msra.mxu0 0.0
    %3941 = vmatprep.subr.mxu0 0.0
    %3942 = vmatpush1.xpose.msra.mxu0 0.0
    %3943 = vmatprep.subr.mxu0 0.0
    %3944 = vmatpush1.xpose.msra.mxu0 0.0
    %3945 = vmatprep.subr.mxu0 0.0
    %3946 = vmatpush1.xpose.msra.mxu0 0.0
    %3947 = vmatprep.subr.mxu0 0.0
    %3948 = vmatpush1.xpose.msra.mxu0 0.0
    %3949 = vmatprep.subr.mxu0 0.0
    %3950 = vmatpush1.xpose.msra.mxu0 0.0
    %3951 = vmatprep.subr.mxu0 0.0
    %3952 = vmatpush1.xpose.msra.mxu0 0.0
    %3953 = vmatprep.subr.mxu0 0.0
    %3954 = vmatpush1.xpose.msra.mxu0 0.0
    %3955 = vmatprep.subr.mxu0 0.0
    %3956 = vmatpush1.xpose.msra.mxu0 0.0
    %3957 = vmatprep.subr.mxu0 0.0
    %3958 = vmatpush1.xpose.msra.mxu0 0.0
    %3959 = vmatprep.subr.mxu0 0.0
    %3960 = vmatpush1.xpose.msra.mxu0 0.0
    %3961 = vmatprep.subr.mxu0 0.0
    %3962 = vmatpush1.xpose.msra.mxu0 0.0
    %3963 = vmatprep.subr.mxu0 0.0
    %3964 = vmatpush1.xpose.msra.mxu0 0.0
    %3965 = vmatprep.subr.mxu0 0.0
    %3966 = vmatpush1.xpose.msra.mxu0 0.0
    %3967 = vmatprep.subr.mxu0 0.0
    %3968 = vmatpush1.xpose.msra.mxu0 0.0
    %3969 = vmatprep.subr.mxu0 0.0
    %3970 = vmatpush1.xpose.msra.mxu0 0.0
    %3971 = vmatprep.subr.mxu0 0.0
    %3972 = vmatpush1.xpose.msra.mxu0 0.0
    %3973 = vmatprep.subr.mxu0 0.0
    %3974 = vmatpush1.xpose.msra.mxu0 0.0
    %3975 = vmatprep.subr.mxu0 0.0
    %3976 = vmatpush1.xpose.msra.mxu0 0.0
    %3977 = vmatprep.subr.mxu0 0.0
    %3978 = vmatpush1.xpose.msra.mxu0 0.0
    %3979 = vmatprep.subr.mxu0 0.0
    %3980 = vmatpush1.xpose.msra.mxu0 0.0
    %3981 = vmatprep.subr.mxu0 0.0
    %3982 = vmatpush1.xpose.msra.mxu0 0.0
    %3983 = vmatprep.subr.mxu0 0.0
    %3984 = vmatpush1.xpose.msra.mxu0 0.0
    %3985 = vmatprep.subr.mxu0 0.0
    %3986 = vmatpush1.xpose.msra.mxu0 0.0
    %3987 = vmatprep.subr.mxu0 0.0
    %3988 = vmatpush1.xpose.msra.mxu0 0.0
    %3989 = vmatprep.mubr.f32.mxu0 0.0
    %3990 = vmatmul.mubr.f32.gmra.mrb[0].mxu0 %v3920
    %v3991 = vpop.f32.mrb[0].mxu0
    %v3992 = vadd.f32 0.0, %v3991
    %v3993 = vpop.f32.mrb[0].mxu0
    %3994 = vdwg.mxu0
    %v3996 = vsel %vm250, %v3784, 0
    %v3999 = vsel %vm250, %v3850, 0
    %4001 = vmatprep.subr.mxu0 0.0
    %4002 = vmatpush1.xpose.msra.mxu0 %v3999
    %4003 = vmatprep.subr.mxu0 0.0
    %4004 = vmatpush1.xpose.msra.mxu0 0.0
    %4005 = vmatprep.subr.mxu0 0.0
    %4006 = vmatpush1.xpose.msra.mxu0 0.0
    %4007 = vmatprep.subr.mxu0 0.0
    %4008 = vmatpush1.xpose.msra.mxu0 0.0
    %4009 = vmatprep.subr.mxu0 0.0
    %4010 = vmatpush1.xpose.msra.mxu0 0.0
    %4011 = vmatprep.subr.mxu0 0.0
    %4012 = vmatpush1.xpose.msra.mxu0 0.0
    %4013 = vmatprep.subr.mxu0 0.0
    %4014 = vmatpush1.xpose.msra.mxu0 0.0
    %4015 = vmatprep.subr.mxu0 0.0
    %4016 = vmatpush1.xpose.msra.mxu0 0.0
    %4017 = vmatprep.subr.mxu0 0.0
    %4018 = vmatpush1.xpose.msra.mxu0 0.0
    %4019 = vmatprep.subr.mxu0 0.0
    %4020 = vmatpush1.xpose.msra.mxu0 0.0
    %4021 = vmatprep.subr.mxu0 0.0
    %4022 = vmatpush1.xpose.msra.mxu0 0.0
    %4023 = vmatprep.subr.mxu0 0.0
    %4024 = vmatpush1.xpose.msra.mxu0 0.0
    %4025 = vmatprep.subr.mxu0 0.0
    %4026 = vmatpush1.xpose.msra.mxu0 0.0
    %4027 = vmatprep.subr.mxu0 0.0
    %4028 = vmatpush1.xpose.msra.mxu0 0.0
    %4029 = vmatprep.subr.mxu0 0.0
    %4030 = vmatpush1.xpose.msra.mxu0 0.0
    %4031 = vmatprep.subr.mxu0 0.0
    %4032 = vmatpush1.xpose.msra.mxu0 0.0
    %4033 = vmatprep.subr.mxu0 0.0
    %4034 = vmatpush1.xpose.msra.mxu0 0.0
    %4035 = vmatprep.subr.mxu0 0.0
    %4036 = vmatpush1.xpose.msra.mxu0 0.0
    %4037 = vmatprep.subr.mxu0 0.0
    %4038 = vmatpush1.xpose.msra.mxu0 0.0
    %4039 = vmatprep.subr.mxu0 0.0
    %4040 = vmatpush1.xpose.msra.mxu0 0.0
    %4041 = vmatprep.subr.mxu0 0.0
    %4042 = vmatpush1.xpose.msra.mxu0 0.0
    %4043 = vmatprep.subr.mxu0 0.0
    %4044 = vmatpush1.xpose.msra.mxu0 0.0
    %4045 = vmatprep.subr.mxu0 0.0
    %4046 = vmatpush1.xpose.msra.mxu0 0.0
    %4047 = vmatprep.subr.mxu0 0.0
    %4048 = vmatpush1.xpose.msra.mxu0 0.0
    %4049 = vmatprep.subr.mxu0 0.0
    %4050 = vmatpush1.xpose.msra.mxu0 0.0
    %4051 = vmatprep.subr.mxu0 0.0
    %4052 = vmatpush1.xpose.msra.mxu0 0.0
    %4053 = vmatprep.subr.mxu0 0.0
    %4054 = vmatpush1.xpose.msra.mxu0 0.0
    %4055 = vmatprep.subr.mxu0 0.0
    %4056 = vmatpush1.xpose.msra.mxu0 0.0
    %4057 = vmatprep.subr.mxu0 0.0
    %4058 = vmatpush1.xpose.msra.mxu0 0.0
    %4059 = vmatprep.subr.mxu0 0.0
    %4060 = vmatpush1.xpose.msra.mxu0 0.0
    %4061 = vmatprep.subr.mxu0 0.0
    %4062 = vmatpush1.xpose.msra.mxu0 0.0
    %4063 = vmatprep.subr.mxu0 0.0
    %4064 = vmatpush1.xpose.msra.mxu0 0.0
    %4065 = vmatprep.mubr.f32.mxu0 0.0
    %4066 = vmatmul.mubr.f32.gmra.mrb[0].mxu0 %v3996
    %v4067 = vpop.f32.mrb[0].mxu0
    %v4068 = vadd.f32 0.0, %v4067
    %v4069 = vpop.f32.mrb[0].mxu0
    %4070 = vdwg.mxu0
    %v4071 = vsel %vm250, %v3992, -inf
    %4072 = vmax.xlane.f32.xlu0 %v4071
    %v4073 = vpop.xlane.xlu0 %4072
    %v4074 = vsel %vm250, %v4068, -inf
    %4075 = vmax.xlane.f32.xlu0 %v4074
    %v4076 = vpop.xlane.xlu0 %4075
    %v4077 = vsub.f32 %v3992, %v4073
    %v4078 = vsub.f32 %v4068, %v4076
    %v4079 = vmul.f32 %v4077, 1.442695
    %v4080 = vpow.pop %v4079
    %v4081 = vmul.f32 %v4078, 1.442695
    %v4082 = vpow.pop %v4081
    %v4083 = vsel %vm250, %v4080, 0.0
    %4084 = vadd.xlane.f32.xlu0 %v4083
    %v4085 = vpop.xlane.xlu0 %4084
    %v4086 = vsel %vm250, %v4082, 0.0
    %4087 = vadd.xlane.f32.xlu0 %v4086
    %v4088 = vpop.xlane.xlu0 %4087
    %v4089 = vrcp.pop %v4085
    %v4090 = vmul.f32 %v4080, %v4089
    %v4091 = vrcp.pop %v4088
    %v4092 = vmul.f32 %v4082, %v4091
    %v4093 = vadd.f32 %v3476, %v4090
    %v4094 = vadd.f32 %v3477, %v4092
    %v4096 = vsel %vm250, %v4090, 0
    %4098 = vmatprep.subr.mxu0 0.0
    %4099 = vmatpush1.msra.mxu0 %v3913
    %4100 = vmatprep.subr.mxu0 0.0
    %4101 = vmatpush1.msra.mxu0 0.0
    %4102 = vmatprep.subr.mxu0 0.0
    %4103 = vmatpush1.msra.mxu0 0.0
    %4104 = vmatprep.subr.mxu0 0.0
    %4105 = vmatpush1.msra.mxu0 0.0
    %4106 = vmatprep.subr.mxu0 0.0
    %4107 = vmatpush1.msra.mxu0 0.0
    %4108 = vmatprep.subr.mxu0 0.0
    %4109 = vmatpush1.msra.mxu0 0.0
    %4110 = vmatprep.subr.mxu0 0.0
    %4111 = vmatpush1.msra.mxu0 0.0
    %4112 = vmatprep.subr.mxu0 0.0
    %4113 = vmatpush1.msra.mxu0 0.0
    %4114 = vmatprep.subr.mxu0 0.0
    %4115 = vmatpush1.msra.mxu0 0.0
    %4116 = vmatprep.subr.mxu0 0.0
    %4117 = vmatpush1.msra.mxu0 0.0
    %4118 = vmatprep.subr.mxu0 0.0
    %4119 = vmatpush1.msra.mxu0 0.0
    %4120 = vmatprep.subr.mxu0 0.0
    %4121 = vmatpush1.msra.mxu0 0.0
    %4122 = vmatprep.subr.mxu0 0.0
    %4123 = vmatpush1.msra.mxu0 0.0
    %4124 = vmatprep.subr.mxu0 0.0
    %4125 = vmatpush1.msra.mxu0 0.0
    %4126 = vmatprep.subr.mxu0 0.0
    %4127 = vmatpush1.msra.mxu0 0.0
    %4128 = vmatprep.subr.mxu0 0.0
    %4129 = vmatpush1.msra.mxu0 0.0
    %4130 = vmatprep.subr.mxu0 0.0
    %4131 = vmatpush1.msra.mxu0 0.0
    %4132 = vmatprep.subr.mxu0 0.0
    %4133 = vmatpush1.msra.mxu0 0.0
    %4134 = vmatprep.subr.mxu0 0.0
    %4135 = vmatpush1.msra.mxu0 0.0
    %4136 = vmatprep.subr.mxu0 0.0
    %4137 = vmatpush1.msra.mxu0 0.0
    %4138 = vmatprep.subr.mxu0 0.0
    %4139 = vmatpush1.msra.mxu0 0.0
    %4140 = vmatprep.subr.mxu0 0.0
    %4141 = vmatpush1.msra.mxu0 0.0
    %4142 = vmatprep.subr.mxu0 0.0
    %4143 = vmatpush1.msra.mxu0 0.0
    %4144 = vmatprep.subr.mxu0 0.0
    %4145 = vmatpush1.msra.mxu0 0.0
    %4146 = vmatprep.subr.mxu0 0.0
    %4147 = vmatpush1.msra.mxu0 0.0
    %4148 = vmatprep.subr.mxu0 0.0
    %4149 = vmatpush1.msra.mxu0 0.0
    %4150 = vmatprep.subr.mxu0 0.0
    %4151 = vmatpush1.msra.mxu0 0.0
    %4152 = vmatprep.subr.mxu0 0.0
    %4153 = vmatpush1.msra.mxu0 0.0
    %4154 = vmatprep.subr.mxu0 0.0
    %4155 = vmatpush1.msra.mxu0 0.0
    %4156 = vmatprep.subr.mxu0 0.0
    %4157 = vmatpush1.msra.mxu0 0.0
    %4158 = vmatprep.subr.mxu0 0.0
    %4159 = vmatpush1.msra.mxu0 0.0
    %4160 = vmatprep.subr.mxu0 0.0
    %4161 = vmatpush1.msra.mxu0 0.0
    %4162 = vmatprep.mubr.f32.mxu0 0.0
    %4163 = vmatmul.mubr.f32.gmra.mrb[0].mxu0 %v4096
    %v4164 = vpop.f32.mrb[0].mxu0
    %v4165 = vadd.f32 0.0, %v4164
    %v4166 = vpop.f32.mrb[0].mxu0
    %4167 = vdwg.mxu0
    %v4169 = vsel %vm250, %v4092, 0
    %4171 = vmatprep.subr.mxu0 0.0
    %4172 = vmatpush1.msra.mxu0 %v3916
    %4173 = vmatprep.subr.mxu0 0.0
    %4174 = vmatpush1.msra.mxu0 0.0
    %4175 = vmatprep.subr.mxu0 0.0
    %4176 = vmatpush1.msra.mxu0 0.0
    %4177 = vmatprep.subr.mxu0 0.0
    %4178 = vmatpush1.msra.mxu0 0.0
    %4179 = vmatprep.subr.mxu0 0.0
    %4180 = vmatpush1.msra.mxu0 0.0
    %4181 = vmatprep.subr.mxu0 0.0
    %4182 = vmatpush1.msra.mxu0 0.0
    %4183 = vmatprep.subr.mxu0 0.0
    %4184 = vmatpush1.msra.mxu0 0.0
    %4185 = vmatprep.subr.mxu0 0.0
    %4186 = vmatpush1.msra.mxu0 0.0
    %4187 = vmatprep.subr.mxu0 0.0
    %4188 = vmatpush1.msra.mxu0 0.0
    %4189 = vmatprep.subr.mxu0 0.0
    %4190 = vmatpush1.msra.mxu0 0.0
    %4191 = vmatprep.subr.mxu0 0.0
    %4192 = vmatpush1.msra.mxu0 0.0
    %4193 = vmatprep.subr.mxu0 0.0
    %4194 = vmatpush1.msra.mxu0 0.0
    %4195 = vmatprep.subr.mxu0 0.0
    %4196 = vmatpush1.msra.mxu0 0.0
    %4197 = vmatprep.subr.mxu0 0.0
    %4198 = vmatpush1.msra.mxu0 0.0
    %4199 = vmatprep.subr.mxu0 0.0
    %4200 = vmatpush1.msra.mxu0 0.0
    %4201 = vmatprep.subr.mxu0 0.0
    %4202 = vmatpush1.msra.mxu0 0.0
    %4203 = vmatprep.subr.mxu0 0.0
    %4204 = vmatpush1.msra.mxu0 0.0
    %4205 = vmatprep.subr.mxu0 0.0
    %4206 = vmatpush1.msra.mxu0 0.0
    %4207 = vmatprep.subr.mxu0 0.0
    %4208 = vmatpush1.msra.mxu0 0.0
    %4209 = vmatprep.subr.mxu0 0.0
    %4210 = vmatpush1.msra.mxu0 0.0
    %4211 = vmatprep.subr.mxu0 0.0
    %4212 = vmatpush1.msra.mxu0 0.0
    %4213 = vmatprep.subr.mxu0 0.0
    %4214 = vmatpush1.msra.mxu0 0.0
    %4215 = vmatprep.subr.mxu0 0.0
    %4216 = vmatpush1.msra.mxu0 0.0
    %4217 = vmatprep.subr.mxu0 0.0
    %4218 = vmatpush1.msra.mxu0 0.0
    %4219 = vmatprep.subr.mxu0 0.0
    %4220 = vmatpush1.msra.mxu0 0.0
    %4221 = vmatprep.subr.mxu0 0.0
    %4222 = vmatpush1.msra.mxu0 0.0
    %4223 = vmatprep.subr.mxu0 0.0
    %4224 = vmatpush1.msra.mxu0 0.0
    %4225 = vmatprep.subr.mxu0 0.0
    %4226 = vmatpush1.msra.mxu0 0.0
    %4227 = vmatprep.subr.mxu0 0.0
    %4228 = vmatpush1.msra.mxu0 0.0
    %4229 = vmatprep.subr.mxu0 0.0
    %4230 = vmatpush1.msra.mxu0 0.0
    %4231 = vmatprep.subr.mxu0 0.0
    %4232 = vmatpush1.msra.mxu0 0.0
    %4233 = vmatprep.subr.mxu0 0.0
    %4234 = vmatpush1.msra.mxu0 0.0
    %4235 = vmatprep.mubr.f32.mxu0 0.0
    %4236 = vmatmul.mubr.f32.gmra.mrb[0].mxu0 %v4169
    %v4237 = vpop.f32.mrb[0].mxu0
    %v4238 = vadd.f32 0.0, %v4237
    %v4239 = vpop.f32.mrb[0].mxu0
    %4240 = vdwg.mxu0
    %v4241 = vpack.c.bf16 %v4238, %v4165
    %s4242 = scalar_lea.vmem %s4, 24
    %v4243 = vld [vmem:[%s4242] sm:$0xf]
    %v4245 = vsel %vm250, %v4241, 0
    %v4248 = vsel %vm1097, %v4243, 0
    %4250 = vmatprep.subr.bf16.mxu0 0
    %4251 = vmatpush1.bf16.msra.mxu0 %v4248
    %4252 = vmatprep.subr.bf16.mxu0 0
    %4253 = vmatpush1.bf16.msra.mxu0 0
    %4254 = vmatprep.subr.bf16.mxu0 0
    %4255 = vmatpush1.bf16.msra.mxu0 0
    %4256 = vmatprep.subr.bf16.mxu0 0
    %4257 = vmatpush1.bf16.msra.mxu0 0
    %4258 = vmatprep.subr.bf16.mxu0 0
    %4259 = vmatpush1.bf16.msra.mxu0 0
    %4260 = vmatprep.subr.bf16.mxu0 0
    %4261 = vmatpush1.bf16.msra.mxu0 0
    %4262 = vmatprep.subr.bf16.mxu0 0
    %4263 = vmatpush1.bf16.msra.mxu0 0
    %4264 = vmatprep.subr.bf16.mxu0 0
    %4265 = vmatpush1.bf16.msra.mxu0 0
    %4266 = vmatprep.subr.bf16.mxu0 0
    %4267 = vmatpush1.bf16.msra.mxu0 0
    %4268 = vmatprep.subr.bf16.mxu0 0
    %4269 = vmatpush1.bf16.msra.mxu0 0
    %4270 = vmatprep.subr.bf16.mxu0 0
    %4271 = vmatpush1.bf16.msra.mxu0 0
    %4272 = vmatprep.subr.bf16.mxu0 0
    %4273 = vmatpush1.bf16.msra.mxu0 0
    %4274 = vmatprep.subr.bf16.mxu0 0
    %4275 = vmatpush1.bf16.msra.mxu0 0
    %4276 = vmatprep.subr.bf16.mxu0 0
    %4277 = vmatpush1.bf16.msra.mxu0 0
    %4278 = vmatprep.subr.bf16.mxu0 0
    %4279 = vmatpush1.bf16.msra.mxu0 0
    %4280 = vmatprep.subr.bf16.mxu0 0
    %4281 = vmatpush1.bf16.msra.mxu0 0
    %4282 = vmatprep.mubr.bf16.mxu0 0
    %4283 = vmatmul.mubr.bf16.gmra.mrb[0].mxu0 %v4245
    %v4284 = vpop.f32.mrb[0].mxu0
    %v4285 = vadd.f32 0.0, %v4284
    %v4286 = vpop.f32.mrb[0].mxu0
    %v4287 = vpop.f32.mrb[0].mxu0
    %v4288 = vadd.f32 0.0, %v4287
    %v4289 = vpop.f32.mrb[0].mxu0
    %4290 = vdwg.mxu0
    %v4291 = vadd.f32 %v3715, %v4285
    %v4292 = vadd.f32 %v3718, %v4288
    %s4293 = scalar_lea.vmem %s2, 240
    %v4294 = vld [vmem:[%s4293] sm:$0xf]
    %v4295 = vld [vmem:[%s4293 + $0x4] sm:$0xf]
    %v4296 = vld [vmem:[%s4293 + $0x8] sm:$0xf]
    %v4297 = vld [vmem:[%s4293 + $0xc] sm:$0xf]
    %s4298 = scalar_lea.vmem %s3, 15
    %v4299 = vld [vmem:[%s4298] sm:$0x1]
    %v4301 = vlaneseq
    %v4302 = vshrl.u32 %v4301, 7
    %v4303 = vsub.s32 0, %v4302
    %v4304 = vrot.slane %v4299, %v4303
    %v4310 = vunpack.c.l.b16 %v4294
    %v4311 = vunpack.c.l.b16 %v4295
    %v4312 = vunpack.c.l.b16 %v4296
    %v4313 = vunpack.c.l.b16 %v4297
    %v4314 = vpack.c.b16 %v4311, %v4310
    %v4315 = vpack.c.b16 %v4313, %v4312
    %4318 = vmatprep.subr.bf16.mxu0 0
    %4319 = vmatpush1.bf16.msra.mxu0 %v4314
    %4320 = vmatprep.subr.bf16.mxu0 0
    %4321 = vmatpush1.bf16.msra.mxu0 %v4315
    %4322 = vmatprep.subr.bf16.mxu0 0
    %4323 = vmatpush1.bf16.msra.mxu0 0
    %4324 = vmatprep.subr.bf16.mxu0 0
    %4325 = vmatpush1.bf16.msra.mxu0 0
    %4326 = vmatprep.subr.bf16.mxu0 0
    %4327 = vmatpush1.bf16.msra.mxu0 0
    %4328 = vmatprep.subr.bf16.mxu0 0
    %4329 = vmatpush1.bf16.msra.mxu0 0
    %4330 = vmatprep.subr.bf16.mxu0 0
    %4331 = vmatpush1.bf16.msra.mxu0 0
    %4332 = vmatprep.subr.bf16.mxu0 0
    %4333 = vmatpush1.bf16.msra.mxu0 0
    %4334 = vmatprep.subr.bf16.mxu0 0
    %4335 = vmatpush1.bf16.msra.mxu0 0
    %4336 = vmatprep.subr.bf16.mxu0 0
    %4337 = vmatpush1.bf16.msra.mxu0 0
    %4338 = vmatprep.subr.bf16.mxu0 0
    %4339 = vmatpush1.bf16.msra.mxu0 0
    %4340 = vmatprep.subr.bf16.mxu0 0
    %4341 = vmatpush1.bf16.msra.mxu0 0
    %4342 = vmatprep.subr.bf16.mxu0 0
    %4343 = vmatpush1.bf16.msra.mxu0 0
    %4344 = vmatprep.subr.bf16.mxu0 0
    %4345 = vmatpush1.bf16.msra.mxu0 0
    %4346 = vmatprep.subr.bf16.mxu0 0
    %4347 = vmatpush1.bf16.msra.mxu0 0
    %4348 = vmatprep.subr.bf16.mxu0 0
    %4349 = vmatpush1.bf16.msra.mxu0 0
    %4350 = vmatprep.mubr.bf16.mxu0 0
    %4351 = vmatmul.mubr.bf16.gmra.mrb[0].mxu0 %v2601
    %v4352 = vpop.f32.mrb[0].mxu0
    %v4353 = vadd.f32 %v4304, %v4352
    %v4354 = vpop.f32.mrb[0].mxu0
    %v4355 = vpop.f32.mrb[0].mxu0
    %v4356 = vadd.f32 %v4304, %v4355
    %v4357 = vpop.f32.mrb[0].mxu0
    %4358 = vdwg.mxu0
    %s4359 = scalar_lea.vmem %s2, 304
    %v4360 = vld [vmem:[%s4359] sm:$0xf]
    %v4361 = vld [vmem:[%s4359 + $0x4] sm:$0xf]
    %v4362 = vld [vmem:[%s4359 + $0x8] sm:$0xf]
    %v4363 = vld [vmem:[%s4359 + $0xc] sm:$0xf]
    %s4364 = scalar_lea.vmem %s3, 19
    %v4365 = vld [vmem:[%s4364] sm:$0x1]
    %v4367 = vlaneseq
    %v4368 = vshrl.u32 %v4367, 7
    %v4369 = vsub.s32 0, %v4368
    %v4370 = vrot.slane %v4365, %v4369
    %v4376 = vunpack.c.l.b16 %v4360
    %v4377 = vunpack.c.l.b16 %v4361
    %v4378 = vunpack.c.l.b16 %v4362
    %v4379 = vunpack.c.l.b16 %v4363
    %v4380 = vpack.c.b16 %v4377, %v4376
    %v4381 = vpack.c.b16 %v4379, %v4378
    %4384 = vmatprep.subr.bf16.mxu0 0
    %4385 = vmatpush1.bf16.msra.mxu0 %v4380
    %4386 = vmatprep.subr.bf16.mxu0 0
    %4387 = vmatpush1.bf16.msra.mxu0 %v4381
    %4388 = vmatprep.subr.bf16.mxu0 0
    %4389 = vmatpush1.bf16.msra.mxu0 0
    %4390 = vmatprep.subr.bf16.mxu0 0
    %4391 = vmatpush1.bf16.msra.mxu0 0
    %4392 = vmatprep.subr.bf16.mxu0 0
    %4393 = vmatpush1.bf16.msra.mxu0 0
    %4394 = vmatprep.subr.bf16.mxu0 0
    %4395 = vmatpush1.bf16.msra.mxu0 0
    %4396 = vmatprep.subr.bf16.mxu0 0
    %4397 = vmatpush1.bf16.msra.mxu0 0
    %4398 = vmatprep.subr.bf16.mxu0 0
    %4399 = vmatpush1.bf16.msra.mxu0 0
    %4400 = vmatprep.subr.bf16.mxu0 0
    %4401 = vmatpush1.bf16.msra.mxu0 0
    %4402 = vmatprep.subr.bf16.mxu0 0
    %4403 = vmatpush1.bf16.msra.mxu0 0
    %4404 = vmatprep.subr.bf16.mxu0 0
    %4405 = vmatpush1.bf16.msra.mxu0 0
    %4406 = vmatprep.subr.bf16.mxu0 0
    %4407 = vmatpush1.bf16.msra.mxu0 0
    %4408 = vmatprep.subr.bf16.mxu0 0
    %4409 = vmatpush1.bf16.msra.mxu0 0
    %4410 = vmatprep.subr.bf16.mxu0 0
    %4411 = vmatpush1.bf16.msra.mxu0 0
    %4412 = vmatprep.subr.bf16.mxu0 0
    %4413 = vmatpush1.bf16.msra.mxu0 0
    %4414 = vmatprep.subr.bf16.mxu0 0
    %4415 = vmatpush1.bf16.msra.mxu0 0
    %4416 = vmatprep.mubr.bf16.mxu0 0
    %4417 = vmatmul.mubr.bf16.gmra.mrb[0].mxu0 %v2601
    %v4418 = vpop.f32.mrb[0].mxu0
    %v4419 = vadd.f32 %v4370, %v4418
    %v4420 = vpop.f32.mrb[0].mxu0
    %v4421 = vpop.f32.mrb[0].mxu0
    %v4422 = vadd.f32 %v4370, %v4421
    %v4423 = vpop.f32.mrb[0].mxu0
    %4424 = vdwg.mxu0
    %s4425 = scalar_lea.vmem %s2, 368
    %v4426 = vld [vmem:[%s4425] sm:$0xf]
    %v4427 = vld [vmem:[%s4425 + $0x4] sm:$0xf]
    %v4428 = vld [vmem:[%s4425 + $0x8] sm:$0xf]
    %v4429 = vld [vmem:[%s4425 + $0xc] sm:$0xf]
    %s4430 = scalar_lea.vmem %s3, 23
    %v4431 = vld [vmem:[%s4430] sm:$0x1]
    %v4433 = vlaneseq
    %v4434 = vshrl.u32 %v4433, 7
    %v4435 = vsub.s32 0, %v4434
    %v4436 = vrot.slane %v4431, %v4435
    %v4442 = vunpack.c.l.b16 %v4426
    %v4443 = vunpack.c.l.b16 %v4427
    %v4444 = vunpack.c.l.b16 %v4428
    %v4445 = vunpack.c.l.b16 %v4429
    %v4446 = vpack.c.b16 %v4443, %v4442
    %v4447 = vpack.c.b16 %v4445, %v4444
    %4450 = vmatprep.subr.bf16.mxu0 0
    %4451 = vmatpush1.bf16.msra.mxu0 %v4446
    %4452 = vmatprep.subr.bf16.mxu0 0
    %4453 = vmatpush1.bf16.msra.mxu0 %v4447
    %4454 = vmatprep.subr.bf16.mxu0 0
    %4455 = vmatpush1.bf16.msra.mxu0 0
    %4456 = vmatprep.subr.bf16.mxu0 0
    %4457 = vmatpush1.bf16.msra.mxu0 0
    %4458 = vmatprep.subr.bf16.mxu0 0
    %4459 = vmatpush1.bf16.msra.mxu0 0
    %4460 = vmatprep.subr.bf16.mxu0 0
    %4461 = vmatpush1.bf16.msra.mxu0 0
    %4462 = vmatprep.subr.bf16.mxu0 0
    %4463 = vmatpush1.bf16.msra.mxu0 0
    %4464 = vmatprep.subr.bf16.mxu0 0
    %4465 = vmatpush1.bf16.msra.mxu0 0
    %4466 = vmatprep.subr.bf16.mxu0 0
    %4467 = vmatpush1.bf16.msra.mxu0 0
    %4468 = vmatprep.subr.bf16.mxu0 0
    %4469 = vmatpush1.bf16.msra.mxu0 0
    %4470 = vmatprep.subr.bf16.mxu0 0
    %4471 = vmatpush1.bf16.msra.mxu0 0
    %4472 = vmatprep.subr.bf16.mxu0 0
    %4473 = vmatpush1.bf16.msra.mxu0 0
    %4474 = vmatprep.subr.bf16.mxu0 0
    %4475 = vmatpush1.bf16.msra.mxu0 0
    %4476 = vmatprep.subr.bf16.mxu0 0
    %4477 = vmatpush1.bf16.msra.mxu0 0
    %4478 = vmatprep.subr.bf16.mxu0 0
    %4479 = vmatpush1.bf16.msra.mxu0 0
    %4480 = vmatprep.subr.bf16.mxu0 0
    %4481 = vmatpush1.bf16.msra.mxu0 0
    %4482 = vmatprep.mubr.bf16.mxu0 0
    %4483 = vmatmul.mubr.bf16.gmra.mrb[0].mxu0 %v2736
    %v4484 = vpop.f32.mrb[0].mxu0
    %v4485 = vadd.f32 %v4436, %v4484
    %v4486 = vpop.f32.mrb[0].mxu0
    %v4487 = vpop.f32.mrb[0].mxu0
    %v4488 = vadd.f32 %v4436, %v4487
    %v4489 = vpop.f32.mrb[0].mxu0
    %4490 = vdwg.mxu0
    %v4492 = vsel %vm250, %v4353, 0
    %v4495 = vsel %vm250, %v4419, 0
    %4497 = vmatprep.subr.mxu0 0.0
    %4498 = vmatpush1.xpose.msra.mxu0 %v4495
    %4499 = vmatprep.subr.mxu0 0.0
    %4500 = vmatpush1.xpose.msra.mxu0 0.0
    %4501 = vmatprep.subr.mxu0 0.0
    %4502 = vmatpush1.xpose.msra.mxu0 0.0
    %4503 = vmatprep.subr.mxu0 0.0
    %4504 = vmatpush1.xpose.msra.mxu0 0.0
    %4505 = vmatprep.subr.mxu0 0.0
    %4506 = vmatpush1.xpose.msra.mxu0 0.0
    %4507 = vmatprep.subr.mxu0 0.0
    %4508 = vmatpush1.xpose.msra.mxu0 0.0
    %4509 = vmatprep.subr.mxu0 0.0
    %4510 = vmatpush1.xpose.msra.mxu0 0.0
    %4511 = vmatprep.subr.mxu0 0.0
    %4512 = vmatpush1.xpose.msra.mxu0 0.0
    %4513 = vmatprep.subr.mxu0 0.0
    %4514 = vmatpush1.xpose.msra.mxu0 0.0
    %4515 = vmatprep.subr.mxu0 0.0
    %4516 = vmatpush1.xpose.msra.mxu0 0.0
    %4517 = vmatprep.subr.mxu0 0.0
    %4518 = vmatpush1.xpose.msra.mxu0 0.0
    %4519 = vmatprep.subr.mxu0 0.0
    %4520 = vmatpush1.xpose.msra.mxu0 0.0
    %4521 = vmatprep.subr.mxu0 0.0
    %4522 = vmatpush1.xpose.msra.mxu0 0.0
    %4523 = vmatprep.subr.mxu0 0.0
    %4524 = vmatpush1.xpose.msra.mxu0 0.0
    %4525 = vmatprep.subr.mxu0 0.0
    %4526 = vmatpush1.xpose.msra.mxu0 0.0
    %4527 = vmatprep.subr.mxu0 0.0
    %4528 = vmatpush1.xpose.msra.mxu0 0.0
    %4529 = vmatprep.subr.mxu0 0.0
    %4530 = vmatpush1.xpose.msra.mxu0 0.0
    %4531 = vmatprep.subr.mxu0 0.0
    %4532 = vmatpush1.xpose.msra.mxu0 0.0
    %4533 = vmatprep.subr.mxu0 0.0
    %4534 = vmatpush1.xpose.msra.mxu0 0.0
    %4535 = vmatprep.subr.mxu0 0.0
    %4536 = vmatpush1.xpose.msra.mxu0 0.0
    %4537 = vmatprep.subr.mxu0 0.0
    %4538 = vmatpush1.xpose.msra.mxu0 0.0
    %4539 = vmatprep.subr.mxu0 0.0
    %4540 = vmatpush1.xpose.msra.mxu0 0.0
    %4541 = vmatprep.subr.mxu0 0.0
    %4542 = vmatpush1.xpose.msra.mxu0 0.0
    %4543 = vmatprep.subr.mxu0 0.0
    %4544 = vmatpush1.xpose.msra.mxu0 0.0
    %4545 = vmatprep.subr.mxu0 0.0
    %4546 = vmatpush1.xpose.msra.mxu0 0.0
    %4547 = vmatprep.subr.mxu0 0.0
    %4548 = vmatpush1.xpose.msra.mxu0 0.0
    %4549 = vmatprep.subr.mxu0 0.0
    %4550 = vmatpush1.xpose.msra.mxu0 0.0
    %4551 = vmatprep.subr.mxu0 0.0
    %4552 = vmatpush1.xpose.msra.mxu0 0.0
    %4553 = vmatprep.subr.mxu0 0.0
    %4554 = vmatpush1.xpose.msra.mxu0 0.0
    %4555 = vmatprep.subr.mxu0 0.0
    %4556 = vmatpush1.xpose.msra.mxu0 0.0
    %4557 = vmatprep.subr.mxu0 0.0
    %4558 = vmatpush1.xpose.msra.mxu0 0.0
    %4559 = vmatprep.subr.mxu0 0.0
    %4560 = vmatpush1.xpose.msra.mxu0 0.0
    %4561 = vmatprep.mubr.f32.mxu0 0.0
    %4562 = vmatmul.mubr.f32.gmra.mrb[0].mxu0 %v4492
    %v4563 = vpop.f32.mrb[0].mxu0
    %v4564 = vadd.f32 0.0, %v4563
    %v4565 = vpop.f32.mrb[0].mxu0
    %4566 = vdwg.mxu0
    %v4568 = vsel %vm250, %v4356, 0
    %v4571 = vsel %vm250, %v4422, 0
    %4573 = vmatprep.subr.mxu0 0.0
    %4574 = vmatpush1.xpose.msra.mxu0 %v4571
    %4575 = vmatprep.subr.mxu0 0.0
    %4576 = vmatpush1.xpose.msra.mxu0 0.0
    %4577 = vmatprep.subr.mxu0 0.0
    %4578 = vmatpush1.xpose.msra.mxu0 0.0
    %4579 = vmatprep.subr.mxu0 0.0
    %4580 = vmatpush1.xpose.msra.mxu0 0.0
    %4581 = vmatprep.subr.mxu0 0.0
    %4582 = vmatpush1.xpose.msra.mxu0 0.0
    %4583 = vmatprep.subr.mxu0 0.0
    %4584 = vmatpush1.xpose.msra.mxu0 0.0
    %4585 = vmatprep.subr.mxu0 0.0
    %4586 = vmatpush1.xpose.msra.mxu0 0.0
    %4587 = vmatprep.subr.mxu0 0.0
    %4588 = vmatpush1.xpose.msra.mxu0 0.0
    %4589 = vmatprep.subr.mxu0 0.0
    %4590 = vmatpush1.xpose.msra.mxu0 0.0
    %4591 = vmatprep.subr.mxu0 0.0
    %4592 = vmatpush1.xpose.msra.mxu0 0.0
    %4593 = vmatprep.subr.mxu0 0.0
    %4594 = vmatpush1.xpose.msra.mxu0 0.0
    %4595 = vmatprep.subr.mxu0 0.0
    %4596 = vmatpush1.xpose.msra.mxu0 0.0
    %4597 = vmatprep.subr.mxu0 0.0
    %4598 = vmatpush1.xpose.msra.mxu0 0.0
    %4599 = vmatprep.subr.mxu0 0.0
    %4600 = vmatpush1.xpose.msra.mxu0 0.0
    %4601 = vmatprep.subr.mxu0 0.0
    %4602 = vmatpush1.xpose.msra.mxu0 0.0
    %4603 = vmatprep.subr.mxu0 0.0
    %4604 = vmatpush1.xpose.msra.mxu0 0.0
    %4605 = vmatprep.subr.mxu0 0.0
    %4606 = vmatpush1.xpose.msra.mxu0 0.0
    %4607 = vmatprep.subr.mxu0 0.0
    %4608 = vmatpush1.xpose.msra.mxu0 0.0
    %4609 = vmatprep.subr.mxu0 0.0
    %4610 = vmatpush1.xpose.msra.mxu0 0.0
    %4611 = vmatprep.subr.mxu0 0.0
    %4612 = vmatpush1.xpose.msra.mxu0 0.0
    %4613 = vmatprep.subr.mxu0 0.0
    %4614 = vmatpush1.xpose.msra.mxu0 0.0
    %4615 = vmatprep.subr.mxu0 0.0
    %4616 = vmatpush1.xpose.msra.mxu0 0.0
    %4617 = vmatprep.subr.mxu0 0.0
    %4618 = vmatpush1.xpose.msra.mxu0 0.0
    %4619 = vmatprep.subr.mxu0 0.0
    %4620 = vmatpush1.xpose.msra.mxu0 0.0
    %4621 = vmatprep.subr.mxu0 0.0
    %4622 = vmatpush1.xpose.msra.mxu0 0.0
    %4623 = vmatprep.subr.mxu0 0.0
    %4624 = vmatpush1.xpose.msra.mxu0 0.0
    %4625 = vmatprep.subr.mxu0 0.0
    %4626 = vmatpush1.xpose.msra.mxu0 0.0
    %4627 = vmatprep.subr.mxu0 0.0
    %4628 = vmatpush1.xpose.msra.mxu0 0.0
    %4629 = vmatprep.subr.mxu0 0.0
    %4630 = vmatpush1.xpose.msra.mxu0 0.0
    %4631 = vmatprep.subr.mxu0 0.0
    %4632 = vmatpush1.xpose.msra.mxu0 0.0
    %4633 = vmatprep.subr.mxu0 0.0
    %4634 = vmatpush1.xpose.msra.mxu0 0.0
    %4635 = vmatprep.subr.mxu0 0.0
    %4636 = vmatpush1.xpose.msra.mxu0 0.0
    %4637 = vmatprep.mubr.f32.mxu0 0.0
    %4638 = vmatmul.mubr.f32.gmra.mrb[0].mxu0 %v4568
    %v4639 = vpop.f32.mrb[0].mxu0
    %v4640 = vadd.f32 0.0, %v4639
    %v4641 = vpop.f32.mrb[0].mxu0
    %4642 = vdwg.mxu0
    %v4643 = vsel %vm250, %v4564, -inf
    %4644 = vmax.xlane.f32.xlu0 %v4643
    %v4645 = vpop.xlane.xlu0 %4644
    %v4646 = vsel %vm250, %v4640, -inf
    %4647 = vmax.xlane.f32.xlu0 %v4646
    %v4648 = vpop.xlane.xlu0 %4647
    %v4649 = vsub.f32 %v4564, %v4645
    %v4650 = vsub.f32 %v4640, %v4648
    %v4651 = vmul.f32 %v4649, 1.442695
    %v4652 = vpow.pop %v4651
    %v4653 = vmul.f32 %v4650, 1.442695
    %v4654 = vpow.pop %v4653
    %v4655 = vsel %vm250, %v4652, 0.0
    %4656 = vadd.xlane.f32.xlu0 %v4655
    %v4657 = vpop.xlane.xlu0 %4656
    %v4658 = vsel %vm250, %v4654, 0.0
    %4659 = vadd.xlane.f32.xlu0 %v4658
    %v4660 = vpop.xlane.xlu0 %4659
    %v4661 = vrcp.pop %v4657
    %v4662 = vmul.f32 %v4652, %v4661
    %v4663 = vrcp.pop %v4660
    %v4664 = vmul.f32 %v4654, %v4663
    %v4665 = vadd.f32 %v4093, %v4662
    %v4666 = vadd.f32 %v4094, %v4664
    %v4668 = vsel %vm250, %v4662, 0
    %4670 = vmatprep.subr.mxu0 0.0
    %4671 = vmatpush1.msra.mxu0 %v4485
    %4672 = vmatprep.subr.mxu0 0.0
    %4673 = vmatpush1.msra.mxu0 0.0
    %4674 = vmatprep.subr.mxu0 0.0
    %4675 = vmatpush1.msra.mxu0 0.0
    %4676 = vmatprep.subr.mxu0 0.0
    %4677 = vmatpush1.msra.mxu0 0.0
    %4678 = vmatprep.subr.mxu0 0.0
    %4679 = vmatpush1.msra.mxu0 0.0
    %4680 = vmatprep.subr.mxu0 0.0
    %4681 = vmatpush1.msra.mxu0 0.0
    %4682 = vmatprep.subr.mxu0 0.0
    %4683 = vmatpush1.msra.mxu0 0.0
    %4684 = vmatprep.subr.mxu0 0.0
    %4685 = vmatpush1.msra.mxu0 0.0
    %4686 = vmatprep.subr.mxu0 0.0
    %4687 = vmatpush1.msra.mxu0 0.0
    %4688 = vmatprep.subr.mxu0 0.0
    %4689 = vmatpush1.msra.mxu0 0.0
    %4690 = vmatprep.subr.mxu0 0.0
    %4691 = vmatpush1.msra.mxu0 0.0
    %4692 = vmatprep.subr.mxu0 0.0
    %4693 = vmatpush1.msra.mxu0 0.0
    %4694 = vmatprep.subr.mxu0 0.0
    %4695 = vmatpush1.msra.mxu0 0.0
    %4696 = vmatprep.subr.mxu0 0.0
    %4697 = vmatpush1.msra.mxu0 0.0
    %4698 = vmatprep.subr.mxu0 0.0
    %4699 = vmatpush1.msra.mxu0 0.0
    %4700 = vmatprep.subr.mxu0 0.0
    %4701 = vmatpush1.msra.mxu0 0.0
    %4702 = vmatprep.subr.mxu0 0.0
    %4703 = vmatpush1.msra.mxu0 0.0
    %4704 = vmatprep.subr.mxu0 0.0
    %4705 = vmatpush1.msra.mxu0 0.0
    %4706 = vmatprep.subr.mxu0 0.0
    %4707 = vmatpush1.msra.mxu0 0.0
    %4708 = vmatprep.subr.mxu0 0.0
    %4709 = vmatpush1.msra.mxu0 0.0
    %4710 = vmatprep.subr.mxu0 0.0
    %4711 = vmatpush1.msra.mxu0 0.0
    %4712 = vmatprep.subr.mxu0 0.0
    %4713 = vmatpush1.msra.mxu0 0.0
    %4714 = vmatprep.subr.mxu0 0.0
    %4715 = vmatpush1.msra.mxu0 0.0
    %4716 = vmatprep.subr.mxu0 0.0
    %4717 = vmatpush1.msra.mxu0 0.0
    %4718 = vmatprep.subr.mxu0 0.0
    %4719 = vmatpush1.msra.mxu0 0.0
    %4720 = vmatprep.subr.mxu0 0.0
    %4721 = vmatpush1.msra.mxu0 0.0
    %4722 = vmatprep.subr.mxu0 0.0
    %4723 = vmatpush1.msra.mxu0 0.0
    %4724 = vmatprep.subr.mxu0 0.0
    %4725 = vmatpush1.msra.mxu0 0.0
    %4726 = vmatprep.subr.mxu0 0.0
    %4727 = vmatpush1.msra.mxu0 0.0
    %4728 = vmatprep.subr.mxu0 0.0
    %4729 = vmatpush1.msra.mxu0 0.0
    %4730 = vmatprep.subr.mxu0 0.0
    %4731 = vmatpush1.msra.mxu0 0.0
    %4732 = vmatprep.subr.mxu0 0.0
    %4733 = vmatpush1.msra.mxu0 0.0
    %4734 = vmatprep.mubr.f32.mxu0 0.0
    %4735 = vmatmul.mubr.f32.gmra.mrb[0].mxu0 %v4668
    %v4736 = vpop.f32.mrb[0].mxu0
    %v4737 = vadd.f32 0.0, %v4736
    %v4738 = vpop.f32.mrb[0].mxu0
    %4739 = vdwg.mxu0
    %v4741 = vsel %vm250, %v4664, 0
    %4743 = vmatprep.subr.mxu0 0.0
    %4744 = vmatpush1.msra.mxu0 %v4488
    %4745 = vmatprep.subr.mxu0 0.0
    %4746 = vmatpush1.msra.mxu0 0.0
    %4747 = vmatprep.subr.mxu0 0.0
    %4748 = vmatpush1.msra.mxu0 0.0
    %4749 = vmatprep.subr.mxu0 0.0
    %4750 = vmatpush1.msra.mxu0 0.0
    %4751 = vmatprep.subr.mxu0 0.0
    %4752 = vmatpush1.msra.mxu0 0.0
    %4753 = vmatprep.subr.mxu0 0.0
    %4754 = vmatpush1.msra.mxu0 0.0
    %4755 = vmatprep.subr.mxu0 0.0
    %4756 = vmatpush1.msra.mxu0 0.0
    %4757 = vmatprep.subr.mxu0 0.0
    %4758 = vmatpush1.msra.mxu0 0.0
    %4759 = vmatprep.subr.mxu0 0.0
    %4760 = vmatpush1.msra.mxu0 0.0
    %4761 = vmatprep.subr.mxu0 0.0
    %4762 = vmatpush1.msra.mxu0 0.0
    %4763 = vmatprep.subr.mxu0 0.0
    %4764 = vmatpush1.msra.mxu0 0.0
    %4765 = vmatprep.subr.mxu0 0.0
    %4766 = vmatpush1.msra.mxu0 0.0
    %4767 = vmatprep.subr.mxu0 0.0
    %4768 = vmatpush1.msra.mxu0 0.0
    %4769 = vmatprep.subr.mxu0 0.0
    %4770 = vmatpush1.msra.mxu0 0.0
    %4771 = vmatprep.subr.mxu0 0.0
    %4772 = vmatpush1.msra.mxu0 0.0
    %4773 = vmatprep.subr.mxu0 0.0
    %4774 = vmatpush1.msra.mxu0 0.0
    %4775 = vmatprep.subr.mxu0 0.0
    %4776 = vmatpush1.msra.mxu0 0.0
    %4777 = vmatprep.subr.mxu0 0.0
    %4778 = vmatpush1.msra.mxu0 0.0
    %4779 = vmatprep.subr.mxu0 0.0
    %4780 = vmatpush1.msra.mxu0 0.0
    %4781 = vmatprep.subr.mxu0 0.0
    %4782 = vmatpush1.msra.mxu0 0.0
    %4783 = vmatprep.subr.mxu0 0.0
    %4784 = vmatpush1.msra.mxu0 0.0
    %4785 = vmatprep.subr.mxu0 0.0
    %4786 = vmatpush1.msra.mxu0 0.0
    %4787 = vmatprep.subr.mxu0 0.0
    %4788 = vmatpush1.msra.mxu0 0.0
    %4789 = vmatprep.subr.mxu0 0.0
    %4790 = vmatpush1.msra.mxu0 0.0
    %4791 = vmatprep.subr.mxu0 0.0
    %4792 = vmatpush1.msra.mxu0 0.0
    %4793 = vmatprep.subr.mxu0 0.0
    %4794 = vmatpush1.msra.mxu0 0.0
    %4795 = vmatprep.subr.mxu0 0.0
    %4796 = vmatpush1.msra.mxu0 0.0
    %4797 = vmatprep.subr.mxu0 0.0
    %4798 = vmatpush1.msra.mxu0 0.0
    %4799 = vmatprep.subr.mxu0 0.0
    %4800 = vmatpush1.msra.mxu0 0.0
    %4801 = vmatprep.subr.mxu0 0.0
    %4802 = vmatpush1.msra.mxu0 0.0
    %4803 = vmatprep.subr.mxu0 0.0
    %4804 = vmatpush1.msra.mxu0 0.0
    %4805 = vmatprep.subr.mxu0 0.0
    %4806 = vmatpush1.msra.mxu0 0.0
    %4807 = vmatprep.mubr.f32.mxu0 0.0
    %4808 = vmatmul.mubr.f32.gmra.mrb[0].mxu0 %v4741
    %v4809 = vpop.f32.mrb[0].mxu0
    %v4810 = vadd.f32 0.0, %v4809
    %v4811 = vpop.f32.mrb[0].mxu0
    %4812 = vdwg.mxu0
    %v4813 = vpack.c.bf16 %v4810, %v4737
    %s4814 = scalar_lea.vmem %s4, 28
    %v4815 = vld [vmem:[%s4814] sm:$0xf]
    %v4817 = vsel %vm250, %v4813, 0
    %v4820 = vsel %vm1097, %v4815, 0
    %4822 = vmatprep.subr.bf16.mxu0 0
    %4823 = vmatpush1.bf16.msra.mxu0 %v4820
    %4824 = vmatprep.subr.bf16.mxu0 0
    %4825 = vmatpush1.bf16.msra.mxu0 0
    %4826 = vmatprep.subr.bf16.mxu0 0
    %4827 = vmatpush1.bf16.msra.mxu0 0
    %4828 = vmatprep.subr.bf16.mxu0 0
    %4829 = vmatpush1.bf16.msra.mxu0 0
    %4830 = vmatprep.subr.bf16.mxu0 0
    %4831 = vmatpush1.bf16.msra.mxu0 0
    %4832 = vmatprep.subr.bf16.mxu0 0
    %4833 = vmatpush1.bf16.msra.mxu0 0
    %4834 = vmatprep.subr.bf16.mxu0 0
    %4835 = vmatpush1.bf16.msra.mxu0 0
    %4836 = vmatprep.subr.bf16.mxu0 0
    %4837 = vmatpush1.bf16.msra.mxu0 0
    %4838 = vmatprep.subr.bf16.mxu0 0
    %4839 = vmatpush1.bf16.msra.mxu0 0
    %4840 = vmatprep.subr.bf16.mxu0 0
    %4841 = vmatpush1.bf16.msra.mxu0 0
    %4842 = vmatprep.subr.bf16.mxu0 0
    %4843 = vmatpush1.bf16.msra.mxu0 0
    %4844 = vmatprep.subr.bf16.mxu0 0
    %4845 = vmatpush1.bf16.msra.mxu0 0
    %4846 = vmatprep.subr.bf16.mxu0 0
    %4847 = vmatpush1.bf16.msra.mxu0 0
    %4848 = vmatprep.subr.bf16.mxu0 0
    %4849 = vmatpush1.bf16.msra.mxu0 0
    %4850 = vmatprep.subr.bf16.mxu0 0
    %4851 = vmatpush1.bf16.msra.mxu0 0
    %4852 = vmatprep.subr.bf16.mxu0 0
    %4853 = vmatpush1.bf16.msra.mxu0 0
    %4854 = vmatprep.mubr.bf16.mxu0 0
    %4855 = vmatmul.mubr.bf16.gmra.mrb[0].mxu0 %v4817
    %v4856 = vpop.f32.mrb[0].mxu0
    %v4857 = vadd.f32 0.0, %v4856
    %v4858 = vpop.f32.mrb[0].mxu0
    %v4859 = vpop.f32.mrb[0].mxu0
    %v4860 = vadd.f32 0.0, %v4859
    %v4861 = vpop.f32.mrb[0].mxu0
    %4862 = vdwg.mxu0
    %v4863 = vadd.f32 %v4291, %v4857
    %v4864 = vadd.f32 %v4292, %v4860
    %v4865 = vlaneseq
    %v4866 = vshrl.u32 %v4865, 7
    %v4867 = vsub.s32 0, %v4866
    %v4868 = vrot.slane %v2568, %v4867
    %v4869 = vadd.f32 %v4863, %v4868
    %v4870 = vadd.f32 %v4864, %v4868
    %v4871 = vadd.f32 %v2565, %v4869
    %v4872 = vadd.f32 %v2566, %v4870
    %v4873 = vsel %vm70, %v4871, 0.0
    %4874 = vadd.xlane.f32.xlu0 %v4873
    %v4875 = vpop.xlane.xlu0 %4874
    %v4876 = vsel %vm70, %v4872, 0.0
    %4877 = vadd.xlane.f32.xlu0 %v4876
    %v4878 = vpop.xlane.xlu0 %4877
    %v4879 = vmul.f32 %v4875, %v2343
    %v4880 = vmul.f32 %v4878, %v2343
    %v4881 = vsub.f32 %v4871, %v4879
    %v4882 = vsub.f32 %v4872, %v4880
    %v4883 = vmul.f32 %v4881, %v4881
    %v4884 = vmul.f32 %v4882, %v4882
    %v4885 = vsel %vm70, %v4883, 0.0
    %4886 = vadd.xlane.f32.xlu0 %v4885
    %v4887 = vpop.xlane.xlu0 %4886
    %v4888 = vsel %vm70, %v4884, 0.0
    %4889 = vadd.xlane.f32.xlu0 %v4888
    %v4890 = vpop.xlane.xlu0 %4889
    %v4891 = vmul.f32 %v4887, %v2343
    %v4892 = vmul.f32 %v4890, %v2343
    %v4893 = vadd.f32 %v4891, 1e-05
    %v4894 = vadd.f32 %v4892, 1e-05
    %v4895 = vrsqrt.pop %v4893
    %v4896 = vrsqrt.pop %v4894
    %v4897 = vmul.f32 %v4881, %v4895
    %v4898 = vmul.f32 %v4882, %v4896
    %v4899 = vlaneseq
    %v4900 = vshrl.u32 %v4899, 7
    %v4901 = vsub.s32 2, %v4900
    %v4902 = vrot.slane %v2568, %v4901
    %v4903 = vmul.f32 %v4897, %v4902
    %v4904 = vmul.f32 %v4898, %v4902
    %v4905 = vlaneseq
    %v4906 = vshrl.u32 %v4905, 7
    %v4907 = vsub.s32 3, %v4906
    %v4908 = vrot.slane %v2568, %v4907
    %v4909 = vadd.f32 %v4903, %v4908
    %v4910 = vadd.f32 %v4904, %v4908
    %v4911 = vpack.c.bf16 %v4910, %v4909
    %s4912 = scalar_lea.vmem %s5, 16
    %v4913 = vld [vmem:[%s4912] sm:$0xf]
    %v4914 = vld [vmem:[%s4912 + $0x4] sm:$0xf]
    %v4915 = vld [vmem:[%s4912 + $0x8] sm:$0xf]
    %v4916 = vld [vmem:[%s4912 + $0xc] sm:$0xf]
    %v4918 = vlaneseq
    %v4919 = vshrl.u32 %v4918, 7
    %v4920 = vsub.s32 0, %v4919
    %v4921 = vrot.slane %v2570, %v4920
    %v4927 = vunpack.c.l.b16 %v4913
    %v4928 = vunpack.c.l.b16 %v4914
    %v4929 = vunpack.c.l.b16 %v4915
    %v4930 = vunpack.c.l.b16 %v4916
    %v4931 = vpack.c.b16 %v4928, %v4927
    %v4932 = vpack.c.b16 %v4930, %v4929
    %v4936 = vsel %vm70, %v4911, 0
    %4938 = vmatprep.subr.bf16.mxu0 0
    %4939 = vmatpush1.bf16.msra.mxu0 %v4931
    %4940 = vmatprep.subr.bf16.mxu0 0
    %4941 = vmatpush1.bf16.msra.mxu0 %v4932
    %4942 = vmatprep.subr.bf16.mxu0 0
    %4943 = vmatpush1.bf16.msra.mxu0 0
    %4944 = vmatprep.subr.bf16.mxu0 0
    %4945 = vmatpush1.bf16.msra.mxu0 0
    %4946 = vmatprep.subr.bf16.mxu0 0
    %4947 = vmatpush1.bf16.msra.mxu0 0
    %4948 = vmatprep.subr.bf16.mxu0 0
    %4949 = vmatpush1.bf16.msra.mxu0 0
    %4950 = vmatprep.subr.bf16.mxu0 0
    %4951 = vmatpush1.bf16.msra.mxu0 0
    %4952 = vmatprep.subr.bf16.mxu0 0
    %4953 = vmatpush1.bf16.msra.mxu0 0
    %4954 = vmatprep.subr.bf16.mxu0 0
    %4955 = vmatpush1.bf16.msra.mxu0 0
    %4956 = vmatprep.subr.bf16.mxu0 0
    %4957 = vmatpush1.bf16.msra.mxu0 0
    %4958 = vmatprep.subr.bf16.mxu0 0
    %4959 = vmatpush1.bf16.msra.mxu0 0
    %4960 = vmatprep.subr.bf16.mxu0 0
    %4961 = vmatpush1.bf16.msra.mxu0 0
    %4962 = vmatprep.subr.bf16.mxu0 0
    %4963 = vmatpush1.bf16.msra.mxu0 0
    %4964 = vmatprep.subr.bf16.mxu0 0
    %4965 = vmatpush1.bf16.msra.mxu0 0
    %4966 = vmatprep.subr.bf16.mxu0 0
    %4967 = vmatpush1.bf16.msra.mxu0 0
    %4968 = vmatprep.subr.bf16.mxu0 0
    %4969 = vmatpush1.bf16.msra.mxu0 0
    %4970 = vmatprep.mubr.bf16.mxu0 0
    %4971 = vmatmul.mubr.bf16.gmra.mrb[0].mxu0 %v4936
    %v4972 = vpop.f32.mrb[0].mxu0
    %v4973 = vadd.f32 %v4921, %v4972
    %v4974 = vpop.f32.mrb[0].mxu0
    %v4975 = vpop.f32.mrb[0].mxu0
    %v4976 = vadd.f32 %v4921, %v4975
    %v4977 = vpop.f32.mrb[0].mxu0
    %4978 = vdwg.mxu0
    %v4979 = vmax.f32 %v4973, 0.0
    %v4980 = vmax.f32 %v4976, 0.0
    %v4981 = vpack.c.bf16 %v4980, %v4979
    %s4982 = scalar_lea.vmem %s6, 32
    %v4983 = vld [vmem:[%s4982] sm:$0xf]
    %v4984 = vld [vmem:[%s4982 + $0x4] sm:$0xf]
    %v4985 = vld [vmem:[%s4982 + $0x8] sm:$0xf]
    %v4986 = vld [vmem:[%s4982 + $0xc] sm:$0xf]
    %v4987 = vld [vmem:[%s4982 + $0x10] sm:$0xf]
    %v4988 = vld [vmem:[%s4982 + $0x14] sm:$0xf]
    %v4989 = vld [vmem:[%s4982 + $0x18] sm:$0xf]
    %v4990 = vld [vmem:[%s4982 + $0x1c] sm:$0xf]
    %v4991 = vlaneseq
    %v4992 = vshrl.u32 %v4991, 7
    %v4993 = vsub.s32 1, %v4992
    %v4994 = vrot.slane %v2568, %v4993
    %v5003 = vunpack.c.l.b16 %v4983
    %v5004 = vunpack.c.l.b16 %v4984
    %v5005 = vunpack.c.l.b16 %v4985
    %v5006 = vunpack.c.l.b16 %v4986
    %v5007 = vunpack.c.l.b16 %v4987
    %v5008 = vunpack.c.l.b16 %v4988
    %v5009 = vunpack.c.l.b16 %v4989
    %v5010 = vunpack.c.l.b16 %v4990
    %v5011 = vpack.c.b16 %v5004, %v5003
    %v5012 = vpack.c.b16 %v5006, %v5005
    %v5013 = vpack.c.b16 %v5008, %v5007
    %v5014 = vpack.c.b16 %v5010, %v5009
    %v5020 = vsel %vm2482, %v4981, 0
    %5022 = vmatprep.subr.bf16.mxu0 0
    %5023 = vmatpush1.bf16.msra.mxu0 %v5011
    %5024 = vmatprep.subr.bf16.mxu0 0
    %5025 = vmatpush1.bf16.msra.mxu0 %v5012
    %5026 = vmatprep.subr.bf16.mxu0 0
    %5027 = vmatpush1.bf16.msra.mxu0 %v5013
    %5028 = vmatprep.subr.bf16.mxu0 0
    %5029 = vmatpush1.bf16.msra.mxu0 %v5014
    %5030 = vmatprep.subr.bf16.mxu0 0
    %5031 = vmatpush1.bf16.msra.mxu0 0
    %5032 = vmatprep.subr.bf16.mxu0 0
    %5033 = vmatpush1.bf16.msra.mxu0 0
    %5034 = vmatprep.subr.bf16.mxu0 0
    %5035 = vmatpush1.bf16.msra.mxu0 0
    %5036 = vmatprep.subr.bf16.mxu0 0
    %5037 = vmatpush1.bf16.msra.mxu0 0
    %5038 = vmatprep.subr.bf16.mxu0 0
    %5039 = vmatpush1.bf16.msra.mxu0 0
    %5040 = vmatprep.subr.bf16.mxu0 0
    %5041 = vmatpush1.bf16.msra.mxu0 0
    %5042 = vmatprep.subr.bf16.mxu0 0
    %5043 = vmatpush1.bf16.msra.mxu0 0
    %5044 = vmatprep.subr.bf16.mxu0 0
    %5045 = vmatpush1.bf16.msra.mxu0 0
    %5046 = vmatprep.subr.bf16.mxu0 0
    %5047 = vmatpush1.bf16.msra.mxu0 0
    %5048 = vmatprep.subr.bf16.mxu0 0
    %5049 = vmatpush1.bf16.msra.mxu0 0
    %5050 = vmatprep.subr.bf16.mxu0 0
    %5051 = vmatpush1.bf16.msra.mxu0 0
    %5052 = vmatprep.subr.bf16.mxu0 0
    %5053 = vmatpush1.bf16.msra.mxu0 0
    %5054 = vmatprep.mubr.bf16.mxu0 0
    %5055 = vmatmul.mubr.bf16.gmra.mrb[0].mxu0 %v5020
    %v5056 = vpop.f32.mrb[0].mxu0
    %v5057 = vadd.f32 %v4994, %v5056
    %v5058 = vpop.f32.mrb[0].mxu0
    %v5059 = vpop.f32.mrb[0].mxu0
    %v5060 = vadd.f32 %v4994, %v5059
    %v5061 = vpop.f32.mrb[0].mxu0
    %5062 = vdwg.mxu0
    %v5063 = vadd.f32 %v4909, %v5057
    %v5064 = vadd.f32 %v4910, %v5060
    %v5065 = vsel %vm70, %v5063, 0.0
    %5066 = vadd.xlane.f32.xlu0 %v5065
    %v5067 = vpop.xlane.xlu0 %5066
    %v5068 = vsel %vm70, %v5064, 0.0
    %5069 = vadd.xlane.f32.xlu0 %v5068
    %v5070 = vpop.xlane.xlu0 %5069
    %v5071 = vmul.f32 %v5067, %v2343
    %v5072 = vmul.f32 %v5070, %v2343
    %v5073 = vsub.f32 %v5063, %v5071
    %v5074 = vsub.f32 %v5064, %v5072
    %v5075 = vmul.f32 %v5073, %v5073
    %v5076 = vmul.f32 %v5074, %v5074
    %v5077 = vsel %vm70, %v5075, 0.0
    %5078 = vadd.xlane.f32.xlu0 %v5077
    %v5079 = vpop.xlane.xlu0 %5078
    %v5080 = vsel %vm70, %v5076, 0.0
    %5081 = vadd.xlane.f32.xlu0 %v5080
    %v5082 = vpop.xlane.xlu0 %5081
    %v5083 = vmul.f32 %v5079, %v2343
    %v5084 = vmul.f32 %v5082, %v2343
    %v5085 = vadd.f32 %v5083, 1e-05
    %v5086 = vadd.f32 %v5084, 1e-05
    %v5087 = vrsqrt.pop %v5085
    %v5088 = vrsqrt.pop %v5086
    %v5089 = vmul.f32 %v5073, %v5087
    %v5090 = vmul.f32 %v5074, %v5088
    %v5091 = vlaneseq
    %v5092 = vshrl.u32 %v5091, 7
    %v5093 = vsub.s32 4, %v5092
    %v5094 = vrot.slane %v2568, %v5093
    %v5095 = vmul.f32 %v5089, %v5094
    %v5096 = vmul.f32 %v5090, %v5094
    %v5097 = vlaneseq
    %v5098 = vshrl.u32 %v5097, 7
    %v5099 = vsub.s32 5, %v5098
    %v5100 = vrot.slane %v2568, %v5099
    %v5101 = vadd.f32 %v5095, %v5100
    %v5102 = vadd.f32 %v5096, %v5100
    %v5103 = vmul.f32 %v4665, 0.25
    %v5104 = vmul.f32 %v4666, 0.25
    %5105 = vst.msk [vmem:[#allocation2] sm:$0xff] %vm70, %v5101
    %5106 = vst.msk [vmem:[#allocation2 + $0x8] sm:$0xff] %vm70, %v5102
    %5107 = vst.msk [vmem:[#allocation4] sm:$0xff] %vm250, %v5103
    %5108 = vst.msk [vmem:[#allocation4 + $0x8] sm:$0xff] %vm250, %v5104
    // Predicated region
    $region38: #{tpu_custom_call.1} parent=1 // pred_check
      _
    $region39: #{tpu_custom_call.1} parent=1 // pred_check_branch
      %5110 = sbr.rel (0) target = $region41
    $region40: #{tpu_custom_call.1} parent=1 // pred_region
      %s5112 = ssub.s32 256, 256
      %5113 = vsyncadd [#allocation3], %s5112
      %s5114 = sshll.u32 [#allocation2], 4
      %s5115 = int_to_ptr.vmem [resolvable:$true] %s5114
      %5120 = dma.vmem_to_hbm [thread:$0]  %s5115, 256, %s9, [#allocation3], 128, 128, 8
    $region41: #{tpu_custom_call.1} parent=1 // pred_fallthru
      _
    // Predicated region
    $region42: #{tpu_custom_call.1} parent=1 // pred_check
      _
    $region43: #{tpu_custom_call.1} parent=1 // pred_check_branch
      %5122 = sbr.rel (0) target = $region45
    $region44: #{tpu_custom_call.1} parent=1 // pred_region
      %s5124 = ssub.s32 256, 256
      %5125 = vsyncadd [#allocation5], %s5124
      %s5126 = sshll.u32 [#allocation4], 4
      %s5127 = int_to_ptr.vmem [resolvable:$true] %s5126
      %5132 = dma.vmem_to_hbm [thread:$0]  %s5127, 256, %s10, [#allocation5], 128, 128, 8
    $region45: #{tpu_custom_call.1} parent=1 // pred_fallthru
      _
    // Predicated region
    $region46: #{tpu_custom_call.1} parent=1 // pred_check
      _
    $region47: #{tpu_custom_call.1} parent=1 // pred_check_branch
      %5134 = sbr.rel (0) target = $region49
    $region48: #{tpu_custom_call.1} parent=1 // pred_region
      %5135 = dma.done [#allocation3], 256
    $region49: #{tpu_custom_call.1} parent=1 // pred_fallthru
      _
    // Predicated region
    $region50: #{tpu_custom_call.1} parent=1 // pred_check
      _
    $region51: #{tpu_custom_call.1} parent=1 // pred_check_branch
      %5137 = sbr.rel (0) target = $region53
    $region52: #{tpu_custom_call.1} parent=1 // pred_region
      %5138 = dma.done [#allocation5], 256
    $region53: #{tpu_custom_call.1} parent=1 // pred_fallthru
      _
    %5139 = vsyncpa [#allocation3], 1
    %5140 = vsyncpa [#allocation5], 1

</llo_original>
